<compile_context>
chip_gen: v7x
topology: tpu7x:2x2x1
jax: 0.10.0
libtpu: 0.0.40
codegen_flags: <defaults>
</compile_context>

<pallas_src>
import jax
import jax.numpy as jnp
from jax.experimental import pallas as pl
from jax.experimental.pallas import tpu as pltpu

# ---------------- synthetic BERT config (small) ----------------
VOCAB = 64
TYPE_VOCAB = 2
MAX_POS = 32
HIDDEN = 128
NUM_HEADS = 4
HEAD_DIM = HIDDEN // NUM_HEADS
INTERMEDIATE = 4 * HIDDEN
NUM_LAYERS = 2
OUT_DIM = 512
LN_EPS = 1e-12


# ---------------- in-kernel helpers ----------------
def _layernorm(x, g, b):
    mu = jnp.mean(x, axis=-1, keepdims=True)
    var = jnp.mean(jnp.square(x - mu), axis=-1, keepdims=True)
    return (x - mu) * jax.lax.rsqrt(var + LN_EPS) * g + b


# ---------------- fused Pallas kernel (whole forward) ----------------
def bert_forward_kernel(emb_ref, mask_ref, embg_ref, embb_ref,
                        wqkv_ref, bqkv_ref, wo_ref, bo_ref,
                        ln1g_ref, ln1b_ref, w1_ref, b1_ref, w2_ref, b2_ref,
                        ln2g_ref, ln2b_ref, outw_ref, outb_ref,
                        o_ref, ctx_scr):
    B, S, H = emb_ref.shape
    BS = B * S

    # Embedding LayerNorm on the flattened (B*S, H) activation.
    x = _layernorm(emb_ref[...].reshape(BS, H), embg_ref[...], embb_ref[...])

    # Additive attention mask, kept in f32 (0 attended / -1e9 masked).
    mask_b = mask_ref[...][:, None, :]          # (B, 1, S), hoisted out of loops
    scale = 1.0 / float(HEAD_DIM) ** 0.5

    # Static unroll over layers: all weights stay resident in VMEM.
    for l in range(NUM_LAYERS):
        # ---- fused QKV projection: one (B*S, H) @ (H, 3H) matmul ----
        qkv = jnp.dot(x.astype(jnp.bfloat16), wqkv_ref[l],
                      preferred_element_type=jnp.float32) + bqkv_ref[l]
        q = qkv[:, 0 * H:1 * H].reshape(B, S, H)     # lane-aligned 128-wide slices
        k = qkv[:, 1 * H:2 * H].reshape(B, S, H)
        v = qkv[:, 2 * H:3 * H].reshape(B, S, H)

        # ---- multi-head self-attention, batched over B ----
        for h in range(NUM_HEADS):                   # static unroll over heads
            sl = slice(h * HEAD_DIM, (h + 1) * HEAD_DIM)
            qh = q[:, :, sl].astype(jnp.bfloat16)
            kh = k[:, :, sl].astype(jnp.bfloat16)
            vh = v[:, :, sl].astype(jnp.bfloat16)
            s = jnp.einsum('bqd,bkd->bqk', qh, kh,
                           preferred_element_type=jnp.float32) * scale
            s = s + mask_b                           # mask applied in f32
            m = jnp.max(s, axis=-1, keepdims=True)
            p = jnp.exp(s - m)
            p = p * pl.reciprocal(jnp.sum(p, axis=-1, keepdims=True), approx=True)
            ctxh = jnp.einsum('bqk,bkd->bqd', p.astype(jnp.bfloat16), vh,
                              preferred_element_type=jnp.float32)
            # scatter this head's context at a static lane offset (no concat)
            ctx_scr[:, :, sl] = ctxh

        ctx = ctx_scr[...].reshape(BS, H)
        attn = jnp.dot(ctx.astype(jnp.bfloat16), wo_ref[l],
                       preferred_element_type=jnp.float32) + bo_ref[l]
        h1 = _layernorm(x + attn, ln1g_ref[l], ln1b_ref[l])

        # ---- feed-forward ----
        ff = jnp.dot(h1.astype(jnp.bfloat16), w1_ref[l],
                     preferred_element_type=jnp.float32) + b1_ref[l]
        # TODO(synk): HF BERT uses exact (erf) GELU; tanh approximation used here.
        ff = jax.nn.gelu(ff, approximate=True)
        ff = jnp.dot(ff.astype(jnp.bfloat16), w2_ref[l],
                     preferred_element_type=jnp.float32) + b2_ref[l]
        x = _layernorm(h1 + ff, ln2g_ref[l], ln2b_ref[l])

    # ---- [CLS] pooling (token 0 of each sequence) + Linear(H -> 512) ----
    cls = x.reshape(B, S, H)[:, 0, :]                # (B, H)
    o_ref[...] = jnp.dot(cls.astype(jnp.bfloat16), outw_ref[...],
                         preferred_element_type=jnp.float32) + outb_ref[...]


# ---------------- wrapper (single pallas_call) ----------------
def text_encoder_bert(input_ids, attention_mask, params):
    B, S = input_ids.shape
    # Embedding gather (word + position + token_type=0) is done in plain JAX;
    # dynamic vocab gather has no clean blocked-DMA expression at this size.
    emb = (params["word_emb"][input_ids]
           + params["pos_emb"][:S][None, :, :]
           + params["type_emb"][0][None, None, :]).astype(jnp.float32)

    # additive attention mask (B, S): 0 where attended, -1e9 where masked (f32)
    add_mask = (1.0 - attention_mask.astype(jnp.float32)) * -1e9

    return pl.pallas_call(
        bert_forward_kernel,
        out_shape=jax.ShapeDtypeStruct((B, OUT_DIM), jnp.float32),
        scratch_shapes=[pltpu.VMEM((B, S, HIDDEN), jnp.float32)],
    )(emb, add_mask,
      params["emb_ln_g"], params["emb_ln_b"],
      params["wqkv"], params["bqkv"], params["wo"], params["bo"],
      params["ln1_g"], params["ln1_b"], params["w1"], params["b1"],
      params["w2"], params["b2"], params["ln2_g"], params["ln2_b"],
      params["out_w"], params["out_b"])


# ---------------- parameter init (deterministic, synthetic) ----------------
def init_params(key):
    def nrm(k, shape, dtype=jnp.float32):
        return (0.02 * jax.random.normal(k, shape, dtype=jnp.float32)).astype(dtype)

    L = NUM_LAYERS
    keys = iter(jax.random.split(key, 4 + 4 * L))

    params = {
        "word_emb": nrm(next(keys), (VOCAB, HIDDEN)),
        "pos_emb": nrm(next(keys), (MAX_POS, HIDDEN)),
        "type_emb": nrm(next(keys), (TYPE_VOCAB, HIDDEN)),
        "emb_ln_g": jnp.ones((1, HIDDEN), jnp.float32),
        "emb_ln_b": jnp.zeros((1, HIDDEN), jnp.float32),
        # MXU operands stored in bf16; biases / LN params stay f32.
        "out_w": nrm(next(keys), (HIDDEN, OUT_DIM), jnp.bfloat16),
        "out_b": jnp.zeros((1, OUT_DIM), jnp.float32),
    }

    wqkv, wo, w1, w2 = [], [], [], []
    for _ in range(L):
        wqkv.append(nrm(next(keys), (HIDDEN, 3 * HIDDEN), jnp.bfloat16))
        wo.append(nrm(next(keys), (HIDDEN, HIDDEN), jnp.bfloat16))
        w1.append(nrm(next(keys), (HIDDEN, INTERMEDIATE), jnp.bfloat16))
        w2.append(nrm(next(keys), (INTERMEDIATE, HIDDEN), jnp.bfloat16))

    params["wqkv"] = jnp.stack(wqkv)                             # (L, H, 3H)
    params["wo"] = jnp.stack(wo)                                 # (L, H, H)
    params["w1"] = jnp.stack(w1)                                 # (L, H, I)
    params["w2"] = jnp.stack(w2)                                 # (L, I, H)
    params["bqkv"] = jnp.zeros((L, 1, 3 * HIDDEN), jnp.float32)
    params["bo"] = jnp.zeros((L, 1, HIDDEN), jnp.float32)
    params["b1"] = jnp.zeros((L, 1, INTERMEDIATE), jnp.float32)
    params["b2"] = jnp.zeros((L, 1, HIDDEN), jnp.float32)
    params["ln1_g"] = jnp.ones((L, 1, HIDDEN), jnp.float32)
    params["ln1_b"] = jnp.zeros((L, 1, HIDDEN), jnp.float32)
    params["ln2_g"] = jnp.ones((L, 1, HIDDEN), jnp.float32)
    params["ln2_b"] = jnp.zeros((L, 1, HIDDEN), jnp.float32)
    return params


if __name__ == "__main__":
    B, S = 2, 8
    key = jax.random.PRNGKey(0)
    k_ids, k_params = jax.random.split(key)

    input_ids = jax.random.randint(k_ids, (B, S), 0, VOCAB, dtype=jnp.int32)
    attention_mask = jnp.array(
        [[1, 1, 1, 1, 1, 1, 1, 1],
         [1, 1, 1, 1, 1, 1, 0, 0]], dtype=jnp.int32)

    params = init_params(k_params)

    out = text_encoder_bert(input_ids, attention_mask, params)
    out = jax.block_until_ready(out)
    assert out.shape == (B, OUT_DIM) and out.dtype == jnp.float32
    assert bool(jnp.all(jnp.isfinite(out)))
    print("KERNEL_OK")
</pallas_src>

<mosaic_0001>
module attributes {stable_mosaic.version = 11 : i64} {
  func.func @bert_forward_kernel(%arg0: memref<2x8x128xf32, #tpu.memory_space<vmem>>, %arg1: memref<2x8xf32, #tpu.memory_space<vmem>>, %arg2: memref<1x128xf32, #tpu.memory_space<vmem>>, %arg3: memref<1x128xf32, #tpu.memory_space<vmem>>, %arg4: memref<2x128x384xbf16, #tpu.memory_space<vmem>>, %arg5: memref<2x1x384xf32, #tpu.memory_space<vmem>>, %arg6: memref<2x128x128xbf16, #tpu.memory_space<vmem>>, %arg7: memref<2x1x128xf32, #tpu.memory_space<vmem>>, %arg8: memref<2x1x128xf32, #tpu.memory_space<vmem>>, %arg9: memref<2x1x128xf32, #tpu.memory_space<vmem>>, %arg10: memref<2x128x512xbf16, #tpu.memory_space<vmem>>, %arg11: memref<2x1x512xf32, #tpu.memory_space<vmem>>, %arg12: memref<2x512x128xbf16, #tpu.memory_space<vmem>>, %arg13: memref<2x1x128xf32, #tpu.memory_space<vmem>>, %arg14: memref<2x1x128xf32, #tpu.memory_space<vmem>>, %arg15: memref<2x1x128xf32, #tpu.memory_space<vmem>>, %arg16: memref<128x512xbf16, #tpu.memory_space<vmem>>, %arg17: memref<1x512xf32, #tpu.memory_space<vmem>>, %arg18: memref<2x512xf32, #tpu.memory_space<vmem>>, %arg19: memref<2x8x128xf32, #tpu.memory_space<vmem>>) attributes {dimension_semantics = [], scalar_prefetch = 0 : i64, scratch_operands = 1 : i64, tpu.core_type = #tpu.core_type<tc>} {
    %c0 = arith.constant 0 : index
    %c0_0 = arith.constant 0 : index
    %c0_1 = arith.constant 0 : index
    %0 = vector.load %arg0[%c0, %c0_0, %c0_1] : memref<2x8x128xf32, #tpu.memory_space<vmem>>, vector<2x8x128xf32>
    %1 = vector.shape_cast %0 : vector<2x8x128xf32> to vector<16x128xf32>
    %c0_2 = arith.constant 0 : index
    %c0_3 = arith.constant 0 : index
    %2 = vector.load %arg2[%c0_2, %c0_3] : memref<1x128xf32, #tpu.memory_space<vmem>>, vector<1x128xf32>
    %c0_4 = arith.constant 0 : index
    %c0_5 = arith.constant 0 : index
    %3 = vector.load %arg3[%c0_4, %c0_5] : memref<1x128xf32, #tpu.memory_space<vmem>>, vector<1x128xf32>
    %cst = arith.constant dense<0.000000e+00> : vector<16xf32>
    %4 = vector.multi_reduction <add>, %1, %cst [1] : vector<16x128xf32> to vector<16xf32>
    %5 = vector.shape_cast %4 : vector<16xf32> to vector<16x1xf32>
    %cst_6 = arith.constant 1.280000e+02 : f32
    %6 = vector.broadcast %cst_6 : f32 to vector<16x1xf32>
    %7 = arith.divf %5, %6 : vector<16x1xf32>
    %8 = vector.broadcast %7 : vector<16x1xf32> to vector<16x128xf32>
    %9 = arith.subf %1, %8 : vector<16x128xf32>
    %10 = arith.mulf %9, %9 : vector<16x128xf32>
    %cst_7 = arith.constant dense<0.000000e+00> : vector<16xf32>
    %11 = vector.multi_reduction <add>, %10, %cst_7 [1] : vector<16x128xf32> to vector<16xf32>
    %12 = vector.shape_cast %11 : vector<16xf32> to vector<16x1xf32>
    %cst_8 = arith.constant 1.280000e+02 : f32
    %13 = vector.broadcast %cst_8 : f32 to vector<16x1xf32>
    %14 = arith.divf %12, %13 : vector<16x1xf32>
    %15 = vector.broadcast %7 : vector<16x1xf32> to vector<16x128xf32>
    %16 = arith.subf %1, %15 : vector<16x128xf32>
    %cst_9 = arith.constant 9.99999996E-13 : f32
    %17 = vector.broadcast %cst_9 : f32 to vector<16x1xf32>
    %18 = arith.addf %14, %17 : vector<16x1xf32>
    %19 = math.rsqrt %18 : vector<16x1xf32>
    %20 = vector.broadcast %19 : vector<16x1xf32> to vector<16x128xf32>
    %21 = arith.mulf %16, %20 : vector<16x128xf32>
    %22 = vector.broadcast %2 : vector<1x128xf32> to vector<16x128xf32>
    %23 = arith.mulf %21, %22 : vector<16x128xf32>
    %24 = vector.broadcast %3 : vector<1x128xf32> to vector<16x128xf32>
    %25 = arith.addf %23, %24 : vector<16x128xf32>
    %c0_10 = arith.constant 0 : index
    %c0_11 = arith.constant 0 : index
    %26 = vector.load %arg1[%c0_10, %c0_11] : memref<2x8xf32, #tpu.memory_space<vmem>>, vector<2x8xf32>
    %27 = vector.shape_cast %26 : vector<2x8xf32> to vector<2x1x8xf32>
    %28 = arith.truncf %25 : vector<16x128xf32> to vector<16x128xbf16>
    %c0_12 = arith.constant 0 : index
    %c0_13 = arith.constant 0 : index
    %c0_14 = arith.constant 0 : index
    %29 = vector.load %arg4[%c0_12, %c0_13, %c0_14] : memref<2x128x384xbf16, #tpu.memory_space<vmem>>, vector<1x128x384xbf16>
    %30 = vector.shape_cast %29 : vector<1x128x384xbf16> to vector<128x384xbf16>
    %cst_15 = arith.constant dense<0.000000e+00> : vector<16x384xf32>
    %31 = tpu.matmul %28, %30, %cst_15 {dimension_numbers = #tpu.dot_dimension_numbers<[1], [0], [0], [1], [0, 0, 1, 1], [], []>} : vector<16x128xbf16>, vector<128x384xbf16>, vector<16x384xf32> -> vector<16x384xf32>
    %c0_16 = arith.constant 0 : index
    %c0_17 = arith.constant 0 : index
    %c0_18 = arith.constant 0 : index
    %32 = vector.load %arg5[%c0_16, %c0_17, %c0_18] : memref<2x1x384xf32, #tpu.memory_space<vmem>>, vector<1x1x384xf32>
    %33 = vector.shape_cast %32 : vector<1x1x384xf32> to vector<1x384xf32>
    %34 = vector.broadcast %33 : vector<1x384xf32> to vector<16x384xf32>
    %35 = arith.addf %31, %34 : vector<16x384xf32>
    %36 = vector.extract_strided_slice %35 {offsets = [0, 0], sizes = [16, 128], strides = [1, 1]} : vector<16x384xf32> to vector<16x128xf32>
    %37 = vector.shape_cast %36 : vector<16x128xf32> to vector<2x8x128xf32>
    %38 = vector.extract_strided_slice %35 {offsets = [0, 128], sizes = [16, 128], strides = [1, 1]} : vector<16x384xf32> to vector<16x128xf32>
    %39 = vector.shape_cast %38 : vector<16x128xf32> to vector<2x8x128xf32>
    %40 = vector.extract_strided_slice %35 {offsets = [0, 256], sizes = [16, 128], strides = [1, 1]} : vector<16x384xf32> to vector<16x128xf32>
    %41 = vector.shape_cast %40 : vector<16x128xf32> to vector<2x8x128xf32>
    %42 = vector.extract_strided_slice %37 {offsets = [0, 0, 0], sizes = [2, 8, 32], strides = [1, 1, 1]} : vector<2x8x128xf32> to vector<2x8x32xf32>
    %43 = arith.truncf %42 : vector<2x8x32xf32> to vector<2x8x32xbf16>
    %44 = vector.extract_strided_slice %39 {offsets = [0, 0, 0], sizes = [2, 8, 32], strides = [1, 1, 1]} : vector<2x8x128xf32> to vector<2x8x32xf32>
    %45 = arith.truncf %44 : vector<2x8x32xf32> to vector<2x8x32xbf16>
    %46 = vector.extract_strided_slice %41 {offsets = [0, 0, 0], sizes = [2, 8, 32], strides = [1, 1, 1]} : vector<2x8x128xf32> to vector<2x8x32xf32>
    %47 = arith.truncf %46 : vector<2x8x32xf32> to vector<2x8x32xbf16>
    "tpu.trace_start"() <{level = 10 : i32, message = "bqd,bkd->bqk"}> : () -> ()
    %cst_19 = arith.constant dense<0.000000e+00> : vector<2x8x8xf32>
    %48 = tpu.matmul %43, %45, %cst_19 {dimension_numbers = #tpu.dot_dimension_numbers<[2], [2], [1], [1], [0, 0, 0, 1, 1, 1], [0], [0]>} : vector<2x8x32xbf16>, vector<2x8x32xbf16>, vector<2x8x8xf32> -> vector<2x8x8xf32>
    "tpu.trace_stop"() : () -> ()
    %cst_20 = arith.constant 0.176776692 : f32
    %49 = vector.broadcast %cst_20 : f32 to vector<2x8x8xf32>
    %50 = arith.mulf %48, %49 : vector<2x8x8xf32>
    %51 = vector.broadcast %27 : vector<2x1x8xf32> to vector<2x8x8xf32>
    %52 = arith.addf %50, %51 : vector<2x8x8xf32>
    %cst_21 = arith.constant dense<0xFF800000> : vector<2x8xf32>
    %53 = vector.multi_reduction <maximumf>, %52, %cst_21 [2] : vector<2x8x8xf32> to vector<2x8xf32>
    %54 = vector.shape_cast %53 : vector<2x8xf32> to vector<2x8x1xf32>
    %55 = vector.broadcast %54 : vector<2x8x1xf32> to vector<2x8x8xf32>
    %56 = arith.subf %52, %55 : vector<2x8x8xf32>
    %57 = math.exp %56 : vector<2x8x8xf32>
    %cst_22 = arith.constant dense<0.000000e+00> : vector<2x8xf32>
    %58 = vector.multi_reduction <add>, %57, %cst_22 [2] : vector<2x8x8xf32> to vector<2x8xf32>
    %59 = vector.shape_cast %58 : vector<2x8xf32> to vector<2x8x1xf32>
    %60 = tpu.reciprocal %59 {approx = true} : vector<2x8x1xf32> -> vector<2x8x1xf32>
    %61 = vector.broadcast %60 : vector<2x8x1xf32> to vector<2x8x8xf32>
    %62 = arith.mulf %57, %61 : vector<2x8x8xf32>
    %63 = arith.truncf %62 : vector<2x8x8xf32> to vector<2x8x8xbf16>
    "tpu.trace_start"() <{level = 10 : i32, message = "bqk,bkd->bqd"}> : () -> ()
    %cst_23 = arith.constant dense<0.000000e+00> : vector<2x8x32xf32>
    %64 = tpu.matmul %63, %47, %cst_23 {dimension_numbers = #tpu.dot_dimension_numbers<[2], [1], [1], [2], [0, 0, 0, 1, 1, 2], [0], [0]>} : vector<2x8x8xbf16>, vector<2x8x32xbf16>, vector<2x8x32xf32> -> vector<2x8x32xf32>
    "tpu.trace_stop"() : () -> ()
    %c0_24 = arith.constant 0 : index
    %c0_25 = arith.constant 0 : index
    %c0_26 = arith.constant 0 : index
    %65 = vector.load %arg19[%c0_24, %c0_25, %c0_26] : memref<2x8x128xf32, #tpu.memory_space<vmem>>, vector<2x8x32xf32>
    tpu.vector_store %arg19[%c0_24, %c0_25, %c0_26], %64 {strides = array<i32>} : memref<2x8x128xf32, #tpu.memory_space<vmem>>, vector<2x8x32xf32>,
    %66 = vector.extract_strided_slice %37 {offsets = [0, 0, 32], sizes = [2, 8, 32], strides = [1, 1, 1]} : vector<2x8x128xf32> to vector<2x8x32xf32>
    %67 = arith.truncf %66 : vector<2x8x32xf32> to vector<2x8x32xbf16>
    %68 = vector.extract_strided_slice %39 {offsets = [0, 0, 32], sizes = [2, 8, 32], strides = [1, 1, 1]} : vector<2x8x128xf32> to vector<2x8x32xf32>
    %69 = arith.truncf %68 : vector<2x8x32xf32> to vector<2x8x32xbf16>
    %70 = vector.extract_strided_slice %41 {offsets = [0, 0, 32], sizes = [2, 8, 32], strides = [1, 1, 1]} : vector<2x8x128xf32> to vector<2x8x32xf32>
    %71 = arith.truncf %70 : vector<2x8x32xf32> to vector<2x8x32xbf16>
    "tpu.trace_start"() <{level = 10 : i32, message = "bqd,bkd->bqk"}> : () -> ()
    %cst_27 = arith.constant dense<0.000000e+00> : vector<2x8x8xf32>
    %72 = tpu.matmul %67, %69, %cst_27 {dimension_numbers = #tpu.dot_dimension_numbers<[2], [2], [1], [1], [0, 0, 0, 1, 1, 1], [0], [0]>} : vector<2x8x32xbf16>, vector<2x8x32xbf16>, vector<2x8x8xf32> -> vector<2x8x8xf32>
    "tpu.trace_stop"() : () -> ()
    %cst_28 = arith.constant 0.176776692 : f32
    %73 = vector.broadcast %cst_28 : f32 to vector<2x8x8xf32>
    %74 = arith.mulf %72, %73 : vector<2x8x8xf32>
    %75 = vector.broadcast %27 : vector<2x1x8xf32> to vector<2x8x8xf32>
    %76 = arith.addf %74, %75 : vector<2x8x8xf32>
    %cst_29 = arith.constant dense<0xFF800000> : vector<2x8xf32>
    %77 = vector.multi_reduction <maximumf>, %76, %cst_29 [2] : vector<2x8x8xf32> to vector<2x8xf32>
    %78 = vector.shape_cast %77 : vector<2x8xf32> to vector<2x8x1xf32>
    %79 = vector.broadcast %78 : vector<2x8x1xf32> to vector<2x8x8xf32>
    %80 = arith.subf %76, %79 : vector<2x8x8xf32>
    %81 = math.exp %80 : vector<2x8x8xf32>
    %cst_30 = arith.constant dense<0.000000e+00> : vector<2x8xf32>
    %82 = vector.multi_reduction <add>, %81, %cst_30 [2] : vector<2x8x8xf32> to vector<2x8xf32>
    %83 = vector.shape_cast %82 : vector<2x8xf32> to vector<2x8x1xf32>
    %84 = tpu.reciprocal %83 {approx = true} : vector<2x8x1xf32> -> vector<2x8x1xf32>
    %85 = vector.broadcast %84 : vector<2x8x1xf32> to vector<2x8x8xf32>
    %86 = arith.mulf %81, %85 : vector<2x8x8xf32>
    %87 = arith.truncf %86 : vector<2x8x8xf32> to vector<2x8x8xbf16>
    "tpu.trace_start"() <{level = 10 : i32, message = "bqk,bkd->bqd"}> : () -> ()
    %cst_31 = arith.constant dense<0.000000e+00> : vector<2x8x32xf32>
    %88 = tpu.matmul %87, %71, %cst_31 {dimension_numbers = #tpu.dot_dimension_numbers<[2], [1], [1], [2], [0, 0, 0, 1, 1, 2], [0], [0]>} : vector<2x8x8xbf16>, vector<2x8x32xbf16>, vector<2x8x32xf32> -> vector<2x8x32xf32>
    "tpu.trace_stop"() : () -> ()
    %c0_32 = arith.constant 0 : index
    %c0_33 = arith.constant 0 : index
    %c32 = arith.constant 32 : index
    %89 = vector.load %arg19[%c0_32, %c0_33, %c32] : memref<2x8x128xf32, #tpu.memory_space<vmem>>, vector<2x8x32xf32>
    tpu.vector_store %arg19[%c0_32, %c0_33, %c32], %88 {strides = array<i32>} : memref<2x8x128xf32, #tpu.memory_space<vmem>>, vector<2x8x32xf32>,
    %90 = vector.extract_strided_slice %37 {offsets = [0, 0, 64], sizes = [2, 8, 32], strides = [1, 1, 1]} : vector<2x8x128xf32> to vector<2x8x32xf32>
    %91 = arith.truncf %90 : vector<2x8x32xf32> to vector<2x8x32xbf16>
    %92 = vector.extract_strided_slice %39 {offsets = [0, 0, 64], sizes = [2, 8, 32], strides = [1, 1, 1]} : vector<2x8x128xf32> to vector<2x8x32xf32>
    %93 = arith.truncf %92 : vector<2x8x32xf32> to vector<2x8x32xbf16>
    %94 = vector.extract_strided_slice %41 {offsets = [0, 0, 64], sizes = [2, 8, 32], strides = [1, 1, 1]} : vector<2x8x128xf32> to vector<2x8x32xf32>
    %95 = arith.truncf %94 : vector<2x8x32xf32> to vector<2x8x32xbf16>
    "tpu.trace_start"() <{level = 10 : i32, message = "bqd,bkd->bqk"}> : () -> ()
    %cst_34 = arith.constant dense<0.000000e+00> : vector<2x8x8xf32>
    %96 = tpu.matmul %91, %93, %cst_34 {dimension_numbers = #tpu.dot_dimension_numbers<[2], [2], [1], [1], [0, 0, 0, 1, 1, 1], [0], [0]>} : vector<2x8x32xbf16>, vector<2x8x32xbf16>, vector<2x8x8xf32> -> vector<2x8x8xf32>
    "tpu.trace_stop"() : () -> ()
    %cst_35 = arith.constant 0.176776692 : f32
    %97 = vector.broadcast %cst_35 : f32 to vector<2x8x8xf32>
    %98 = arith.mulf %96, %97 : vector<2x8x8xf32>
    %99 = vector.broadcast %27 : vector<2x1x8xf32> to vector<2x8x8xf32>
    %100 = arith.addf %98, %99 : vector<2x8x8xf32>
    %cst_36 = arith.constant dense<0xFF800000> : vector<2x8xf32>
    %101 = vector.multi_reduction <maximumf>, %100, %cst_36 [2] : vector<2x8x8xf32> to vector<2x8xf32>
    %102 = vector.shape_cast %101 : vector<2x8xf32> to vector<2x8x1xf32>
    %103 = vector.broadcast %102 : vector<2x8x1xf32> to vector<2x8x8xf32>
    %104 = arith.subf %100, %103 : vector<2x8x8xf32>
    %105 = math.exp %104 : vector<2x8x8xf32>
    %cst_37 = arith.constant dense<0.000000e+00> : vector<2x8xf32>
    %106 = vector.multi_reduction <add>, %105, %cst_37 [2] : vector<2x8x8xf32> to vector<2x8xf32>
    %107 = vector.shape_cast %106 : vector<2x8xf32> to vector<2x8x1xf32>
    %108 = tpu.reciprocal %107 {approx = true} : vector<2x8x1xf32> -> vector<2x8x1xf32>
    %109 = vector.broadcast %108 : vector<2x8x1xf32> to vector<2x8x8xf32>
    %110 = arith.mulf %105, %109 : vector<2x8x8xf32>
    %111 = arith.truncf %110 : vector<2x8x8xf32> to vector<2x8x8xbf16>
    "tpu.trace_start"() <{level = 10 : i32, message = "bqk,bkd->bqd"}> : () -> ()
    %cst_38 = arith.constant dense<0.000000e+00> : vector<2x8x32xf32>
    %112 = tpu.matmul %111, %95, %cst_38 {dimension_numbers = #tpu.dot_dimension_numbers<[2], [1], [1], [2], [0, 0, 0, 1, 1, 2], [0], [0]>} : vector<2x8x8xbf16>, vector<2x8x32xbf16>, vector<2x8x32xf32> -> vector<2x8x32xf32>
    "tpu.trace_stop"() : () -> ()
    %c0_39 = arith.constant 0 : index
    %c0_40 = arith.constant 0 : index
    %c64 = arith.constant 64 : index
    %113 = vector.load %arg19[%c0_39, %c0_40, %c64] : memref<2x8x128xf32, #tpu.memory_space<vmem>>, vector<2x8x32xf32>
    tpu.vector_store %arg19[%c0_39, %c0_40, %c64], %112 {strides = array<i32>} : memref<2x8x128xf32, #tpu.memory_space<vmem>>, vector<2x8x32xf32>,
    %114 = vector.extract_strided_slice %37 {offsets = [0, 0, 96], sizes = [2, 8, 32], strides = [1, 1, 1]} : vector<2x8x128xf32> to vector<2x8x32xf32>
    %115 = arith.truncf %114 : vector<2x8x32xf32> to vector<2x8x32xbf16>
    %116 = vector.extract_strided_slice %39 {offsets = [0, 0, 96], sizes = [2, 8, 32], strides = [1, 1, 1]} : vector<2x8x128xf32> to vector<2x8x32xf32>
    %117 = arith.truncf %116 : vector<2x8x32xf32> to vector<2x8x32xbf16>
    %118 = vector.extract_strided_slice %41 {offsets = [0, 0, 96], sizes = [2, 8, 32], strides = [1, 1, 1]} : vector<2x8x128xf32> to vector<2x8x32xf32>
    %119 = arith.truncf %118 : vector<2x8x32xf32> to vector<2x8x32xbf16>
    "tpu.trace_start"() <{level = 10 : i32, message = "bqd,bkd->bqk"}> : () -> ()
    %cst_41 = arith.constant dense<0.000000e+00> : vector<2x8x8xf32>
    %120 = tpu.matmul %115, %117, %cst_41 {dimension_numbers = #tpu.dot_dimension_numbers<[2], [2], [1], [1], [0, 0, 0, 1, 1, 1], [0], [0]>} : vector<2x8x32xbf16>, vector<2x8x32xbf16>, vector<2x8x8xf32> -> vector<2x8x8xf32>
    "tpu.trace_stop"() : () -> ()
    %cst_42 = arith.constant 0.176776692 : f32
    %121 = vector.broadcast %cst_42 : f32 to vector<2x8x8xf32>
    %122 = arith.mulf %120, %121 : vector<2x8x8xf32>
    %123 = vector.broadcast %27 : vector<2x1x8xf32> to vector<2x8x8xf32>
    %124 = arith.addf %122, %123 : vector<2x8x8xf32>
    %cst_43 = arith.constant dense<0xFF800000> : vector<2x8xf32>
    %125 = vector.multi_reduction <maximumf>, %124, %cst_43 [2] : vector<2x8x8xf32> to vector<2x8xf32>
    %126 = vector.shape_cast %125 : vector<2x8xf32> to vector<2x8x1xf32>
    %127 = vector.broadcast %126 : vector<2x8x1xf32> to vector<2x8x8xf32>
    %128 = arith.subf %124, %127 : vector<2x8x8xf32>
    %129 = math.exp %128 : vector<2x8x8xf32>
    %cst_44 = arith.constant dense<0.000000e+00> : vector<2x8xf32>
    %130 = vector.multi_reduction <add>, %129, %cst_44 [2] : vector<2x8x8xf32> to vector<2x8xf32>
    %131 = vector.shape_cast %130 : vector<2x8xf32> to vector<2x8x1xf32>
    %132 = tpu.reciprocal %131 {approx = true} : vector<2x8x1xf32> -> vector<2x8x1xf32>
    %133 = vector.broadcast %132 : vector<2x8x1xf32> to vector<2x8x8xf32>
    %134 = arith.mulf %129, %133 : vector<2x8x8xf32>
    %135 = arith.truncf %134 : vector<2x8x8xf32> to vector<2x8x8xbf16>
    "tpu.trace_start"() <{level = 10 : i32, message = "bqk,bkd->bqd"}> : () -> ()
    %cst_45 = arith.constant dense<0.000000e+00> : vector<2x8x32xf32>
    %136 = tpu.matmul %135, %119, %cst_45 {dimension_numbers = #tpu.dot_dimension_numbers<[2], [1], [1], [2], [0, 0, 0, 1, 1, 2], [0], [0]>} : vector<2x8x8xbf16>, vector<2x8x32xbf16>, vector<2x8x32xf32> -> vector<2x8x32xf32>
    "tpu.trace_stop"() : () -> ()
    %c0_46 = arith.constant 0 : index
    %c0_47 = arith.constant 0 : index
    %c96 = arith.constant 96 : index
    %137 = vector.load %arg19[%c0_46, %c0_47, %c96] : memref<2x8x128xf32, #tpu.memory_space<vmem>>, vector<2x8x32xf32>
    tpu.vector_store %arg19[%c0_46, %c0_47, %c96], %136 {strides = array<i32>} : memref<2x8x128xf32, #tpu.memory_space<vmem>>, vector<2x8x32xf32>,
    %c0_48 = arith.constant 0 : index
    %c0_49 = arith.constant 0 : index
    %c0_50 = arith.constant 0 : index
    %138 = vector.load %arg19[%c0_48, %c0_49, %c0_50] : memref<2x8x128xf32, #tpu.memory_space<vmem>>, vector<2x8x128xf32>
    %139 = vector.shape_cast %138 : vector<2x8x128xf32> to vector<16x128xf32>
    %140 = arith.truncf %139 : vector<16x128xf32> to vector<16x128xbf16>
    %c0_51 = arith.constant 0 : index
    %c0_52 = arith.constant 0 : index
    %c0_53 = arith.constant 0 : index
    %141 = vector.load %arg6[%c0_51, %c0_52, %c0_53] : memref<2x128x128xbf16, #tpu.memory_space<vmem>>, vector<1x128x128xbf16>
    %142 = vector.shape_cast %141 : vector<1x128x128xbf16> to vector<128x128xbf16>
    %cst_54 = arith.constant dense<0.000000e+00> : vector<16x128xf32>
    %143 = tpu.matmul %140, %142, %cst_54 {dimension_numbers = #tpu.dot_dimension_numbers<[1], [0], [0], [1], [0, 0, 1, 1], [], []>} : vector<16x128xbf16>, vector<128x128xbf16>, vector<16x128xf32> -> vector<16x128xf32>
    %c0_55 = arith.constant 0 : index
    %c0_56 = arith.constant 0 : index
    %c0_57 = arith.constant 0 : index
    %144 = vector.load %arg7[%c0_55, %c0_56, %c0_57] : memref<2x1x128xf32, #tpu.memory_space<vmem>>, vector<1x1x128xf32>
    %145 = vector.shape_cast %144 : vector<1x1x128xf32> to vector<1x128xf32>
    %146 = vector.broadcast %145 : vector<1x128xf32> to vector<16x128xf32>
    %147 = arith.addf %143, %146 : vector<16x128xf32>
    %148 = arith.addf %25, %147 : vector<16x128xf32>
    %c0_58 = arith.constant 0 : index
    %c0_59 = arith.constant 0 : index
    %c0_60 = arith.constant 0 : index
    %149 = vector.load %arg8[%c0_58, %c0_59, %c0_60] : memref<2x1x128xf32, #tpu.memory_space<vmem>>, vector<1x1x128xf32>
    %150 = vector.shape_cast %149 : vector<1x1x128xf32> to vector<1x128xf32>
    %c0_61 = arith.constant 0 : index
    %c0_62 = arith.constant 0 : index
    %c0_63 = arith.constant 0 : index
    %151 = vector.load %arg9[%c0_61, %c0_62, %c0_63] : memref<2x1x128xf32, #tpu.memory_space<vmem>>, vector<1x1x128xf32>
    %152 = vector.shape_cast %151 : vector<1x1x128xf32> to vector<1x128xf32>
    %cst_64 = arith.constant dense<0.000000e+00> : vector<16xf32>
    %153 = vector.multi_reduction <add>, %148, %cst_64 [1] : vector<16x128xf32> to vector<16xf32>
    %154 = vector.shape_cast %153 : vector<16xf32> to vector<16x1xf32>
    %cst_65 = arith.constant 1.280000e+02 : f32
    %155 = vector.broadcast %cst_65 : f32 to vector<16x1xf32>
    %156 = arith.divf %154, %155 : vector<16x1xf32>
    %157 = vector.broadcast %156 : vector<16x1xf32> to vector<16x128xf32>
    %158 = arith.subf %148, %157 : vector<16x128xf32>
    %159 = arith.mulf %158, %158 : vector<16x128xf32>
    %cst_66 = arith.constant dense<0.000000e+00> : vector<16xf32>
    %160 = vector.multi_reduction <add>, %159, %cst_66 [1] : vector<16x128xf32> to vector<16xf32>
    %161 = vector.shape_cast %160 : vector<16xf32> to vector<16x1xf32>
    %cst_67 = arith.constant 1.280000e+02 : f32
    %162 = vector.broadcast %cst_67 : f32 to vector<16x1xf32>
    %163 = arith.divf %161, %162 : vector<16x1xf32>
    %164 = vector.broadcast %156 : vector<16x1xf32> to vector<16x128xf32>
    %165 = arith.subf %148, %164 : vector<16x128xf32>
    %cst_68 = arith.constant 9.99999996E-13 : f32
    %166 = vector.broadcast %cst_68 : f32 to vector<16x1xf32>
    %167 = arith.addf %163, %166 : vector<16x1xf32>
    %168 = math.rsqrt %167 : vector<16x1xf32>
    %169 = vector.broadcast %168 : vector<16x1xf32> to vector<16x128xf32>
    %170 = arith.mulf %165, %169 : vector<16x128xf32>
    %171 = vector.broadcast %150 : vector<1x128xf32> to vector<16x128xf32>
    %172 = arith.mulf %170, %171 : vector<16x128xf32>
    %173 = vector.broadcast %152 : vector<1x128xf32> to vector<16x128xf32>
    %174 = arith.addf %172, %173 : vector<16x128xf32>
    %175 = arith.truncf %174 : vector<16x128xf32> to vector<16x128xbf16>
    %c0_69 = arith.constant 0 : index
    %c0_70 = arith.constant 0 : index
    %c0_71 = arith.constant 0 : index
    %176 = vector.load %arg10[%c0_69, %c0_70, %c0_71] : memref<2x128x512xbf16, #tpu.memory_space<vmem>>, vector<1x128x512xbf16>
    %177 = vector.shape_cast %176 : vector<1x128x512xbf16> to vector<128x512xbf16>
    %cst_72 = arith.constant dense<0.000000e+00> : vector<16x512xf32>
    %178 = tpu.matmul %175, %177, %cst_72 {dimension_numbers = #tpu.dot_dimension_numbers<[1], [0], [0], [1], [0, 0, 1, 1], [], []>} : vector<16x128xbf16>, vector<128x512xbf16>, vector<16x512xf32> -> vector<16x512xf32>
    %c0_73 = arith.constant 0 : index
    %c0_74 = arith.constant 0 : index
    %c0_75 = arith.constant 0 : index
    %179 = vector.load %arg11[%c0_73, %c0_74, %c0_75] : memref<2x1x512xf32, #tpu.memory_space<vmem>>, vector<1x1x512xf32>
    %180 = vector.shape_cast %179 : vector<1x1x512xf32> to vector<1x512xf32>
    %181 = vector.broadcast %180 : vector<1x512xf32> to vector<16x512xf32>
    %182 = arith.addf %178, %181 : vector<16x512xf32>
    %183 = arith.mulf %182, %182 : vector<16x512xf32>
    %184 = arith.mulf %182, %183 : vector<16x512xf32>
    %cst_76 = arith.constant 4.471500e-02 : f32
    %185 = vector.broadcast %cst_76 : f32 to vector<16x512xf32>
    %186 = arith.mulf %185, %184 : vector<16x512xf32>
    %187 = arith.addf %182, %186 : vector<16x512xf32>
    %cst_77 = arith.constant 0.797884583 : f32
    %188 = vector.broadcast %cst_77 : f32 to vector<16x512xf32>
    %189 = arith.mulf %188, %187 : vector<16x512xf32>
    %190 = math.tanh %189 : vector<16x512xf32>
    %cst_78 = arith.constant 1.000000e+00 : f32
    %191 = vector.broadcast %cst_78 : f32 to vector<16x512xf32>
    %192 = arith.addf %191, %190 : vector<16x512xf32>
    %cst_79 = arith.constant 5.000000e-01 : f32
    %193 = vector.broadcast %cst_79 : f32 to vector<16x512xf32>
    %194 = arith.mulf %193, %192 : vector<16x512xf32>
    %195 = arith.mulf %182, %194 : vector<16x512xf32>
    %196 = arith.truncf %195 : vector<16x512xf32> to vector<16x512xbf16>
    %c0_80 = arith.constant 0 : index
    %c0_81 = arith.constant 0 : index
    %c0_82 = arith.constant 0 : index
    %197 = vector.load %arg12[%c0_80, %c0_81, %c0_82] : memref<2x512x128xbf16, #tpu.memory_space<vmem>>, vector<1x512x128xbf16>
    %198 = vector.shape_cast %197 : vector<1x512x128xbf16> to vector<512x128xbf16>
    %cst_83 = arith.constant dense<0.000000e+00> : vector<16x128xf32>
    %199 = tpu.matmul %196, %198, %cst_83 {dimension_numbers = #tpu.dot_dimension_numbers<[1], [0], [0], [1], [0, 0, 1, 1], [], []>} : vector<16x512xbf16>, vector<512x128xbf16>, vector<16x128xf32> -> vector<16x128xf32>
    %c0_84 = arith.constant 0 : index
    %c0_85 = arith.constant 0 : index
    %c0_86 = arith.constant 0 : index
    %200 = vector.load %arg13[%c0_84, %c0_85, %c0_86] : memref<2x1x128xf32, #tpu.memory_space<vmem>>, vector<1x1x128xf32>
    %201 = vector.shape_cast %200 : vector<1x1x128xf32> to vector<1x128xf32>
    %202 = vector.broadcast %201 : vector<1x128xf32> to vector<16x128xf32>
    %203 = arith.addf %199, %202 : vector<16x128xf32>
    %204 = arith.addf %174, %203 : vector<16x128xf32>
    %c0_87 = arith.constant 0 : index
    %c0_88 = arith.constant 0 : index
    %c0_89 = arith.constant 0 : index
    %205 = vector.load %arg14[%c0_87, %c0_88, %c0_89] : memref<2x1x128xf32, #tpu.memory_space<vmem>>, vector<1x1x128xf32>
    %206 = vector.shape_cast %205 : vector<1x1x128xf32> to vector<1x128xf32>
    %c0_90 = arith.constant 0 : index
    %c0_91 = arith.constant 0 : index
    %c0_92 = arith.constant 0 : index
    %207 = vector.load %arg15[%c0_90, %c0_91, %c0_92] : memref<2x1x128xf32, #tpu.memory_space<vmem>>, vector<1x1x128xf32>
    %208 = vector.shape_cast %207 : vector<1x1x128xf32> to vector<1x128xf32>
    %cst_93 = arith.constant dense<0.000000e+00> : vector<16xf32>
    %209 = vector.multi_reduction <add>, %204, %cst_93 [1] : vector<16x128xf32> to vector<16xf32>
    %210 = vector.shape_cast %209 : vector<16xf32> to vector<16x1xf32>
    %cst_94 = arith.constant 1.280000e+02 : f32
    %211 = vector.broadcast %cst_94 : f32 to vector<16x1xf32>
    %212 = arith.divf %210, %211 : vector<16x1xf32>
    %213 = vector.broadcast %212 : vector<16x1xf32> to vector<16x128xf32>
    %214 = arith.subf %204, %213 : vector<16x128xf32>
    %215 = arith.mulf %214, %214 : vector<16x128xf32>
    %cst_95 = arith.constant dense<0.000000e+00> : vector<16xf32>
    %216 = vector.multi_reduction <add>, %215, %cst_95 [1] : vector<16x128xf32> to vector<16xf32>
    %217 = vector.shape_cast %216 : vector<16xf32> to vector<16x1xf32>
    %cst_96 = arith.constant 1.280000e+02 : f32
    %218 = vector.broadcast %cst_96 : f32 to vector<16x1xf32>
    %219 = arith.divf %217, %218 : vector<16x1xf32>
    %220 = vector.broadcast %212 : vector<16x1xf32> to vector<16x128xf32>
    %221 = arith.subf %204, %220 : vector<16x128xf32>
    %cst_97 = arith.constant 9.99999996E-13 : f32
    %222 = vector.broadcast %cst_97 : f32 to vector<16x1xf32>
    %223 = arith.addf %219, %222 : vector<16x1xf32>
    %224 = math.rsqrt %223 : vector<16x1xf32>
    %225 = vector.broadcast %224 : vector<16x1xf32> to vector<16x128xf32>
    %226 = arith.mulf %221, %225 : vector<16x128xf32>
    %227 = vector.broadcast %206 : vector<1x128xf32> to vector<16x128xf32>
    %228 = arith.mulf %226, %227 : vector<16x128xf32>
    %229 = vector.broadcast %208 : vector<1x128xf32> to vector<16x128xf32>
    %230 = arith.addf %228, %229 : vector<16x128xf32>
    %231 = arith.truncf %230 : vector<16x128xf32> to vector<16x128xbf16>
    %c1 = arith.constant 1 : index
    %c0_98 = arith.constant 0 : index
    %c0_99 = arith.constant 0 : index
    %232 = vector.load %arg4[%c1, %c0_98, %c0_99] : memref<2x128x384xbf16, #tpu.memory_space<vmem>>, vector<1x128x384xbf16>
    %233 = vector.shape_cast %232 : vector<1x128x384xbf16> to vector<128x384xbf16>
    %cst_100 = arith.constant dense<0.000000e+00> : vector<16x384xf32>
    %234 = tpu.matmul %231, %233, %cst_100 {dimension_numbers = #tpu.dot_dimension_numbers<[1], [0], [0], [1], [0, 0, 1, 1], [], []>} : vector<16x128xbf16>, vector<128x384xbf16>, vector<16x384xf32> -> vector<16x384xf32>
    %c1_101 = arith.constant 1 : index
    %c0_102 = arith.constant 0 : index
    %c0_103 = arith.constant 0 : index
    %235 = vector.load %arg5[%c1_101, %c0_102, %c0_103] : memref<2x1x384xf32, #tpu.memory_space<vmem>>, vector<1x1x384xf32>
    %236 = vector.shape_cast %235 : vector<1x1x384xf32> to vector<1x384xf32>
    %237 = vector.broadcast %236 : vector<1x384xf32> to vector<16x384xf32>
    %238 = arith.addf %234, %237 : vector<16x384xf32>
    %239 = vector.extract_strided_slice %238 {offsets = [0, 0], sizes = [16, 128], strides = [1, 1]} : vector<16x384xf32> to vector<16x128xf32>
    %240 = vector.shape_cast %239 : vector<16x128xf32> to vector<2x8x128xf32>
    %241 = vector.extract_strided_slice %238 {offsets = [0, 128], sizes = [16, 128], strides = [1, 1]} : vector<16x384xf32> to vector<16x128xf32>
    %242 = vector.shape_cast %241 : vector<16x128xf32> to vector<2x8x128xf32>
    %243 = vector.extract_strided_slice %238 {offsets = [0, 256], sizes = [16, 128], strides = [1, 1]} : vector<16x384xf32> to vector<16x128xf32>
    %244 = vector.shape_cast %243 : vector<16x128xf32> to vector<2x8x128xf32>
    %245 = vector.extract_strided_slice %240 {offsets = [0, 0, 0], sizes = [2, 8, 32], strides = [1, 1, 1]} : vector<2x8x128xf32> to vector<2x8x32xf32>
    %246 = arith.truncf %245 : vector<2x8x32xf32> to vector<2x8x32xbf16>
    %247 = vector.extract_strided_slice %242 {offsets = [0, 0, 0], sizes = [2, 8, 32], strides = [1, 1, 1]} : vector<2x8x128xf32> to vector<2x8x32xf32>
    %248 = arith.truncf %247 : vector<2x8x32xf32> to vector<2x8x32xbf16>
    %249 = vector.extract_strided_slice %244 {offsets = [0, 0, 0], sizes = [2, 8, 32], strides = [1, 1, 1]} : vector<2x8x128xf32> to vector<2x8x32xf32>
    %250 = arith.truncf %249 : vector<2x8x32xf32> to vector<2x8x32xbf16>
    "tpu.trace_start"() <{level = 10 : i32, message = "bqd,bkd->bqk"}> : () -> ()
    %cst_104 = arith.constant dense<0.000000e+00> : vector<2x8x8xf32>
    %251 = tpu.matmul %246, %248, %cst_104 {dimension_numbers = #tpu.dot_dimension_numbers<[2], [2], [1], [1], [0, 0, 0, 1, 1, 1], [0], [0]>} : vector<2x8x32xbf16>, vector<2x8x32xbf16>, vector<2x8x8xf32> -> vector<2x8x8xf32>
    "tpu.trace_stop"() : () -> ()
    %cst_105 = arith.constant 0.176776692 : f32
    %252 = vector.broadcast %cst_105 : f32 to vector<2x8x8xf32>
    %253 = arith.mulf %251, %252 : vector<2x8x8xf32>
    %254 = vector.broadcast %27 : vector<2x1x8xf32> to vector<2x8x8xf32>
    %255 = arith.addf %253, %254 : vector<2x8x8xf32>
    %cst_106 = arith.constant dense<0xFF800000> : vector<2x8xf32>
    %256 = vector.multi_reduction <maximumf>, %255, %cst_106 [2] : vector<2x8x8xf32> to vector<2x8xf32>
    %257 = vector.shape_cast %256 : vector<2x8xf32> to vector<2x8x1xf32>
    %258 = vector.broadcast %257 : vector<2x8x1xf32> to vector<2x8x8xf32>
    %259 = arith.subf %255, %258 : vector<2x8x8xf32>
    %260 = math.exp %259 : vector<2x8x8xf32>
    %cst_107 = arith.constant dense<0.000000e+00> : vector<2x8xf32>
    %261 = vector.multi_reduction <add>, %260, %cst_107 [2] : vector<2x8x8xf32> to vector<2x8xf32>
    %262 = vector.shape_cast %261 : vector<2x8xf32> to vector<2x8x1xf32>
    %263 = tpu.reciprocal %262 {approx = true} : vector<2x8x1xf32> -> vector<2x8x1xf32>
    %264 = vector.broadcast %263 : vector<2x8x1xf32> to vector<2x8x8xf32>
    %265 = arith.mulf %260, %264 : vector<2x8x8xf32>
    %266 = arith.truncf %265 : vector<2x8x8xf32> to vector<2x8x8xbf16>
    "tpu.trace_start"() <{level = 10 : i32, message = "bqk,bkd->bqd"}> : () -> ()
    %cst_108 = arith.constant dense<0.000000e+00> : vector<2x8x32xf32>
    %267 = tpu.matmul %266, %250, %cst_108 {dimension_numbers = #tpu.dot_dimension_numbers<[2], [1], [1], [2], [0, 0, 0, 1, 1, 2], [0], [0]>} : vector<2x8x8xbf16>, vector<2x8x32xbf16>, vector<2x8x32xf32> -> vector<2x8x32xf32>
    "tpu.trace_stop"() : () -> ()
    %c0_109 = arith.constant 0 : index
    %c0_110 = arith.constant 0 : index
    %c0_111 = arith.constant 0 : index
    %268 = vector.load %arg19[%c0_109, %c0_110, %c0_111] : memref<2x8x128xf32, #tpu.memory_space<vmem>>, vector<2x8x32xf32>
    tpu.vector_store %arg19[%c0_109, %c0_110, %c0_111], %267 {strides = array<i32>} : memref<2x8x128xf32, #tpu.memory_space<vmem>>, vector<2x8x32xf32>,
    %269 = vector.extract_strided_slice %240 {offsets = [0, 0, 32], sizes = [2, 8, 32], strides = [1, 1, 1]} : vector<2x8x128xf32> to vector<2x8x32xf32>
    %270 = arith.truncf %269 : vector<2x8x32xf32> to vector<2x8x32xbf16>
    %271 = vector.extract_strided_slice %242 {offsets = [0, 0, 32], sizes = [2, 8, 32], strides = [1, 1, 1]} : vector<2x8x128xf32> to vector<2x8x32xf32>
    %272 = arith.truncf %271 : vector<2x8x32xf32> to vector<2x8x32xbf16>
    %273 = vector.extract_strided_slice %244 {offsets = [0, 0, 32], sizes = [2, 8, 32], strides = [1, 1, 1]} : vector<2x8x128xf32> to vector<2x8x32xf32>
    %274 = arith.truncf %273 : vector<2x8x32xf32> to vector<2x8x32xbf16>
    "tpu.trace_start"() <{level = 10 : i32, message = "bqd,bkd->bqk"}> : () -> ()
    %cst_112 = arith.constant dense<0.000000e+00> : vector<2x8x8xf32>
    %275 = tpu.matmul %270, %272, %cst_112 {dimension_numbers = #tpu.dot_dimension_numbers<[2], [2], [1], [1], [0, 0, 0, 1, 1, 1], [0], [0]>} : vector<2x8x32xbf16>, vector<2x8x32xbf16>, vector<2x8x8xf32> -> vector<2x8x8xf32>
    "tpu.trace_stop"() : () -> ()
    %cst_113 = arith.constant 0.176776692 : f32
    %276 = vector.broadcast %cst_113 : f32 to vector<2x8x8xf32>
    %277 = arith.mulf %275, %276 : vector<2x8x8xf32>
    %278 = vector.broadcast %27 : vector<2x1x8xf32> to vector<2x8x8xf32>
    %279 = arith.addf %277, %278 : vector<2x8x8xf32>
    %cst_114 = arith.constant dense<0xFF800000> : vector<2x8xf32>
    %280 = vector.multi_reduction <maximumf>, %279, %cst_114 [2] : vector<2x8x8xf32> to vector<2x8xf32>
    %281 = vector.shape_cast %280 : vector<2x8xf32> to vector<2x8x1xf32>
    %282 = vector.broadcast %281 : vector<2x8x1xf32> to vector<2x8x8xf32>
    %283 = arith.subf %279, %282 : vector<2x8x8xf32>
    %284 = math.exp %283 : vector<2x8x8xf32>
    %cst_115 = arith.constant dense<0.000000e+00> : vector<2x8xf32>
    %285 = vector.multi_reduction <add>, %284, %cst_115 [2] : vector<2x8x8xf32> to vector<2x8xf32>
    %286 = vector.shape_cast %285 : vector<2x8xf32> to vector<2x8x1xf32>
    %287 = tpu.reciprocal %286 {approx = true} : vector<2x8x1xf32> -> vector<2x8x1xf32>
    %288 = vector.broadcast %287 : vector<2x8x1xf32> to vector<2x8x8xf32>
    %289 = arith.mulf %284, %288 : vector<2x8x8xf32>
    %290 = arith.truncf %289 : vector<2x8x8xf32> to vector<2x8x8xbf16>
    "tpu.trace_start"() <{level = 10 : i32, message = "bqk,bkd->bqd"}> : () -> ()
    %cst_116 = arith.constant dense<0.000000e+00> : vector<2x8x32xf32>
    %291 = tpu.matmul %290, %274, %cst_116 {dimension_numbers = #tpu.dot_dimension_numbers<[2], [1], [1], [2], [0, 0, 0, 1, 1, 2], [0], [0]>} : vector<2x8x8xbf16>, vector<2x8x32xbf16>, vector<2x8x32xf32> -> vector<2x8x32xf32>
    "tpu.trace_stop"() : () -> ()
    %c0_117 = arith.constant 0 : index
    %c0_118 = arith.constant 0 : index
    %c32_119 = arith.constant 32 : index
    %292 = vector.load %arg19[%c0_117, %c0_118, %c32_119] : memref<2x8x128xf32, #tpu.memory_space<vmem>>, vector<2x8x32xf32>
    tpu.vector_store %arg19[%c0_117, %c0_118, %c32_119], %291 {strides = array<i32>} : memref<2x8x128xf32, #tpu.memory_space<vmem>>, vector<2x8x32xf32>,
    %293 = vector.extract_strided_slice %240 {offsets = [0, 0, 64], sizes = [2, 8, 32], strides = [1, 1, 1]} : vector<2x8x128xf32> to vector<2x8x32xf32>
    %294 = arith.truncf %293 : vector<2x8x32xf32> to vector<2x8x32xbf16>
    %295 = vector.extract_strided_slice %242 {offsets = [0, 0, 64], sizes = [2, 8, 32], strides = [1, 1, 1]} : vector<2x8x128xf32> to vector<2x8x32xf32>
    %296 = arith.truncf %295 : vector<2x8x32xf32> to vector<2x8x32xbf16>
    %297 = vector.extract_strided_slice %244 {offsets = [0, 0, 64], sizes = [2, 8, 32], strides = [1, 1, 1]} : vector<2x8x128xf32> to vector<2x8x32xf32>
    %298 = arith.truncf %297 : vector<2x8x32xf32> to vector<2x8x32xbf16>
    "tpu.trace_start"() <{level = 10 : i32, message = "bqd,bkd->bqk"}> : () -> ()
    %cst_120 = arith.constant dense<0.000000e+00> : vector<2x8x8xf32>
    %299 = tpu.matmul %294, %296, %cst_120 {dimension_numbers = #tpu.dot_dimension_numbers<[2], [2], [1], [1], [0, 0, 0, 1, 1, 1], [0], [0]>} : vector<2x8x32xbf16>, vector<2x8x32xbf16>, vector<2x8x8xf32> -> vector<2x8x8xf32>
    "tpu.trace_stop"() : () -> ()
    %cst_121 = arith.constant 0.176776692 : f32
    %300 = vector.broadcast %cst_121 : f32 to vector<2x8x8xf32>
    %301 = arith.mulf %299, %300 : vector<2x8x8xf32>
    %302 = vector.broadcast %27 : vector<2x1x8xf32> to vector<2x8x8xf32>
    %303 = arith.addf %301, %302 : vector<2x8x8xf32>
    %cst_122 = arith.constant dense<0xFF800000> : vector<2x8xf32>
    %304 = vector.multi_reduction <maximumf>, %303, %cst_122 [2] : vector<2x8x8xf32> to vector<2x8xf32>
    %305 = vector.shape_cast %304 : vector<2x8xf32> to vector<2x8x1xf32>
    %306 = vector.broadcast %305 : vector<2x8x1xf32> to vector<2x8x8xf32>
    %307 = arith.subf %303, %306 : vector<2x8x8xf32>
    %308 = math.exp %307 : vector<2x8x8xf32>
    %cst_123 = arith.constant dense<0.000000e+00> : vector<2x8xf32>
    %309 = vector.multi_reduction <add>, %308, %cst_123 [2] : vector<2x8x8xf32> to vector<2x8xf32>
    %310 = vector.shape_cast %309 : vector<2x8xf32> to vector<2x8x1xf32>
    %311 = tpu.reciprocal %310 {approx = true} : vector<2x8x1xf32> -> vector<2x8x1xf32>
    %312 = vector.broadcast %311 : vector<2x8x1xf32> to vector<2x8x8xf32>
    %313 = arith.mulf %308, %312 : vector<2x8x8xf32>
    %314 = arith.truncf %313 : vector<2x8x8xf32> to vector<2x8x8xbf16>
    "tpu.trace_start"() <{level = 10 : i32, message = "bqk,bkd->bqd"}> : () -> ()
    %cst_124 = arith.constant dense<0.000000e+00> : vector<2x8x32xf32>
    %315 = tpu.matmul %314, %298, %cst_124 {dimension_numbers = #tpu.dot_dimension_numbers<[2], [1], [1], [2], [0, 0, 0, 1, 1, 2], [0], [0]>} : vector<2x8x8xbf16>, vector<2x8x32xbf16>, vector<2x8x32xf32> -> vector<2x8x32xf32>
    "tpu.trace_stop"() : () -> ()
    %c0_125 = arith.constant 0 : index
    %c0_126 = arith.constant 0 : index
    %c64_127 = arith.constant 64 : index
    %316 = vector.load %arg19[%c0_125, %c0_126, %c64_127] : memref<2x8x128xf32, #tpu.memory_space<vmem>>, vector<2x8x32xf32>
    tpu.vector_store %arg19[%c0_125, %c0_126, %c64_127], %315 {strides = array<i32>} : memref<2x8x128xf32, #tpu.memory_space<vmem>>, vector<2x8x32xf32>,
    %317 = vector.extract_strided_slice %240 {offsets = [0, 0, 96], sizes = [2, 8, 32], strides = [1, 1, 1]} : vector<2x8x128xf32> to vector<2x8x32xf32>
    %318 = arith.truncf %317 : vector<2x8x32xf32> to vector<2x8x32xbf16>
    %319 = vector.extract_strided_slice %242 {offsets = [0, 0, 96], sizes = [2, 8, 32], strides = [1, 1, 1]} : vector<2x8x128xf32> to vector<2x8x32xf32>
    %320 = arith.truncf %319 : vector<2x8x32xf32> to vector<2x8x32xbf16>
    %321 = vector.extract_strided_slice %244 {offsets = [0, 0, 96], sizes = [2, 8, 32], strides = [1, 1, 1]} : vector<2x8x128xf32> to vector<2x8x32xf32>
    %322 = arith.truncf %321 : vector<2x8x32xf32> to vector<2x8x32xbf16>
    "tpu.trace_start"() <{level = 10 : i32, message = "bqd,bkd->bqk"}> : () -> ()
    %cst_128 = arith.constant dense<0.000000e+00> : vector<2x8x8xf32>
    %323 = tpu.matmul %318, %320, %cst_128 {dimension_numbers = #tpu.dot_dimension_numbers<[2], [2], [1], [1], [0, 0, 0, 1, 1, 1], [0], [0]>} : vector<2x8x32xbf16>, vector<2x8x32xbf16>, vector<2x8x8xf32> -> vector<2x8x8xf32>
    "tpu.trace_stop"() : () -> ()
    %cst_129 = arith.constant 0.176776692 : f32
    %324 = vector.broadcast %cst_129 : f32 to vector<2x8x8xf32>
    %325 = arith.mulf %323, %324 : vector<2x8x8xf32>
    %326 = vector.broadcast %27 : vector<2x1x8xf32> to vector<2x8x8xf32>
    %327 = arith.addf %325, %326 : vector<2x8x8xf32>
    %cst_130 = arith.constant dense<0xFF800000> : vector<2x8xf32>
    %328 = vector.multi_reduction <maximumf>, %327, %cst_130 [2] : vector<2x8x8xf32> to vector<2x8xf32>
    %329 = vector.shape_cast %328 : vector<2x8xf32> to vector<2x8x1xf32>
    %330 = vector.broadcast %329 : vector<2x8x1xf32> to vector<2x8x8xf32>
    %331 = arith.subf %327, %330 : vector<2x8x8xf32>
    %332 = math.exp %331 : vector<2x8x8xf32>
    %cst_131 = arith.constant dense<0.000000e+00> : vector<2x8xf32>
    %333 = vector.multi_reduction <add>, %332, %cst_131 [2] : vector<2x8x8xf32> to vector<2x8xf32>
    %334 = vector.shape_cast %333 : vector<2x8xf32> to vector<2x8x1xf32>
    %335 = tpu.reciprocal %334 {approx = true} : vector<2x8x1xf32> -> vector<2x8x1xf32>
    %336 = vector.broadcast %335 : vector<2x8x1xf32> to vector<2x8x8xf32>
    %337 = arith.mulf %332, %336 : vector<2x8x8xf32>
    %338 = arith.truncf %337 : vector<2x8x8xf32> to vector<2x8x8xbf16>
    "tpu.trace_start"() <{level = 10 : i32, message = "bqk,bkd->bqd"}> : () -> ()
    %cst_132 = arith.constant dense<0.000000e+00> : vector<2x8x32xf32>
    %339 = tpu.matmul %338, %322, %cst_132 {dimension_numbers = #tpu.dot_dimension_numbers<[2], [1], [1], [2], [0, 0, 0, 1, 1, 2], [0], [0]>} : vector<2x8x8xbf16>, vector<2x8x32xbf16>, vector<2x8x32xf32> -> vector<2x8x32xf32>
    "tpu.trace_stop"() : () -> ()
    %c0_133 = arith.constant 0 : index
    %c0_134 = arith.constant 0 : index
    %c96_135 = arith.constant 96 : index
    %340 = vector.load %arg19[%c0_133, %c0_134, %c96_135] : memref<2x8x128xf32, #tpu.memory_space<vmem>>, vector<2x8x32xf32>
    tpu.vector_store %arg19[%c0_133, %c0_134, %c96_135], %339 {strides = array<i32>} : memref<2x8x128xf32, #tpu.memory_space<vmem>>, vector<2x8x32xf32>,
    %c0_136 = arith.constant 0 : index
    %c0_137 = arith.constant 0 : index
    %c0_138 = arith.constant 0 : index
    %341 = vector.load %arg19[%c0_136, %c0_137, %c0_138] : memref<2x8x128xf32, #tpu.memory_space<vmem>>, vector<2x8x128xf32>
    %342 = vector.shape_cast %341 : vector<2x8x128xf32> to vector<16x128xf32>
    %343 = arith.truncf %342 : vector<16x128xf32> to vector<16x128xbf16>
    %c1_139 = arith.constant 1 : index
    %c0_140 = arith.constant 0 : index
    %c0_141 = arith.constant 0 : index
    %344 = vector.load %arg6[%c1_139, %c0_140, %c0_141] : memref<2x128x128xbf16, #tpu.memory_space<vmem>>, vector<1x128x128xbf16>
    %345 = vector.shape_cast %344 : vector<1x128x128xbf16> to vector<128x128xbf16>
    %cst_142 = arith.constant dense<0.000000e+00> : vector<16x128xf32>
    %346 = tpu.matmul %343, %345, %cst_142 {dimension_numbers = #tpu.dot_dimension_numbers<[1], [0], [0], [1], [0, 0, 1, 1], [], []>} : vector<16x128xbf16>, vector<128x128xbf16>, vector<16x128xf32> -> vector<16x128xf32>
    %c1_143 = arith.constant 1 : index
    %c0_144 = arith.constant 0 : index
    %c0_145 = arith.constant 0 : index
    %347 = vector.load %arg7[%c1_143, %c0_144, %c0_145] : memref<2x1x128xf32, #tpu.memory_space<vmem>>, vector<1x1x128xf32>
    %348 = vector.shape_cast %347 : vector<1x1x128xf32> to vector<1x128xf32>
    %349 = vector.broadcast %348 : vector<1x128xf32> to vector<16x128xf32>
    %350 = arith.addf %346, %349 : vector<16x128xf32>
    %351 = arith.addf %230, %350 : vector<16x128xf32>
    %c1_146 = arith.constant 1 : index
    %c0_147 = arith.constant 0 : index
    %c0_148 = arith.constant 0 : index
    %352 = vector.load %arg8[%c1_146, %c0_147, %c0_148] : memref<2x1x128xf32, #tpu.memory_space<vmem>>, vector<1x1x128xf32>
    %353 = vector.shape_cast %352 : vector<1x1x128xf32> to vector<1x128xf32>
    %c1_149 = arith.constant 1 : index
    %c0_150 = arith.constant 0 : index
    %c0_151 = arith.constant 0 : index
    %354 = vector.load %arg9[%c1_149, %c0_150, %c0_151] : memref<2x1x128xf32, #tpu.memory_space<vmem>>, vector<1x1x128xf32>
    %355 = vector.shape_cast %354 : vector<1x1x128xf32> to vector<1x128xf32>
    %cst_152 = arith.constant dense<0.000000e+00> : vector<16xf32>
    %356 = vector.multi_reduction <add>, %351, %cst_152 [1] : vector<16x128xf32> to vector<16xf32>
    %357 = vector.shape_cast %356 : vector<16xf32> to vector<16x1xf32>
    %cst_153 = arith.constant 1.280000e+02 : f32
    %358 = vector.broadcast %cst_153 : f32 to vector<16x1xf32>
    %359 = arith.divf %357, %358 : vector<16x1xf32>
    %360 = vector.broadcast %359 : vector<16x1xf32> to vector<16x128xf32>
    %361 = arith.subf %351, %360 : vector<16x128xf32>
    %362 = arith.mulf %361, %361 : vector<16x128xf32>
    %cst_154 = arith.constant dense<0.000000e+00> : vector<16xf32>
    %363 = vector.multi_reduction <add>, %362, %cst_154 [1] : vector<16x128xf32> to vector<16xf32>
    %364 = vector.shape_cast %363 : vector<16xf32> to vector<16x1xf32>
    %cst_155 = arith.constant 1.280000e+02 : f32
    %365 = vector.broadcast %cst_155 : f32 to vector<16x1xf32>
    %366 = arith.divf %364, %365 : vector<16x1xf32>
    %367 = vector.broadcast %359 : vector<16x1xf32> to vector<16x128xf32>
    %368 = arith.subf %351, %367 : vector<16x128xf32>
    %cst_156 = arith.constant 9.99999996E-13 : f32
    %369 = vector.broadcast %cst_156 : f32 to vector<16x1xf32>
    %370 = arith.addf %366, %369 : vector<16x1xf32>
    %371 = math.rsqrt %370 : vector<16x1xf32>
    %372 = vector.broadcast %371 : vector<16x1xf32> to vector<16x128xf32>
    %373 = arith.mulf %368, %372 : vector<16x128xf32>
    %374 = vector.broadcast %353 : vector<1x128xf32> to vector<16x128xf32>
    %375 = arith.mulf %373, %374 : vector<16x128xf32>
    %376 = vector.broadcast %355 : vector<1x128xf32> to vector<16x128xf32>
    %377 = arith.addf %375, %376 : vector<16x128xf32>
    %378 = arith.truncf %377 : vector<16x128xf32> to vector<16x128xbf16>
    %c1_157 = arith.constant 1 : index
    %c0_158 = arith.constant 0 : index
    %c0_159 = arith.constant 0 : index
    %379 = vector.load %arg10[%c1_157, %c0_158, %c0_159] : memref<2x128x512xbf16, #tpu.memory_space<vmem>>, vector<1x128x512xbf16>
    %380 = vector.shape_cast %379 : vector<1x128x512xbf16> to vector<128x512xbf16>
    %cst_160 = arith.constant dense<0.000000e+00> : vector<16x512xf32>
    %381 = tpu.matmul %378, %380, %cst_160 {dimension_numbers = #tpu.dot_dimension_numbers<[1], [0], [0], [1], [0, 0, 1, 1], [], []>} : vector<16x128xbf16>, vector<128x512xbf16>, vector<16x512xf32> -> vector<16x512xf32>
    %c1_161 = arith.constant 1 : index
    %c0_162 = arith.constant 0 : index
    %c0_163 = arith.constant 0 : index
    %382 = vector.load %arg11[%c1_161, %c0_162, %c0_163] : memref<2x1x512xf32, #tpu.memory_space<vmem>>, vector<1x1x512xf32>
    %383 = vector.shape_cast %382 : vector<1x1x512xf32> to vector<1x512xf32>
    %384 = vector.broadcast %383 : vector<1x512xf32> to vector<16x512xf32>
    %385 = arith.addf %381, %384 : vector<16x512xf32>
    %386 = arith.mulf %385, %385 : vector<16x512xf32>
    %387 = arith.mulf %385, %386 : vector<16x512xf32>
    %cst_164 = arith.constant 4.471500e-02 : f32
    %388 = vector.broadcast %cst_164 : f32 to vector<16x512xf32>
    %389 = arith.mulf %388, %387 : vector<16x512xf32>
    %390 = arith.addf %385, %389 : vector<16x512xf32>
    %cst_165 = arith.constant 0.797884583 : f32
    %391 = vector.broadcast %cst_165 : f32 to vector<16x512xf32>
    %392 = arith.mulf %391, %390 : vector<16x512xf32>
    %393 = math.tanh %392 : vector<16x512xf32>
    %cst_166 = arith.constant 1.000000e+00 : f32
    %394 = vector.broadcast %cst_166 : f32 to vector<16x512xf32>
    %395 = arith.addf %394, %393 : vector<16x512xf32>
    %cst_167 = arith.constant 5.000000e-01 : f32
    %396 = vector.broadcast %cst_167 : f32 to vector<16x512xf32>
    %397 = arith.mulf %396, %395 : vector<16x512xf32>
    %398 = arith.mulf %385, %397 : vector<16x512xf32>
    %399 = arith.truncf %398 : vector<16x512xf32> to vector<16x512xbf16>
    %c1_168 = arith.constant 1 : index
    %c0_169 = arith.constant 0 : index
    %c0_170 = arith.constant 0 : index
    %400 = vector.load %arg12[%c1_168, %c0_169, %c0_170] : memref<2x512x128xbf16, #tpu.memory_space<vmem>>, vector<1x512x128xbf16>
    %401 = vector.shape_cast %400 : vector<1x512x128xbf16> to vector<512x128xbf16>
    %cst_171 = arith.constant dense<0.000000e+00> : vector<16x128xf32>
    %402 = tpu.matmul %399, %401, %cst_171 {dimension_numbers = #tpu.dot_dimension_numbers<[1], [0], [0], [1], [0, 0, 1, 1], [], []>} : vector<16x512xbf16>, vector<512x128xbf16>, vector<16x128xf32> -> vector<16x128xf32>
    %c1_172 = arith.constant 1 : index
    %c0_173 = arith.constant 0 : index
    %c0_174 = arith.constant 0 : index
    %403 = vector.load %arg13[%c1_172, %c0_173, %c0_174] : memref<2x1x128xf32, #tpu.memory_space<vmem>>, vector<1x1x128xf32>
    %404 = vector.shape_cast %403 : vector<1x1x128xf32> to vector<1x128xf32>
    %405 = vector.broadcast %404 : vector<1x128xf32> to vector<16x128xf32>
    %406 = arith.addf %402, %405 : vector<16x128xf32>
    %407 = arith.addf %377, %406 : vector<16x128xf32>
    %c1_175 = arith.constant 1 : index
    %c0_176 = arith.constant 0 : index
    %c0_177 = arith.constant 0 : index
    %408 = vector.load %arg14[%c1_175, %c0_176, %c0_177] : memref<2x1x128xf32, #tpu.memory_space<vmem>>, vector<1x1x128xf32>
    %409 = vector.shape_cast %408 : vector<1x1x128xf32> to vector<1x128xf32>
    %c1_178 = arith.constant 1 : index
    %c0_179 = arith.constant 0 : index
    %c0_180 = arith.constant 0 : index
    %410 = vector.load %arg15[%c1_178, %c0_179, %c0_180] : memref<2x1x128xf32, #tpu.memory_space<vmem>>, vector<1x1x128xf32>
    %411 = vector.shape_cast %410 : vector<1x1x128xf32> to vector<1x128xf32>
    %cst_181 = arith.constant dense<0.000000e+00> : vector<16xf32>
    %412 = vector.multi_reduction <add>, %407, %cst_181 [1] : vector<16x128xf32> to vector<16xf32>
    %413 = vector.shape_cast %412 : vector<16xf32> to vector<16x1xf32>
    %cst_182 = arith.constant 1.280000e+02 : f32
    %414 = vector.broadcast %cst_182 : f32 to vector<16x1xf32>
    %415 = arith.divf %413, %414 : vector<16x1xf32>
    %416 = vector.broadcast %415 : vector<16x1xf32> to vector<16x128xf32>
    %417 = arith.subf %407, %416 : vector<16x128xf32>
    %418 = arith.mulf %417, %417 : vector<16x128xf32>
    %cst_183 = arith.constant dense<0.000000e+00> : vector<16xf32>
    %419 = vector.multi_reduction <add>, %418, %cst_183 [1] : vector<16x128xf32> to vector<16xf32>
    %420 = vector.shape_cast %419 : vector<16xf32> to vector<16x1xf32>
    %cst_184 = arith.constant 1.280000e+02 : f32
    %421 = vector.broadcast %cst_184 : f32 to vector<16x1xf32>
    %422 = arith.divf %420, %421 : vector<16x1xf32>
    %423 = vector.broadcast %415 : vector<16x1xf32> to vector<16x128xf32>
    %424 = arith.subf %407, %423 : vector<16x128xf32>
    %cst_185 = arith.constant 9.99999996E-13 : f32
    %425 = vector.broadcast %cst_185 : f32 to vector<16x1xf32>
    %426 = arith.addf %422, %425 : vector<16x1xf32>
    %427 = math.rsqrt %426 : vector<16x1xf32>
    %428 = vector.broadcast %427 : vector<16x1xf32> to vector<16x128xf32>
    %429 = arith.mulf %424, %428 : vector<16x128xf32>
    %430 = vector.broadcast %409 : vector<1x128xf32> to vector<16x128xf32>
    %431 = arith.mulf %429, %430 : vector<16x128xf32>
    %432 = vector.broadcast %411 : vector<1x128xf32> to vector<16x128xf32>
    %433 = arith.addf %431, %432 : vector<16x128xf32>
    %434 = vector.shape_cast %433 : vector<16x128xf32> to vector<2x8x128xf32>
    %435 = vector.extract_strided_slice %434 {offsets = [0, 0, 0], sizes = [2, 1, 128], strides = [1, 1, 1]} : vector<2x8x128xf32> to vector<2x1x128xf32>
    %436 = vector.shape_cast %435 : vector<2x1x128xf32> to vector<2x128xf32>
    %437 = arith.truncf %436 : vector<2x128xf32> to vector<2x128xbf16>
    %c0_186 = arith.constant 0 : index
    %c0_187 = arith.constant 0 : index
    %438 = vector.load %arg16[%c0_186, %c0_187] : memref<128x512xbf16, #tpu.memory_space<vmem>>, vector<128x512xbf16>
    %cst_188 = arith.constant dense<0.000000e+00> : vector<2x512xf32>
    %439 = tpu.matmul %437, %438, %cst_188 {dimension_numbers = #tpu.dot_dimension_numbers<[1], [0], [0], [1], [0, 0, 1, 1], [], []>} : vector<2x128xbf16>, vector<128x512xbf16>, vector<2x512xf32> -> vector<2x512xf32>
    %c0_189 = arith.constant 0 : index
    %c0_190 = arith.constant 0 : index
    %440 = vector.load %arg17[%c0_189, %c0_190] : memref<1x512xf32, #tpu.memory_space<vmem>>, vector<1x512xf32>
    %441 = vector.broadcast %440 : vector<1x512xf32> to vector<2x512xf32>
    %442 = arith.addf %439, %441 : vector<2x512xf32>
    %c0_191 = arith.constant 0 : index
    %c0_192 = arith.constant 0 : index
    %443 = vector.load %arg18[%c0_191, %c0_192] : memref<2x512xf32, #tpu.memory_space<vmem>>, vector<2x512xf32>
    tpu.vector_store %arg18[%c0_191, %c0_192], %442 {strides = array<i32>} : memref<2x512xf32, #tpu.memory_space<vmem>>, vector<2x512xf32>,
    return
  }
}

</mosaic_0001>

<llo_original>
// kernel: tpu_custom_call.1
$region0: #{tpu_custom_call.1}
  #allocation0 [shape = 'u32[]', space=smem, size = 0x4, offset = 0x4, fixed_abs, tag = 'smem constant byte address 0x4 - core index']
  #allocation1 [shape = 'u32[144,128]{1,0:T(1,128)}', space=vmem, size = 0x12000, scoped, tag = 'internal scratch']
  #allocation2 [shape = 'f32[2,8,128]{2,1,0:T(8,128)}', space=vmem, size = 0x2000, scoped, tag = 'scratch operand']
  %s0 = inlined_call_operand.hbm [shape: f32[2,8,128], index: 0, kind: input, shape index: {}]
  %s1 = inlined_call_operand.hbm [shape: f32[2,8], index: 1, kind: input, shape index: {}]
  %s2 = inlined_call_operand.hbm [shape: f32[1,128], index: 2, kind: input, shape index: {}]
  %s3 = inlined_call_operand.hbm [shape: f32[1,128], index: 3, kind: input, shape index: {}]
  %s4 = inlined_call_operand.hbm [shape: bf16[2,128,384], index: 4, kind: input, shape index: {}]
  %s5 = inlined_call_operand.vmem [shape: f32[2,1,384], index: 5, kind: input, shape index: {}]
  %s6 = inlined_call_operand.hbm [shape: bf16[2,128,128], index: 6, kind: input, shape index: {}]
  %s7 = inlined_call_operand.vmem [shape: f32[2,1,128], index: 7, kind: input, shape index: {}]
  %s8 = inlined_call_operand.vmem [shape: f32[2,1,128], index: 8, kind: input, shape index: {}]
  %s9 = inlined_call_operand.vmem [shape: f32[2,1,128], index: 9, kind: input, shape index: {}]
  %s10 = inlined_call_operand.hbm [shape: bf16[2,128,512], index: 10, kind: input, shape index: {}]
  %s11 = inlined_call_operand.vmem [shape: f32[2,1,512], index: 11, kind: input, shape index: {}]
  %s12 = inlined_call_operand.hbm [shape: bf16[2,512,128], index: 12, kind: input, shape index: {}]
  %s13 = inlined_call_operand.vmem [shape: f32[2,1,128], index: 13, kind: input, shape index: {}]
  %s14 = inlined_call_operand.vmem [shape: f32[2,1,128], index: 14, kind: input, shape index: {}]
  %s15 = inlined_call_operand.vmem [shape: f32[2,1,128], index: 15, kind: input, shape index: {}]
  %s16 = inlined_call_operand.hbm [shape: bf16[128,512], index: 16, kind: input, shape index: {}]
  %s17 = inlined_call_operand.vmem [shape: f32[1,512], index: 17, kind: input, shape index: {}]
  %s18 = inlined_call_operand.hbm [shape: f32[2,512], index: 18, kind: output, shape index: {}]
  %s19 = sld [smem:[#allocation0]]
  $region118: #{tpu_custom_call.1} parent=0
    _
  %s21 = ssub.s32 1, %s19
  %s22 = scalar_select 0, %s21, %s19
  $region1: #{tpu_custom_call.1} parent=0
    #allocation3 [shape = 'u8[8192]{0}', space=vmem, size = 0x2000, scoped, tag = 'input window, operand 0, single buffered']
    #allocation4 [shape = 's32[1]{0}', space=sflag, size = 0x4, scoped, tag = 'scoped memory for tpu_custom_call.1']
    #allocation5 [shape = 's32[1]{0}', space=sflag, size = 0x4, scoped, tag = 'scoped memory for tpu_custom_call.1']
    #allocation6 [shape = 'u8[1024]{0}', space=vmem, size = 0x400, scoped, tag = 'input window, operand 1, single buffered']
    #allocation7 [shape = 's32[1]{0}', space=sflag, size = 0x4, scoped, tag = 'scoped memory for tpu_custom_call.1']
    #allocation8 [shape = 'u8[512]{0}', space=vmem, size = 0x400, scoped, tag = 'input window, operand 2, single buffered']
    #allocation9 [shape = 'u8[512]{0}', space=vmem, size = 0x400, scoped, tag = 'input window, operand 3, single buffered']
    #allocation10 [shape = 's32[1]{0}', space=sflag, size = 0x4, scoped, tag = 'scoped memory for tpu_custom_call.1']
    #allocation11 [shape = 'u8[196608]{0}', space=vmem, size = 0x30000, scoped, tag = 'input window, operand 4, single buffered']
    #allocation12 [shape = 'u8[65536]{0}', space=vmem, size = 0x10000, scoped, tag = 'input window, operand 6, single buffered']
    #allocation13 [shape = 's32[1]{0}', space=sflag, size = 0x4, scoped, tag = 'scoped memory for tpu_custom_call.1']
    #allocation14 [shape = 'u8[262144]{0}', space=vmem, size = 0x40000, scoped, tag = 'input window, operand 10, single buffered']
    #allocation15 [shape = 'u8[262144]{0}', space=vmem, size = 0x40000, scoped, tag = 'input window, operand 12, single buffered']
    #allocation16 [shape = 's32[1]{0}', space=sflag, size = 0x4, scoped, tag = 'scoped memory for tpu_custom_call.1']
    #allocation17 [shape = 'u8[131072]{0}', space=vmem, size = 0x20000, scoped, tag = 'input window, operand 16, single buffered']
    #allocation18 [shape = 'u8[4096]{0}', space=vmem, size = 0x1000, scoped, tag = 'output window, operand 0, single buffered']
    %23 = vsyncpa [#allocation4], 0
    %24 = vsyncpa [#allocation7], 0
    %25 = vsyncpa [#allocation10], 0
    %26 = vsyncpa [#allocation13], 0
    %27 = vsyncpa [#allocation16], 0
    %28 = vsyncpa [#allocation5], 0
    // Predicated region
    $region2: #{tpu_custom_call.1} parent=1 // pred_check
      _
    $region3: #{tpu_custom_call.1} parent=1 // pred_check_branch
      %30 = sbr.rel (0) target = $region5
    $region4: #{tpu_custom_call.1} parent=1 // pred_region
      %s32 = ssub.s32 256, 256
      %33 = vsyncadd [#allocation4], %s32
      %s34 = sshll.u32 [#allocation3], 4
      %s35 = int_to_ptr.vmem [resolvable:$true] %s34
      %40 = dma.hbm_to_vmem [thread:$0]  %s0, 256, %s35, [#allocation4], 128, 128, 8
    $region5: #{tpu_custom_call.1} parent=1 // pred_fallthru
      _
    // Predicated region
    $region6: #{tpu_custom_call.1} parent=1 // pred_check
      _
    $region7: #{tpu_custom_call.1} parent=1 // pred_check_branch
      %42 = sbr.rel (0) target = $region9
    $region8: #{tpu_custom_call.1} parent=1 // pred_region
      %s44 = ssub.s32 32, 32
      %45 = vsyncadd [#allocation7], %s44
      %s47 = sshll.u32 [#allocation6], 4
      %s48 = int_to_ptr.vmem [resolvable:$true] %s47
      %50 = dma.hbm_to_vmem [thread:$0]  %s1, 32, %s48, [#allocation7]
    $region9: #{tpu_custom_call.1} parent=1 // pred_fallthru
      _
    // Predicated region
    $region10: #{tpu_custom_call.1} parent=1 // pred_check
      _
    $region11: #{tpu_custom_call.1} parent=1 // pred_check_branch
      %52 = sbr.rel (0) target = $region13
    $region12: #{tpu_custom_call.1} parent=1 // pred_region
      %s54 = ssub.s32 16, 16
      %55 = vsyncadd [#allocation7], %s54
      %s57 = sshll.u32 [#allocation8], 4
      %s58 = int_to_ptr.vmem [resolvable:$true] %s57
      %60 = dma.hbm_to_vmem [thread:$0]  %s2, 16, %s58, [#allocation7]
    $region13: #{tpu_custom_call.1} parent=1 // pred_fallthru
      _
    // Predicated region
    $region14: #{tpu_custom_call.1} parent=1 // pred_check
      _
    $region15: #{tpu_custom_call.1} parent=1 // pred_check_branch
      %62 = sbr.rel (0) target = $region17
    $region16: #{tpu_custom_call.1} parent=1 // pred_region
      %s64 = ssub.s32 16, 16
      %65 = vsyncadd [#allocation10], %s64
      %s67 = sshll.u32 [#allocation9], 4
      %s68 = int_to_ptr.vmem [resolvable:$true] %s67
      %70 = dma.hbm_to_vmem [thread:$0]  %s3, 16, %s68, [#allocation10]
    $region17: #{tpu_custom_call.1} parent=1 // pred_fallthru
      _
    // Predicated region
    $region18: #{tpu_custom_call.1} parent=1 // pred_check
      _
    $region19: #{tpu_custom_call.1} parent=1 // pred_check_branch
      %72 = sbr.rel (0) target = $region21
    $region20: #{tpu_custom_call.1} parent=1 // pred_region
      %s74 = ssub.s32 6144, 6144
      %75 = vsyncadd [#allocation10], %s74
      %s76 = sshll.u32 [#allocation11], 4
      %s77 = int_to_ptr.vmem [resolvable:$true] %s76
      %82 = dma.hbm_to_vmem [thread:$0]  %s4, 6144, %s77, [#allocation10], 192, 192, 12
    $region21: #{tpu_custom_call.1} parent=1 // pred_fallthru
      _
    // Predicated region
    $region22: #{tpu_custom_call.1} parent=1 // pred_check
      _
    $region23: #{tpu_custom_call.1} parent=1 // pred_check_branch
      %84 = sbr.rel (0) target = $region25
    $region24: #{tpu_custom_call.1} parent=1 // pred_region
      _
    $region25: #{tpu_custom_call.1} parent=1 // pred_fallthru
      _
    // Predicated region
    $region26: #{tpu_custom_call.1} parent=1 // pred_check
      _
    $region27: #{tpu_custom_call.1} parent=1 // pred_check_branch
      %86 = sbr.rel (0) target = $region29
    $region28: #{tpu_custom_call.1} parent=1 // pred_region
      %s88 = ssub.s32 2048, 2048
      %89 = vsyncadd [#allocation13], %s88
      %s90 = sshll.u32 [#allocation12], 4
      %s91 = int_to_ptr.vmem [resolvable:$true] %s90
      %96 = dma.hbm_to_vmem [thread:$0]  %s6, 2048, %s91, [#allocation13], 64, 64, 4
    $region29: #{tpu_custom_call.1} parent=1 // pred_fallthru
      _
    // Predicated region
    $region30: #{tpu_custom_call.1} parent=1 // pred_check
      _
    $region31: #{tpu_custom_call.1} parent=1 // pred_check_branch
      %98 = sbr.rel (0) target = $region33
    $region32: #{tpu_custom_call.1} parent=1 // pred_region
      _
    $region33: #{tpu_custom_call.1} parent=1 // pred_fallthru
      _
    // Predicated region
    $region34: #{tpu_custom_call.1} parent=1 // pred_check
      _
    $region35: #{tpu_custom_call.1} parent=1 // pred_check_branch
      %100 = sbr.rel (0) target = $region37
    $region36: #{tpu_custom_call.1} parent=1 // pred_region
      _
    $region37: #{tpu_custom_call.1} parent=1 // pred_fallthru
      _
    // Predicated region
    $region38: #{tpu_custom_call.1} parent=1 // pred_check
      _
    $region39: #{tpu_custom_call.1} parent=1 // pred_check_branch
      %102 = sbr.rel (0) target = $region41
    $region40: #{tpu_custom_call.1} parent=1 // pred_region
      _
    $region41: #{tpu_custom_call.1} parent=1 // pred_fallthru
      _
    // Predicated region
    $region42: #{tpu_custom_call.1} parent=1 // pred_check
      _
    $region43: #{tpu_custom_call.1} parent=1 // pred_check_branch
      %104 = sbr.rel (0) target = $region45
    $region44: #{tpu_custom_call.1} parent=1 // pred_region
      %s106 = ssub.s32 8192, 8192
      %107 = vsyncadd [#allocation13], %s106
      %s108 = sshll.u32 [#allocation14], 4
      %s109 = int_to_ptr.vmem [resolvable:$true] %s108
      %114 = dma.hbm_to_vmem [thread:$0]  %s10, 8192, %s109, [#allocation13], 256, 256, 16
    $region45: #{tpu_custom_call.1} parent=1 // pred_fallthru
      _
    // Predicated region
    $region46: #{tpu_custom_call.1} parent=1 // pred_check
      _
    $region47: #{tpu_custom_call.1} parent=1 // pred_check_branch
      %116 = sbr.rel (0) target = $region49
    $region48: #{tpu_custom_call.1} parent=1 // pred_region
      _
    $region49: #{tpu_custom_call.1} parent=1 // pred_fallthru
      _
    // Predicated region
    $region50: #{tpu_custom_call.1} parent=1 // pred_check
      _
    $region51: #{tpu_custom_call.1} parent=1 // pred_check_branch
      %118 = sbr.rel (0) target = $region53
    $region52: #{tpu_custom_call.1} parent=1 // pred_region
      %s120 = ssub.s32 8192, 8192
      %121 = vsyncadd [#allocation16], %s120
      %s122 = sshll.u32 [#allocation15], 4
      %s123 = int_to_ptr.vmem [resolvable:$true] %s122
      %128 = dma.hbm_to_vmem [thread:$0]  %s12, 8192, %s123, [#allocation16], 64, 64, 4
    $region53: #{tpu_custom_call.1} parent=1 // pred_fallthru
      _
    // Predicated region
    $region54: #{tpu_custom_call.1} parent=1 // pred_check
      _
    $region55: #{tpu_custom_call.1} parent=1 // pred_check_branch
      %130 = sbr.rel (0) target = $region57
    $region56: #{tpu_custom_call.1} parent=1 // pred_region
      _
    $region57: #{tpu_custom_call.1} parent=1 // pred_fallthru
      _
    // Predicated region
    $region58: #{tpu_custom_call.1} parent=1 // pred_check
      _
    $region59: #{tpu_custom_call.1} parent=1 // pred_check_branch
      %132 = sbr.rel (0) target = $region61
    $region60: #{tpu_custom_call.1} parent=1 // pred_region
      _
    $region61: #{tpu_custom_call.1} parent=1 // pred_fallthru
      _
    // Predicated region
    $region62: #{tpu_custom_call.1} parent=1 // pred_check
      _
    $region63: #{tpu_custom_call.1} parent=1 // pred_check_branch
      %134 = sbr.rel (0) target = $region65
    $region64: #{tpu_custom_call.1} parent=1 // pred_region
      _
    $region65: #{tpu_custom_call.1} parent=1 // pred_fallthru
      _
    // Predicated region
    $region66: #{tpu_custom_call.1} parent=1 // pred_check
      _
    $region67: #{tpu_custom_call.1} parent=1 // pred_check_branch
      %136 = sbr.rel (0) target = $region69
    $region68: #{tpu_custom_call.1} parent=1 // pred_region
      %s138 = ssub.s32 4096, 4096
      %139 = vsyncadd [#allocation16], %s138
      %s140 = sshll.u32 [#allocation17], 4
      %s141 = int_to_ptr.vmem [resolvable:$true] %s140
      %146 = dma.hbm_to_vmem [thread:$0]  %s16, 4096, %s141, [#allocation16], 256, 256, 16
    $region69: #{tpu_custom_call.1} parent=1 // pred_fallthru
      _
    // Predicated region
    $region70: #{tpu_custom_call.1} parent=1 // pred_check
      _
    $region71: #{tpu_custom_call.1} parent=1 // pred_check_branch
      %148 = sbr.rel (0) target = $region73
    $region72: #{tpu_custom_call.1} parent=1 // pred_region
      _
    $region73: #{tpu_custom_call.1} parent=1 // pred_fallthru
      _
    // Predicated region
    $region74: #{tpu_custom_call.1} parent=1 // pred_check
      _
    $region75: #{tpu_custom_call.1} parent=1 // pred_check_branch
      %150 = sbr.rel (0) target = $region77
    $region76: #{tpu_custom_call.1} parent=1 // pred_region
      %151 = dma.done [#allocation4], 256
    $region77: #{tpu_custom_call.1} parent=1 // pred_fallthru
      _
    // Predicated region
    $region78: #{tpu_custom_call.1} parent=1 // pred_check
      _
    $region79: #{tpu_custom_call.1} parent=1 // pred_check_branch
      %153 = sbr.rel (0) target = $region81
    $region80: #{tpu_custom_call.1} parent=1 // pred_region
      %154 = dma.done [#allocation7], 32
    $region81: #{tpu_custom_call.1} parent=1 // pred_fallthru
      _
    // Predicated region
    $region82: #{tpu_custom_call.1} parent=1 // pred_check
      _
    $region83: #{tpu_custom_call.1} parent=1 // pred_check_branch
      %156 = sbr.rel (0) target = $region85
    $region84: #{tpu_custom_call.1} parent=1 // pred_region
      %157 = dma.done [#allocation7], 16
    $region85: #{tpu_custom_call.1} parent=1 // pred_fallthru
      _
    // Predicated region
    $region86: #{tpu_custom_call.1} parent=1 // pred_check
      _
    $region87: #{tpu_custom_call.1} parent=1 // pred_check_branch
      %159 = sbr.rel (0) target = $region89
    $region88: #{tpu_custom_call.1} parent=1 // pred_region
      %160 = dma.done [#allocation10], 16
    $region89: #{tpu_custom_call.1} parent=1 // pred_fallthru
      _
    // Predicated region
    $region90: #{tpu_custom_call.1} parent=1 // pred_check
      _
    $region91: #{tpu_custom_call.1} parent=1 // pred_check_branch
      %162 = sbr.rel (0) target = $region93
    $region92: #{tpu_custom_call.1} parent=1 // pred_region
      %163 = dma.done [#allocation10], 6144
    $region93: #{tpu_custom_call.1} parent=1 // pred_fallthru
      _
    // Predicated region
    $region94: #{tpu_custom_call.1} parent=1 // pred_check
      _
    $region95: #{tpu_custom_call.1} parent=1 // pred_check_branch
      %165 = sbr.rel (0) target = $region97
    $region96: #{tpu_custom_call.1} parent=1 // pred_region
      %166 = dma.done [#allocation13], 2048
    $region97: #{tpu_custom_call.1} parent=1 // pred_fallthru
      _
    // Predicated region
    $region98: #{tpu_custom_call.1} parent=1 // pred_check
      _
    $region99: #{tpu_custom_call.1} parent=1 // pred_check_branch
      %168 = sbr.rel (0) target = $region101
    $region100: #{tpu_custom_call.1} parent=1 // pred_region
      %169 = dma.done [#allocation13], 8192
    $region101: #{tpu_custom_call.1} parent=1 // pred_fallthru
      _
    // Predicated region
    $region102: #{tpu_custom_call.1} parent=1 // pred_check
      _
    $region103: #{tpu_custom_call.1} parent=1 // pred_check_branch
      %171 = sbr.rel (0) target = $region105
    $region104: #{tpu_custom_call.1} parent=1 // pred_region
      %172 = dma.done [#allocation16], 8192
    $region105: #{tpu_custom_call.1} parent=1 // pred_fallthru
      _
    // Predicated region
    $region106: #{tpu_custom_call.1} parent=1 // pred_check
      _
    $region107: #{tpu_custom_call.1} parent=1 // pred_check_branch
      %174 = sbr.rel (0) target = $region109
    $region108: #{tpu_custom_call.1} parent=1 // pred_region
      %175 = dma.done [#allocation16], 4096
    $region109: #{tpu_custom_call.1} parent=1 // pred_fallthru
      _
    %v177 = vld [vmem:[#allocation3] sm:$0xff]
    %v178 = vld [vmem:[#allocation3 + $0x8] sm:$0xff]
    %v179 = vld [vmem:[#allocation8] sm:$0x1]
    %v180 = vld [vmem:[#allocation9] sm:$0x1]
    %181 = vadd.xlane.f32.xlu0 %v177
    %v182 = vpop.xlane.xlu0 %181
    %183 = vadd.xlane.f32.xlu0 %v178
    %v184 = vpop.xlane.xlu0 %183
    %v185 = vrcp.pop 128.0
    %v186 = vmul.f32 %v182, %v185
    %v187 = vmul.f32 %v184, %v185
    %v188 = vsub.f32 %v177, %v186
    %v189 = vsub.f32 %v178, %v187
    %v190 = vmul.f32 %v188, %v188
    %v191 = vmul.f32 %v189, %v189
    %192 = vadd.xlane.f32.xlu0 %v190
    %v193 = vpop.xlane.xlu0 %192
    %194 = vadd.xlane.f32.xlu0 %v191
    %v195 = vpop.xlane.xlu0 %194
    %v196 = vmul.f32 %v193, %v185
    %v197 = vmul.f32 %v195, %v185
    %v198 = vadd.f32 %v196, 1e-12
    %v199 = vadd.f32 %v197, 1e-12
    %v200 = vrsqrt.pop %v198
    %v201 = vrsqrt.pop %v199
    %v202 = vmul.f32 %v188, %v200
    %v203 = vmul.f32 %v189, %v201
    %v205 = vlaneseq
    %v206 = vshrl.u32 %v205, 7
    %v207 = vsub.s32 0, %v206
    %v208 = vrot.slane %v179, %v207
    %v210 = vmul.f32 %v202, %v208
    %v211 = vmul.f32 %v203, %v208
    %v213 = vlaneseq
    %v214 = vshrl.u32 %v213, 7
    %v215 = vsub.s32 0, %v214
    %v216 = vrot.slane %v180, %v215
    %v218 = vadd.f32 %v210, %v216
    %v219 = vadd.f32 %v211, %v216
    %v220 = vld [vmem:[#allocation6] sm:$0x3]
    %v223 = vunpack.c.l.s4 1966171168
    %v224 = vunpack.c.0.s8 %v223
    %v225 = vlaneseq
    %v226 = vshrl.u32 %v225, 7
    %v227 = vsub.s32 %v224, %v226
    %v228 = vrot.slane %v220, %v227
    %v229 = vcombine.high %v228, %v228
    %v231 = vunpack.c.l.s4 1966171168
    %v232 = vunpack.c.0.s8 %v231
    %v233 = vlaneseq
    %v234 = vshrl.u32 %v233, 7
    %v235 = vsub.s32 %v232, %v234
    %v236 = vrot.slane %v228, %v235
    %v238 = vunpack.c.l.s4 1966171168
    %v239 = vunpack.c.0.s8 %v238
    %v240 = vlaneseq
    %v241 = vshrl.u32 %v240, 7
    %v242 = vsub.s32 %v239, %v241
    %v243 = vrot.slane %v229, %v242
    %v244 = vpack.c.bf16 %v219, %v218
    %v245 = vld [vmem:[#allocation11] sm:$0xff]
    %v246 = vld [vmem:[#allocation11 + $0x8] sm:$0xf]
    %v247 = vld [vmem:[#allocation11 + $0xc] sm:$0xff]
    %v248 = vld [vmem:[#allocation11 + $0x14] sm:$0xf]
    %v249 = vld [vmem:[#allocation11 + $0x18] sm:$0xff]
    %v250 = vld [vmem:[#allocation11 + $0x20] sm:$0xf]
    %v251 = vld [vmem:[#allocation11 + $0x24] sm:$0xff]
    %v252 = vld [vmem:[#allocation11 + $0x2c] sm:$0xf]
    %v253 = vld [vmem:[#allocation11 + $0x30] sm:$0xff]
    %v254 = vld [vmem:[#allocation11 + $0x38] sm:$0xf]
    %v255 = vld [vmem:[#allocation11 + $0x3c] sm:$0xff]
    %v256 = vld [vmem:[#allocation11 + $0x44] sm:$0xf]
    %v257 = vld [vmem:[#allocation11 + $0x48] sm:$0xff]
    %v258 = vld [vmem:[#allocation11 + $0x50] sm:$0xf]
    %v259 = vld [vmem:[#allocation11 + $0x54] sm:$0xff]
    %v260 = vld [vmem:[#allocation11 + $0x5c] sm:$0xf]
    %v261 = vld [vmem:[#allocation11 + $0x60] sm:$0xff]
    %v262 = vld [vmem:[#allocation11 + $0x68] sm:$0xf]
    %v263 = vld [vmem:[#allocation11 + $0x6c] sm:$0xff]
    %v264 = vld [vmem:[#allocation11 + $0x74] sm:$0xf]
    %v265 = vld [vmem:[#allocation11 + $0x78] sm:$0xff]
    %v266 = vld [vmem:[#allocation11 + $0x80] sm:$0xf]
    %v267 = vld [vmem:[#allocation11 + $0x84] sm:$0xff]
    %v268 = vld [vmem:[#allocation11 + $0x8c] sm:$0xf]
    %v269 = vld [vmem:[#allocation11 + $0x90] sm:$0xff]
    %v270 = vld [vmem:[#allocation11 + $0x98] sm:$0xf]
    %v271 = vld [vmem:[#allocation11 + $0x9c] sm:$0xff]
    %v272 = vld [vmem:[#allocation11 + $0xa4] sm:$0xf]
    %v273 = vld [vmem:[#allocation11 + $0xa8] sm:$0xff]
    %v274 = vld [vmem:[#allocation11 + $0xb0] sm:$0xf]
    %v275 = vld [vmem:[#allocation11 + $0xb4] sm:$0xff]
    %v276 = vld [vmem:[#allocation11 + $0xbc] sm:$0xf]
    %v277 = vld [vmem:[%s5] sm:$0x7]
    %v279 = vlaneseq
    %v280 = vshrl.u32 %v279, 7
    %v281 = vsub.s32 0, %v280
    %v282 = vrot.slane %v277, %v281
    %v283 = vlaneseq
    %v284 = vshrl.u32 %v283, 7
    %v285 = vsub.s32 1, %v284
    %v286 = vrot.slane %v277, %v285
    %v287 = vlaneseq
    %v288 = vshrl.u32 %v287, 7
    %v289 = vsub.s32 2, %v288
    %v290 = vrot.slane %v277, %v289
    %v326 = vunpack.c.l.b16 %v245
    %v327 = vunpack.c.h.b16 %v245
    %v328 = vunpack.c.l.b16 %v246
    %v329 = vunpack.c.l.b16 %v247
    %v330 = vunpack.c.h.b16 %v247
    %v331 = vunpack.c.l.b16 %v248
    %v332 = vunpack.c.l.b16 %v249
    %v333 = vunpack.c.h.b16 %v249
    %v334 = vunpack.c.l.b16 %v250
    %v335 = vunpack.c.l.b16 %v251
    %v336 = vunpack.c.h.b16 %v251
    %v337 = vunpack.c.l.b16 %v252
    %v338 = vunpack.c.l.b16 %v253
    %v339 = vunpack.c.h.b16 %v253
    %v340 = vunpack.c.l.b16 %v254
    %v341 = vunpack.c.l.b16 %v255
    %v342 = vunpack.c.h.b16 %v255
    %v343 = vunpack.c.l.b16 %v256
    %v344 = vunpack.c.l.b16 %v257
    %v345 = vunpack.c.h.b16 %v257
    %v346 = vunpack.c.l.b16 %v258
    %v347 = vunpack.c.l.b16 %v259
    %v348 = vunpack.c.h.b16 %v259
    %v349 = vunpack.c.l.b16 %v260
    %v350 = vunpack.c.l.b16 %v261
    %v351 = vunpack.c.h.b16 %v261
    %v352 = vunpack.c.l.b16 %v262
    %v353 = vunpack.c.l.b16 %v263
    %v354 = vunpack.c.h.b16 %v263
    %v355 = vunpack.c.l.b16 %v264
    %v356 = vunpack.c.l.b16 %v265
    %v357 = vunpack.c.h.b16 %v265
    %v358 = vunpack.c.l.b16 %v266
    %v359 = vunpack.c.l.b16 %v267
    %v360 = vunpack.c.h.b16 %v267
    %v361 = vunpack.c.l.b16 %v268
    %v362 = vunpack.c.l.b16 %v269
    %v363 = vunpack.c.h.b16 %v269
    %v364 = vunpack.c.l.b16 %v270
    %v365 = vunpack.c.l.b16 %v271
    %v366 = vunpack.c.h.b16 %v271
    %v367 = vunpack.c.l.b16 %v272
    %v368 = vunpack.c.l.b16 %v273
    %v369 = vunpack.c.h.b16 %v273
    %v370 = vunpack.c.l.b16 %v274
    %v371 = vunpack.c.l.b16 %v275
    %v372 = vunpack.c.h.b16 %v275
    %v373 = vunpack.c.l.b16 %v276
    %v374 = vpack.c.b16 %v329, %v326
    %v375 = vpack.c.b16 %v330, %v327
    %v376 = vpack.c.b16 %v331, %v328
    %v377 = vpack.c.b16 %v335, %v332
    %v378 = vpack.c.b16 %v336, %v333
    %v379 = vpack.c.b16 %v337, %v334
    %v380 = vpack.c.b16 %v341, %v338
    %v381 = vpack.c.b16 %v342, %v339
    %v382 = vpack.c.b16 %v343, %v340
    %v383 = vpack.c.b16 %v347, %v344
    %v384 = vpack.c.b16 %v348, %v345
    %v385 = vpack.c.b16 %v349, %v346
    %v386 = vpack.c.b16 %v353, %v350
    %v387 = vpack.c.b16 %v354, %v351
    %v388 = vpack.c.b16 %v355, %v352
    %v389 = vpack.c.b16 %v359, %v356
    %v390 = vpack.c.b16 %v360, %v357
    %v391 = vpack.c.b16 %v361, %v358
    %v392 = vpack.c.b16 %v365, %v362
    %v393 = vpack.c.b16 %v366, %v363
    %v394 = vpack.c.b16 %v367, %v364
    %v395 = vpack.c.b16 %v371, %v368
    %v396 = vpack.c.b16 %v372, %v369
    %v397 = vpack.c.b16 %v373, %v370
    %422 = vmatprep.subr.bf16.mxu0 %v375
    %423 = vmatpush1.bf16.msra.mxu0 %v374
    %424 = vmatprep.subr.bf16.mxu0 %v378
    %425 = vmatpush1.bf16.msra.mxu0 %v377
    %426 = vmatprep.subr.bf16.mxu0 %v381
    %427 = vmatpush1.bf16.msra.mxu0 %v380
    %428 = vmatprep.subr.bf16.mxu0 %v384
    %429 = vmatpush1.bf16.msra.mxu0 %v383
    %430 = vmatprep.subr.bf16.mxu0 %v387
    %431 = vmatpush1.bf16.msra.mxu0 %v386
    %432 = vmatprep.subr.bf16.mxu0 %v390
    %433 = vmatpush1.bf16.msra.mxu0 %v389
    %434 = vmatprep.subr.bf16.mxu0 %v393
    %435 = vmatpush1.bf16.msra.mxu0 %v392
    %436 = vmatprep.subr.bf16.mxu0 %v396
    %437 = vmatpush1.bf16.msra.mxu0 %v395
    %438 = vmatprep.subr.bf16.mxu0 0
    %439 = vmatpush1.bf16.msra.mxu0 0
    %440 = vmatprep.subr.bf16.mxu0 0
    %441 = vmatpush1.bf16.msra.mxu0 0
    %442 = vmatprep.subr.bf16.mxu0 0
    %443 = vmatpush1.bf16.msra.mxu0 0
    %444 = vmatprep.subr.bf16.mxu0 0
    %445 = vmatpush1.bf16.msra.mxu0 0
    %446 = vmatprep.subr.bf16.mxu0 0
    %447 = vmatpush1.bf16.msra.mxu0 0
    %448 = vmatprep.subr.bf16.mxu0 0
    %449 = vmatpush1.bf16.msra.mxu0 0
    %450 = vmatprep.subr.bf16.mxu0 0
    %451 = vmatpush1.bf16.msra.mxu0 0
    %452 = vmatprep.subr.bf16.mxu0 0
    %453 = vmatpush1.bf16.msra.mxu0 0
    %454 = vmatprep.mubr.bf16.mxu0 0
    %455 = vmatmul.mubr.bf16.gmra.mrb[0].mxu0 %v244
    %v456 = vpop.f32.mrb[0].mxu0
    %v457 = vadd.f32 %v282, %v456
    %v458 = vpop.f32.mrb[0].mxu0
    %v459 = vadd.f32 %v286, %v458
    %v460 = vpop.f32.mrb[0].mxu0
    %v461 = vadd.f32 %v282, %v460
    %v462 = vpop.f32.mrb[0].mxu0
    %v463 = vadd.f32 %v286, %v462
    %464 = vdwg.mxu0
    %465 = vmatprep.subr.bf16.mxu0 0
    %466 = vmatpush1.bf16.msra.mxu0 %v376
    %467 = vmatprep.subr.bf16.mxu0 0
    %468 = vmatpush1.bf16.msra.mxu0 %v379
    %469 = vmatprep.subr.bf16.mxu0 0
    %470 = vmatpush1.bf16.msra.mxu0 %v382
    %471 = vmatprep.subr.bf16.mxu0 0
    %472 = vmatpush1.bf16.msra.mxu0 %v385
    %473 = vmatprep.subr.bf16.mxu0 0
    %474 = vmatpush1.bf16.msra.mxu0 %v388
    %475 = vmatprep.subr.bf16.mxu0 0
    %476 = vmatpush1.bf16.msra.mxu0 %v391
    %477 = vmatprep.subr.bf16.mxu0 0
    %478 = vmatpush1.bf16.msra.mxu0 %v394
    %479 = vmatprep.subr.bf16.mxu0 0
    %480 = vmatpush1.bf16.msra.mxu0 %v397
    %481 = vmatprep.subr.bf16.mxu0 0
    %482 = vmatpush1.bf16.msra.mxu0 0
    %483 = vmatprep.subr.bf16.mxu0 0
    %484 = vmatpush1.bf16.msra.mxu0 0
    %485 = vmatprep.subr.bf16.mxu0 0
    %486 = vmatpush1.bf16.msra.mxu0 0
    %487 = vmatprep.subr.bf16.mxu0 0
    %488 = vmatpush1.bf16.msra.mxu0 0
    %489 = vmatprep.subr.bf16.mxu0 0
    %490 = vmatpush1.bf16.msra.mxu0 0
    %491 = vmatprep.subr.bf16.mxu0 0
    %492 = vmatpush1.bf16.msra.mxu0 0
    %493 = vmatprep.subr.bf16.mxu0 0
    %494 = vmatpush1.bf16.msra.mxu0 0
    %495 = vmatprep.subr.bf16.mxu0 0
    %496 = vmatpush1.bf16.msra.mxu0 0
    %497 = vmatprep.mubr.bf16.mxu0 0
    %498 = vmatmul.mubr.bf16.gmra.mrb[0].mxu0 %v244
    %v499 = vpop.f32.mrb[0].mxu0
    %v500 = vadd.f32 %v290, %v499
    %v501 = vpop.f32.mrb[0].mxu0
    %v502 = vpop.f32.mrb[0].mxu0
    %v503 = vadd.f32 %v290, %v502
    %v504 = vpop.f32.mrb[0].mxu0
    %505 = vdwg.mxu0
    %v506 = vpack.c.bf16 %v457, %v457
    %v507 = vpack.c.bf16 %v461, %v461
    %v508 = vpack.c.bf16 %v459, %v459
    %v509 = vpack.c.bf16 %v463, %v463
    %v510 = vpack.c.bf16 %v500, %v500
    %v511 = vpack.c.bf16 %v503, %v503
    %vm512 = vcmask 261120
    %v514 = vsel %vm512, %v506, 0
    %v517 = vsel %vm512, %v508, 0
    %519 = vmatprep.subr.bf16.mxu0 0
    %520 = vmatpush1.bf16.xpose.msra.mxu0 %v517
    %521 = vmatprep.subr.bf16.mxu0 0
    %522 = vmatpush1.bf16.xpose.msra.mxu0 0
    %523 = vmatprep.subr.bf16.mxu0 0
    %524 = vmatpush1.bf16.xpose.msra.mxu0 0
    %525 = vmatprep.subr.bf16.mxu0 0
    %526 = vmatpush1.bf16.xpose.msra.mxu0 0
    %527 = vmatprep.subr.bf16.mxu0 0
    %528 = vmatpush1.bf16.xpose.msra.mxu0 0
    %529 = vmatprep.subr.bf16.mxu0 0
    %530 = vmatpush1.bf16.xpose.msra.mxu0 0
    %531 = vmatprep.subr.bf16.mxu0 0
    %532 = vmatpush1.bf16.xpose.msra.mxu0 0
    %533 = vmatprep.subr.bf16.mxu0 0
    %534 = vmatpush1.bf16.xpose.msra.mxu0 0
    %535 = vmatprep.subr.bf16.mxu0 0
    %536 = vmatpush1.bf16.xpose.msra.mxu0 0
    %537 = vmatprep.subr.bf16.mxu0 0
    %538 = vmatpush1.bf16.xpose.msra.mxu0 0
    %539 = vmatprep.subr.bf16.mxu0 0
    %540 = vmatpush1.bf16.xpose.msra.mxu0 0
    %541 = vmatprep.subr.bf16.mxu0 0
    %542 = vmatpush1.bf16.xpose.msra.mxu0 0
    %543 = vmatprep.subr.bf16.mxu0 0
    %544 = vmatpush1.bf16.xpose.msra.mxu0 0
    %545 = vmatprep.subr.bf16.mxu0 0
    %546 = vmatpush1.bf16.xpose.msra.mxu0 0
    %547 = vmatprep.subr.bf16.mxu0 0
    %548 = vmatpush1.bf16.xpose.msra.mxu0 0
    %549 = vmatprep.subr.bf16.mxu0 0
    %550 = vmatpush1.bf16.xpose.msra.mxu0 0
    %551 = vmatprep.mubr.bf16.mxu0 0
    %552 = vmatmul.mubr.bf16.gmra.mrb[0].mxu0 %v514
    %v553 = vpop.f32.mrb[0].mxu0
    %v554 = vadd.f32 0.0, %v553
    %v555 = vpop.f32.mrb[0].mxu0
    %v556 = vpop.f32.mrb[0].mxu0
    %v557 = vpop.f32.mrb[0].mxu0
    %558 = vdwg.mxu0
    %v560 = vsel %vm512, %v507, 0
    %v563 = vsel %vm512, %v509, 0
    %565 = vmatprep.subr.bf16.mxu0 0
    %566 = vmatpush1.bf16.xpose.msra.mxu0 %v563
    %567 = vmatprep.subr.bf16.mxu0 0
    %568 = vmatpush1.bf16.xpose.msra.mxu0 0
    %569 = vmatprep.subr.bf16.mxu0 0
    %570 = vmatpush1.bf16.xpose.msra.mxu0 0
    %571 = vmatprep.subr.bf16.mxu0 0
    %572 = vmatpush1.bf16.xpose.msra.mxu0 0
    %573 = vmatprep.subr.bf16.mxu0 0
    %574 = vmatpush1.bf16.xpose.msra.mxu0 0
    %575 = vmatprep.subr.bf16.mxu0 0
    %576 = vmatpush1.bf16.xpose.msra.mxu0 0
    %577 = vmatprep.subr.bf16.mxu0 0
    %578 = vmatpush1.bf16.xpose.msra.mxu0 0
    %579 = vmatprep.subr.bf16.mxu0 0
    %580 = vmatpush1.bf16.xpose.msra.mxu0 0
    %581 = vmatprep.subr.bf16.mxu0 0
    %582 = vmatpush1.bf16.xpose.msra.mxu0 0
    %583 = vmatprep.subr.bf16.mxu0 0
    %584 = vmatpush1.bf16.xpose.msra.mxu0 0
    %585 = vmatprep.subr.bf16.mxu0 0
    %586 = vmatpush1.bf16.xpose.msra.mxu0 0
    %587 = vmatprep.subr.bf16.mxu0 0
    %588 = vmatpush1.bf16.xpose.msra.mxu0 0
    %589 = vmatprep.subr.bf16.mxu0 0
    %590 = vmatpush1.bf16.xpose.msra.mxu0 0
    %591 = vmatprep.subr.bf16.mxu0 0
    %592 = vmatpush1.bf16.xpose.msra.mxu0 0
    %593 = vmatprep.subr.bf16.mxu0 0
    %594 = vmatpush1.bf16.xpose.msra.mxu0 0
    %595 = vmatprep.subr.bf16.mxu0 0
    %596 = vmatpush1.bf16.xpose.msra.mxu0 0
    %597 = vmatprep.mubr.bf16.mxu0 0
    %598 = vmatmul.mubr.bf16.gmra.mrb[0].mxu0 %v560
    %v599 = vpop.f32.mrb[0].mxu0
    %v600 = vadd.f32 0.0, %v599
    %v601 = vpop.f32.mrb[0].mxu0
    %v602 = vpop.f32.mrb[0].mxu0
    %v603 = vpop.f32.mrb[0].mxu0
    %604 = vdwg.mxu0
    %v605 = vmul.f32 %v554, 0.17677669
    %v606 = vmul.f32 %v600, 0.17677669
    %v607 = vlaneseq
    %v608 = vshrl.u32 %v607, 7
    %v609 = vsub.s32 0, %v608
    %v610 = vrot.slane %v236, %v609
    %v611 = vlaneseq
    %v612 = vshrl.u32 %v611, 7
    %v613 = vsub.s32 0, %v612
    %v614 = vrot.slane %v243, %v613
    %v617 = vadd.f32 %v605, %v610
    %v618 = vadd.f32 %v606, %v614
    %vm619 = vcmask 64512
    %v620 = vsel %vm619, %v617, -inf
    %621 = vmax.xlane.f32.xlu0 %v620
    %v622 = vpop.xlane.xlu0 %621
    %v623 = vsel %vm619, %v618, -inf
    %624 = vmax.xlane.f32.xlu0 %v623
    %v625 = vpop.xlane.xlu0 %624
    %v626 = vsub.f32 %v617, %v622
    %v627 = vsub.f32 %v618, %v625
    %v628 = vmul.f32 %v626, 1.442695
    %v629 = vpow.pop %v628
    %v630 = vmul.f32 %v627, 1.442695
    %v631 = vpow.pop %v630
    %v632 = vsel %vm619, %v629, 0.0
    %633 = vadd.xlane.f32.xlu0 %v632
    %v634 = vpop.xlane.xlu0 %633
    %v635 = vsel %vm619, %v631, 0.0
    %636 = vadd.xlane.f32.xlu0 %v635
    %v637 = vpop.xlane.xlu0 %636
    %v638 = vrcp.pop %v634
    %v639 = vrcp.pop %v637
    %v640 = vmul.f32 %v629, %v638
    %v641 = vmul.f32 %v631, %v639
    %v642 = vpack.c.bf16 %v640, %v640
    %v643 = vpack.c.bf16 %v641, %v641
    %v645 = vsel %vm619, %v642, 0
    %vm647 = vcmask 1043456
    %v649 = vsel %vm647, %v510, 0
    %651 = vmatprep.subr.bf16.mxu0 0
    %652 = vmatpush1.bf16.msra.mxu0 %v649
    %653 = vmatprep.subr.bf16.mxu0 0
    %654 = vmatpush1.bf16.msra.mxu0 0
    %655 = vmatprep.subr.bf16.mxu0 0
    %656 = vmatpush1.bf16.msra.mxu0 0
    %657 = vmatprep.subr.bf16.mxu0 0
    %658 = vmatpush1.bf16.msra.mxu0 0
    %659 = vmatprep.subr.bf16.mxu0 0
    %660 = vmatpush1.bf16.msra.mxu0 0
    %661 = vmatprep.subr.bf16.mxu0 0
    %662 = vmatpush1.bf16.msra.mxu0 0
    %663 = vmatprep.subr.bf16.mxu0 0
    %664 = vmatpush1.bf16.msra.mxu0 0
    %665 = vmatprep.subr.bf16.mxu0 0
    %666 = vmatpush1.bf16.msra.mxu0 0
    %667 = vmatprep.subr.bf16.mxu0 0
    %668 = vmatpush1.bf16.msra.mxu0 0
    %669 = vmatprep.subr.bf16.mxu0 0
    %670 = vmatpush1.bf16.msra.mxu0 0
    %671 = vmatprep.subr.bf16.mxu0 0
    %672 = vmatpush1.bf16.msra.mxu0 0
    %673 = vmatprep.subr.bf16.mxu0 0
    %674 = vmatpush1.bf16.msra.mxu0 0
    %675 = vmatprep.subr.bf16.mxu0 0
    %676 = vmatpush1.bf16.msra.mxu0 0
    %677 = vmatprep.subr.bf16.mxu0 0
    %678 = vmatpush1.bf16.msra.mxu0 0
    %679 = vmatprep.subr.bf16.mxu0 0
    %680 = vmatpush1.bf16.msra.mxu0 0
    %681 = vmatprep.subr.bf16.mxu0 0
    %682 = vmatpush1.bf16.msra.mxu0 0
    %683 = vmatprep.mubr.bf16.mxu0 0
    %684 = vmatmul.mubr.bf16.gmra.mrb[0].mxu0 %v645
    %v685 = vpop.f32.mrb[0].mxu0
    %v686 = vadd.f32 0.0, %v685
    %v687 = vpop.f32.mrb[0].mxu0
    %v688 = vpop.f32.mrb[0].mxu0
    %v689 = vpop.f32.mrb[0].mxu0
    %690 = vdwg.mxu0
    %v692 = vsel %vm619, %v643, 0
    %v695 = vsel %vm647, %v511, 0
    %697 = vmatprep.subr.bf16.mxu0 0
    %698 = vmatpush1.bf16.msra.mxu0 %v695
    %699 = vmatprep.subr.bf16.mxu0 0
    %700 = vmatpush1.bf16.msra.mxu0 0
    %701 = vmatprep.subr.bf16.mxu0 0
    %702 = vmatpush1.bf16.msra.mxu0 0
    %703 = vmatprep.subr.bf16.mxu0 0
    %704 = vmatpush1.bf16.msra.mxu0 0
    %705 = vmatprep.subr.bf16.mxu0 0
    %706 = vmatpush1.bf16.msra.mxu0 0
    %707 = vmatprep.subr.bf16.mxu0 0
    %708 = vmatpush1.bf16.msra.mxu0 0
    %709 = vmatprep.subr.bf16.mxu0 0
    %710 = vmatpush1.bf16.msra.mxu0 0
    %711 = vmatprep.subr.bf16.mxu0 0
    %712 = vmatpush1.bf16.msra.mxu0 0
    %713 = vmatprep.subr.bf16.mxu0 0
    %714 = vmatpush1.bf16.msra.mxu0 0
    %715 = vmatprep.subr.bf16.mxu0 0
    %716 = vmatpush1.bf16.msra.mxu0 0
    %717 = vmatprep.subr.bf16.mxu0 0
    %718 = vmatpush1.bf16.msra.mxu0 0
    %719 = vmatprep.subr.bf16.mxu0 0
    %720 = vmatpush1.bf16.msra.mxu0 0
    %721 = vmatprep.subr.bf16.mxu0 0
    %722 = vmatpush1.bf16.msra.mxu0 0
    %723 = vmatprep.subr.bf16.mxu0 0
    %724 = vmatpush1.bf16.msra.mxu0 0
    %725 = vmatprep.subr.bf16.mxu0 0
    %726 = vmatpush1.bf16.msra.mxu0 0
    %727 = vmatprep.subr.bf16.mxu0 0
    %728 = vmatpush1.bf16.msra.mxu0 0
    %729 = vmatprep.mubr.bf16.mxu0 0
    %730 = vmatmul.mubr.bf16.gmra.mrb[0].mxu0 %v692
    %v731 = vpop.f32.mrb[0].mxu0
    %v732 = vadd.f32 0.0, %v731
    %v733 = vpop.f32.mrb[0].mxu0
    %v734 = vpop.f32.mrb[0].mxu0
    %v735 = vpop.f32.mrb[0].mxu0
    %736 = vdwg.mxu0
    %737 = vst.msk [vmem:[#allocation2] sm:$0xff] %vm512, %v686
    %738 = vst.msk [vmem:[#allocation2 + $0x8] sm:$0xff] %vm512, %v732
    %740 = vrot.lane.b32.xlu0 %v506, 96
    %v741 = vpop.permute.xlu0 %740
    %743 = vrot.lane.b32.xlu0 %v508, 96
    %v744 = vpop.permute.xlu0 %743
    %v746 = vsel %vm512, %v741, 0
    %v749 = vsel %vm512, %v744, 0
    %751 = vmatprep.subr.bf16.mxu0 0
    %752 = vmatpush1.bf16.xpose.msra.mxu0 %v749
    %753 = vmatprep.subr.bf16.mxu0 0
    %754 = vmatpush1.bf16.xpose.msra.mxu0 0
    %755 = vmatprep.subr.bf16.mxu0 0
    %756 = vmatpush1.bf16.xpose.msra.mxu0 0
    %757 = vmatprep.subr.bf16.mxu0 0
    %758 = vmatpush1.bf16.xpose.msra.mxu0 0
    %759 = vmatprep.subr.bf16.mxu0 0
    %760 = vmatpush1.bf16.xpose.msra.mxu0 0
    %761 = vmatprep.subr.bf16.mxu0 0
    %762 = vmatpush1.bf16.xpose.msra.mxu0 0
    %763 = vmatprep.subr.bf16.mxu0 0
    %764 = vmatpush1.bf16.xpose.msra.mxu0 0
    %765 = vmatprep.subr.bf16.mxu0 0
    %766 = vmatpush1.bf16.xpose.msra.mxu0 0
    %767 = vmatprep.subr.bf16.mxu0 0
    %768 = vmatpush1.bf16.xpose.msra.mxu0 0
    %769 = vmatprep.subr.bf16.mxu0 0
    %770 = vmatpush1.bf16.xpose.msra.mxu0 0
    %771 = vmatprep.subr.bf16.mxu0 0
    %772 = vmatpush1.bf16.xpose.msra.mxu0 0
    %773 = vmatprep.subr.bf16.mxu0 0
    %774 = vmatpush1.bf16.xpose.msra.mxu0 0
    %775 = vmatprep.subr.bf16.mxu0 0
    %776 = vmatpush1.bf16.xpose.msra.mxu0 0
    %777 = vmatprep.subr.bf16.mxu0 0
    %778 = vmatpush1.bf16.xpose.msra.mxu0 0
    %779 = vmatprep.subr.bf16.mxu0 0
    %780 = vmatpush1.bf16.xpose.msra.mxu0 0
    %781 = vmatprep.subr.bf16.mxu0 0
    %782 = vmatpush1.bf16.xpose.msra.mxu0 0
    %783 = vmatprep.mubr.bf16.mxu0 0
    %784 = vmatmul.mubr.bf16.gmra.mrb[0].mxu0 %v746
    %v785 = vpop.f32.mrb[0].mxu0
    %v786 = vadd.f32 0.0, %v785
    %v787 = vpop.f32.mrb[0].mxu0
    %v788 = vpop.f32.mrb[0].mxu0
    %v789 = vpop.f32.mrb[0].mxu0
    %790 = vdwg.mxu0
    %792 = vrot.lane.b32.xlu0 %v507, 96
    %v793 = vpop.permute.xlu0 %792
    %795 = vrot.lane.b32.xlu0 %v509, 96
    %v796 = vpop.permute.xlu0 %795
    %v798 = vsel %vm512, %v793, 0
    %v801 = vsel %vm512, %v796, 0
    %803 = vmatprep.subr.bf16.mxu0 0
    %804 = vmatpush1.bf16.xpose.msra.mxu0 %v801
    %805 = vmatprep.subr.bf16.mxu0 0
    %806 = vmatpush1.bf16.xpose.msra.mxu0 0
    %807 = vmatprep.subr.bf16.mxu0 0
    %808 = vmatpush1.bf16.xpose.msra.mxu0 0
    %809 = vmatprep.subr.bf16.mxu0 0
    %810 = vmatpush1.bf16.xpose.msra.mxu0 0
    %811 = vmatprep.subr.bf16.mxu0 0
    %812 = vmatpush1.bf16.xpose.msra.mxu0 0
    %813 = vmatprep.subr.bf16.mxu0 0
    %814 = vmatpush1.bf16.xpose.msra.mxu0 0
    %815 = vmatprep.subr.bf16.mxu0 0
    %816 = vmatpush1.bf16.xpose.msra.mxu0 0
    %817 = vmatprep.subr.bf16.mxu0 0
    %818 = vmatpush1.bf16.xpose.msra.mxu0 0
    %819 = vmatprep.subr.bf16.mxu0 0
    %820 = vmatpush1.bf16.xpose.msra.mxu0 0
    %821 = vmatprep.subr.bf16.mxu0 0
    %822 = vmatpush1.bf16.xpose.msra.mxu0 0
    %823 = vmatprep.subr.bf16.mxu0 0
    %824 = vmatpush1.bf16.xpose.msra.mxu0 0
    %825 = vmatprep.subr.bf16.mxu0 0
    %826 = vmatpush1.bf16.xpose.msra.mxu0 0
    %827 = vmatprep.subr.bf16.mxu0 0
    %828 = vmatpush1.bf16.xpose.msra.mxu0 0
    %829 = vmatprep.subr.bf16.mxu0 0
    %830 = vmatpush1.bf16.xpose.msra.mxu0 0
    %831 = vmatprep.subr.bf16.mxu0 0
    %832 = vmatpush1.bf16.xpose.msra.mxu0 0
    %833 = vmatprep.subr.bf16.mxu0 0
    %834 = vmatpush1.bf16.xpose.msra.mxu0 0
    %835 = vmatprep.mubr.bf16.mxu0 0
    %836 = vmatmul.mubr.bf16.gmra.mrb[0].mxu0 %v798
    %v837 = vpop.f32.mrb[0].mxu0
    %v838 = vadd.f32 0.0, %v837
    %v839 = vpop.f32.mrb[0].mxu0
    %v840 = vpop.f32.mrb[0].mxu0
    %v841 = vpop.f32.mrb[0].mxu0
    %842 = vdwg.mxu0
    %v843 = vmul.f32 %v786, 0.17677669
    %v844 = vmul.f32 %v838, 0.17677669
    %v845 = vadd.f32 %v843, %v610
    %v846 = vadd.f32 %v844, %v614
    %v847 = vsel %vm619, %v845, -inf
    %848 = vmax.xlane.f32.xlu0 %v847
    %v849 = vpop.xlane.xlu0 %848
    %v850 = vsel %vm619, %v846, -inf
    %851 = vmax.xlane.f32.xlu0 %v850
    %v852 = vpop.xlane.xlu0 %851
    %v853 = vsub.f32 %v845, %v849
    %v854 = vsub.f32 %v846, %v852
    %v855 = vmul.f32 %v853, 1.442695
    %v856 = vpow.pop %v855
    %v857 = vmul.f32 %v854, 1.442695
    %v858 = vpow.pop %v857
    %v859 = vsel %vm619, %v856, 0.0
    %860 = vadd.xlane.f32.xlu0 %v859
    %v861 = vpop.xlane.xlu0 %860
    %v862 = vsel %vm619, %v858, 0.0
    %863 = vadd.xlane.f32.xlu0 %v862
    %v864 = vpop.xlane.xlu0 %863
    %v865 = vrcp.pop %v861
    %v866 = vrcp.pop %v864
    %v867 = vmul.f32 %v856, %v865
    %v868 = vmul.f32 %v858, %v866
    %v869 = vpack.c.bf16 %v867, %v867
    %v870 = vpack.c.bf16 %v868, %v868
    %872 = vrot.lane.b32.xlu0 %v510, 96
    %v873 = vpop.permute.xlu0 %872
    %v875 = vsel %vm619, %v869, 0
    %v878 = vsel %vm647, %v873, 0
    %880 = vmatprep.subr.bf16.mxu0 0
    %881 = vmatpush1.bf16.msra.mxu0 %v878
    %882 = vmatprep.subr.bf16.mxu0 0
    %883 = vmatpush1.bf16.msra.mxu0 0
    %884 = vmatprep.subr.bf16.mxu0 0
    %885 = vmatpush1.bf16.msra.mxu0 0
    %886 = vmatprep.subr.bf16.mxu0 0
    %887 = vmatpush1.bf16.msra.mxu0 0
    %888 = vmatprep.subr.bf16.mxu0 0
    %889 = vmatpush1.bf16.msra.mxu0 0
    %890 = vmatprep.subr.bf16.mxu0 0
    %891 = vmatpush1.bf16.msra.mxu0 0
    %892 = vmatprep.subr.bf16.mxu0 0
    %893 = vmatpush1.bf16.msra.mxu0 0
    %894 = vmatprep.subr.bf16.mxu0 0
    %895 = vmatpush1.bf16.msra.mxu0 0
    %896 = vmatprep.subr.bf16.mxu0 0
    %897 = vmatpush1.bf16.msra.mxu0 0
    %898 = vmatprep.subr.bf16.mxu0 0
    %899 = vmatpush1.bf16.msra.mxu0 0
    %900 = vmatprep.subr.bf16.mxu0 0
    %901 = vmatpush1.bf16.msra.mxu0 0
    %902 = vmatprep.subr.bf16.mxu0 0
    %903 = vmatpush1.bf16.msra.mxu0 0
    %904 = vmatprep.subr.bf16.mxu0 0
    %905 = vmatpush1.bf16.msra.mxu0 0
    %906 = vmatprep.subr.bf16.mxu0 0
    %907 = vmatpush1.bf16.msra.mxu0 0
    %908 = vmatprep.subr.bf16.mxu0 0
    %909 = vmatpush1.bf16.msra.mxu0 0
    %910 = vmatprep.subr.bf16.mxu0 0
    %911 = vmatpush1.bf16.msra.mxu0 0
    %912 = vmatprep.mubr.bf16.mxu0 0
    %913 = vmatmul.mubr.bf16.gmra.mrb[0].mxu0 %v875
    %v914 = vpop.f32.mrb[0].mxu0
    %v915 = vadd.f32 0.0, %v914
    %v916 = vpop.f32.mrb[0].mxu0
    %v917 = vpop.f32.mrb[0].mxu0
    %v918 = vpop.f32.mrb[0].mxu0
    %919 = vdwg.mxu0
    %921 = vrot.lane.b32.xlu0 %v511, 96
    %v922 = vpop.permute.xlu0 %921
    %v924 = vsel %vm619, %v870, 0
    %v927 = vsel %vm647, %v922, 0
    %929 = vmatprep.subr.bf16.mxu0 0
    %930 = vmatpush1.bf16.msra.mxu0 %v927
    %931 = vmatprep.subr.bf16.mxu0 0
    %932 = vmatpush1.bf16.msra.mxu0 0
    %933 = vmatprep.subr.bf16.mxu0 0
    %934 = vmatpush1.bf16.msra.mxu0 0
    %935 = vmatprep.subr.bf16.mxu0 0
    %936 = vmatpush1.bf16.msra.mxu0 0
    %937 = vmatprep.subr.bf16.mxu0 0
    %938 = vmatpush1.bf16.msra.mxu0 0
    %939 = vmatprep.subr.bf16.mxu0 0
    %940 = vmatpush1.bf16.msra.mxu0 0
    %941 = vmatprep.subr.bf16.mxu0 0
    %942 = vmatpush1.bf16.msra.mxu0 0
    %943 = vmatprep.subr.bf16.mxu0 0
    %944 = vmatpush1.bf16.msra.mxu0 0
    %945 = vmatprep.subr.bf16.mxu0 0
    %946 = vmatpush1.bf16.msra.mxu0 0
    %947 = vmatprep.subr.bf16.mxu0 0
    %948 = vmatpush1.bf16.msra.mxu0 0
    %949 = vmatprep.subr.bf16.mxu0 0
    %950 = vmatpush1.bf16.msra.mxu0 0
    %951 = vmatprep.subr.bf16.mxu0 0
    %952 = vmatpush1.bf16.msra.mxu0 0
    %953 = vmatprep.subr.bf16.mxu0 0
    %954 = vmatpush1.bf16.msra.mxu0 0
    %955 = vmatprep.subr.bf16.mxu0 0
    %956 = vmatpush1.bf16.msra.mxu0 0
    %957 = vmatprep.subr.bf16.mxu0 0
    %958 = vmatpush1.bf16.msra.mxu0 0
    %959 = vmatprep.subr.bf16.mxu0 0
    %960 = vmatpush1.bf16.msra.mxu0 0
    %961 = vmatprep.mubr.bf16.mxu0 0
    %962 = vmatmul.mubr.bf16.gmra.mrb[0].mxu0 %v924
    %v963 = vpop.f32.mrb[0].mxu0
    %v964 = vadd.f32 0.0, %v963
    %v965 = vpop.f32.mrb[0].mxu0
    %v966 = vpop.f32.mrb[0].mxu0
    %v967 = vpop.f32.mrb[0].mxu0
    %968 = vdwg.mxu0
    %971 = vrot.lane.b32.xlu0 %v915, 32
    %v972 = vpop.permute.xlu0 %971
    %973 = vrot.lane.b32.xlu0 %v964, 32
    %v974 = vpop.permute.xlu0 %973
    %vm977 = vcmask 523520
    %978 = vst.msk [vmem:[#allocation2] sm:$0xff] %vm977, %v972
    %979 = vst.msk [vmem:[#allocation2 + $0x8] sm:$0xff] %vm977, %v974
    %980 = vrot.lane.b32.xlu0 %v506, 64
    %v981 = vpop.permute.xlu0 %980
    %982 = vrot.lane.b32.xlu0 %v508, 64
    %v983 = vpop.permute.xlu0 %982
    %v985 = vsel %vm512, %v981, 0
    %v988 = vsel %vm512, %v983, 0
    %990 = vmatprep.subr.bf16.mxu0 0
    %991 = vmatpush1.bf16.xpose.msra.mxu0 %v988
    %992 = vmatprep.subr.bf16.mxu0 0
    %993 = vmatpush1.bf16.xpose.msra.mxu0 0
    %994 = vmatprep.subr.bf16.mxu0 0
    %995 = vmatpush1.bf16.xpose.msra.mxu0 0
    %996 = vmatprep.subr.bf16.mxu0 0
    %997 = vmatpush1.bf16.xpose.msra.mxu0 0
    %998 = vmatprep.subr.bf16.mxu0 0
    %999 = vmatpush1.bf16.xpose.msra.mxu0 0
    %1000 = vmatprep.subr.bf16.mxu0 0
    %1001 = vmatpush1.bf16.xpose.msra.mxu0 0
    %1002 = vmatprep.subr.bf16.mxu0 0
    %1003 = vmatpush1.bf16.xpose.msra.mxu0 0
    %1004 = vmatprep.subr.bf16.mxu0 0
    %1005 = vmatpush1.bf16.xpose.msra.mxu0 0
    %1006 = vmatprep.subr.bf16.mxu0 0
    %1007 = vmatpush1.bf16.xpose.msra.mxu0 0
    %1008 = vmatprep.subr.bf16.mxu0 0
    %1009 = vmatpush1.bf16.xpose.msra.mxu0 0
    %1010 = vmatprep.subr.bf16.mxu0 0
    %1011 = vmatpush1.bf16.xpose.msra.mxu0 0
    %1012 = vmatprep.subr.bf16.mxu0 0
    %1013 = vmatpush1.bf16.xpose.msra.mxu0 0
    %1014 = vmatprep.subr.bf16.mxu0 0
    %1015 = vmatpush1.bf16.xpose.msra.mxu0 0
    %1016 = vmatprep.subr.bf16.mxu0 0
    %1017 = vmatpush1.bf16.xpose.msra.mxu0 0
    %1018 = vmatprep.subr.bf16.mxu0 0
    %1019 = vmatpush1.bf16.xpose.msra.mxu0 0
    %1020 = vmatprep.subr.bf16.mxu0 0
    %1021 = vmatpush1.bf16.xpose.msra.mxu0 0
    %1022 = vmatprep.mubr.bf16.mxu0 0
    %1023 = vmatmul.mubr.bf16.gmra.mrb[0].mxu0 %v985
    %v1024 = vpop.f32.mrb[0].mxu0
    %v1025 = vadd.f32 0.0, %v1024
    %v1026 = vpop.f32.mrb[0].mxu0
    %v1027 = vpop.f32.mrb[0].mxu0
    %v1028 = vpop.f32.mrb[0].mxu0
    %1029 = vdwg.mxu0
    %1030 = vrot.lane.b32.xlu0 %v507, 64
    %v1031 = vpop.permute.xlu0 %1030
    %1032 = vrot.lane.b32.xlu0 %v509, 64
    %v1033 = vpop.permute.xlu0 %1032
    %v1035 = vsel %vm512, %v1031, 0
    %v1038 = vsel %vm512, %v1033, 0
    %1040 = vmatprep.subr.bf16.mxu0 0
    %1041 = vmatpush1.bf16.xpose.msra.mxu0 %v1038
    %1042 = vmatprep.subr.bf16.mxu0 0
    %1043 = vmatpush1.bf16.xpose.msra.mxu0 0
    %1044 = vmatprep.subr.bf16.mxu0 0
    %1045 = vmatpush1.bf16.xpose.msra.mxu0 0
    %1046 = vmatprep.subr.bf16.mxu0 0
    %1047 = vmatpush1.bf16.xpose.msra.mxu0 0
    %1048 = vmatprep.subr.bf16.mxu0 0
    %1049 = vmatpush1.bf16.xpose.msra.mxu0 0
    %1050 = vmatprep.subr.bf16.mxu0 0
    %1051 = vmatpush1.bf16.xpose.msra.mxu0 0
    %1052 = vmatprep.subr.bf16.mxu0 0
    %1053 = vmatpush1.bf16.xpose.msra.mxu0 0
    %1054 = vmatprep.subr.bf16.mxu0 0
    %1055 = vmatpush1.bf16.xpose.msra.mxu0 0
    %1056 = vmatprep.subr.bf16.mxu0 0
    %1057 = vmatpush1.bf16.xpose.msra.mxu0 0
    %1058 = vmatprep.subr.bf16.mxu0 0
    %1059 = vmatpush1.bf16.xpose.msra.mxu0 0
    %1060 = vmatprep.subr.bf16.mxu0 0
    %1061 = vmatpush1.bf16.xpose.msra.mxu0 0
    %1062 = vmatprep.subr.bf16.mxu0 0
    %1063 = vmatpush1.bf16.xpose.msra.mxu0 0
    %1064 = vmatprep.subr.bf16.mxu0 0
    %1065 = vmatpush1.bf16.xpose.msra.mxu0 0
    %1066 = vmatprep.subr.bf16.mxu0 0
    %1067 = vmatpush1.bf16.xpose.msra.mxu0 0
    %1068 = vmatprep.subr.bf16.mxu0 0
    %1069 = vmatpush1.bf16.xpose.msra.mxu0 0
    %1070 = vmatprep.subr.bf16.mxu0 0
    %1071 = vmatpush1.bf16.xpose.msra.mxu0 0
    %1072 = vmatprep.mubr.bf16.mxu0 0
    %1073 = vmatmul.mubr.bf16.gmra.mrb[0].mxu0 %v1035
    %v1074 = vpop.f32.mrb[0].mxu0
    %v1075 = vadd.f32 0.0, %v1074
    %v1076 = vpop.f32.mrb[0].mxu0
    %v1077 = vpop.f32.mrb[0].mxu0
    %v1078 = vpop.f32.mrb[0].mxu0
    %1079 = vdwg.mxu0
    %v1080 = vmul.f32 %v1025, 0.17677669
    %v1081 = vmul.f32 %v1075, 0.17677669
    %v1082 = vadd.f32 %v1080, %v610
    %v1083 = vadd.f32 %v1081, %v614
    %v1084 = vsel %vm619, %v1082, -inf
    %1085 = vmax.xlane.f32.xlu0 %v1084
    %v1086 = vpop.xlane.xlu0 %1085
    %v1087 = vsel %vm619, %v1083, -inf
    %1088 = vmax.xlane.f32.xlu0 %v1087
    %v1089 = vpop.xlane.xlu0 %1088
    %v1090 = vsub.f32 %v1082, %v1086
    %v1091 = vsub.f32 %v1083, %v1089
    %v1092 = vmul.f32 %v1090, 1.442695
    %v1093 = vpow.pop %v1092
    %v1094 = vmul.f32 %v1091, 1.442695
    %v1095 = vpow.pop %v1094
    %v1096 = vsel %vm619, %v1093, 0.0
    %1097 = vadd.xlane.f32.xlu0 %v1096
    %v1098 = vpop.xlane.xlu0 %1097
    %v1099 = vsel %vm619, %v1095, 0.0
    %1100 = vadd.xlane.f32.xlu0 %v1099
    %v1101 = vpop.xlane.xlu0 %1100
    %v1102 = vrcp.pop %v1098
    %v1103 = vrcp.pop %v1101
    %v1104 = vmul.f32 %v1093, %v1102
    %v1105 = vmul.f32 %v1095, %v1103
    %v1106 = vpack.c.bf16 %v1104, %v1104
    %v1107 = vpack.c.bf16 %v1105, %v1105
    %1108 = vrot.lane.b32.xlu0 %v510, 64
    %v1109 = vpop.permute.xlu0 %1108
    %v1111 = vsel %vm619, %v1106, 0
    %v1114 = vsel %vm647, %v1109, 0
    %1116 = vmatprep.subr.bf16.mxu0 0
    %1117 = vmatpush1.bf16.msra.mxu0 %v1114
    %1118 = vmatprep.subr.bf16.mxu0 0
    %1119 = vmatpush1.bf16.msra.mxu0 0
    %1120 = vmatprep.subr.bf16.mxu0 0
    %1121 = vmatpush1.bf16.msra.mxu0 0
    %1122 = vmatprep.subr.bf16.mxu0 0
    %1123 = vmatpush1.bf16.msra.mxu0 0
    %1124 = vmatprep.subr.bf16.mxu0 0
    %1125 = vmatpush1.bf16.msra.mxu0 0
    %1126 = vmatprep.subr.bf16.mxu0 0
    %1127 = vmatpush1.bf16.msra.mxu0 0
    %1128 = vmatprep.subr.bf16.mxu0 0
    %1129 = vmatpush1.bf16.msra.mxu0 0
    %1130 = vmatprep.subr.bf16.mxu0 0
    %1131 = vmatpush1.bf16.msra.mxu0 0
    %1132 = vmatprep.subr.bf16.mxu0 0
    %1133 = vmatpush1.bf16.msra.mxu0 0
    %1134 = vmatprep.subr.bf16.mxu0 0
    %1135 = vmatpush1.bf16.msra.mxu0 0
    %1136 = vmatprep.subr.bf16.mxu0 0
    %1137 = vmatpush1.bf16.msra.mxu0 0
    %1138 = vmatprep.subr.bf16.mxu0 0
    %1139 = vmatpush1.bf16.msra.mxu0 0
    %1140 = vmatprep.subr.bf16.mxu0 0
    %1141 = vmatpush1.bf16.msra.mxu0 0
    %1142 = vmatprep.subr.bf16.mxu0 0
    %1143 = vmatpush1.bf16.msra.mxu0 0
    %1144 = vmatprep.subr.bf16.mxu0 0
    %1145 = vmatpush1.bf16.msra.mxu0 0
    %1146 = vmatprep.subr.bf16.mxu0 0
    %1147 = vmatpush1.bf16.msra.mxu0 0
    %1148 = vmatprep.mubr.bf16.mxu0 0
    %1149 = vmatmul.mubr.bf16.gmra.mrb[0].mxu0 %v1111
    %v1150 = vpop.f32.mrb[0].mxu0
    %v1151 = vadd.f32 0.0, %v1150
    %v1152 = vpop.f32.mrb[0].mxu0
    %v1153 = vpop.f32.mrb[0].mxu0
    %v1154 = vpop.f32.mrb[0].mxu0
    %1155 = vdwg.mxu0
    %1156 = vrot.lane.b32.xlu0 %v511, 64
    %v1157 = vpop.permute.xlu0 %1156
    %v1159 = vsel %vm619, %v1107, 0
    %v1162 = vsel %vm647, %v1157, 0
    %1164 = vmatprep.subr.bf16.mxu0 0
    %1165 = vmatpush1.bf16.msra.mxu0 %v1162
    %1166 = vmatprep.subr.bf16.mxu0 0
    %1167 = vmatpush1.bf16.msra.mxu0 0
    %1168 = vmatprep.subr.bf16.mxu0 0
    %1169 = vmatpush1.bf16.msra.mxu0 0
    %1170 = vmatprep.subr.bf16.mxu0 0
    %1171 = vmatpush1.bf16.msra.mxu0 0
    %1172 = vmatprep.subr.bf16.mxu0 0
    %1173 = vmatpush1.bf16.msra.mxu0 0
    %1174 = vmatprep.subr.bf16.mxu0 0
    %1175 = vmatpush1.bf16.msra.mxu0 0
    %1176 = vmatprep.subr.bf16.mxu0 0
    %1177 = vmatpush1.bf16.msra.mxu0 0
    %1178 = vmatprep.subr.bf16.mxu0 0
    %1179 = vmatpush1.bf16.msra.mxu0 0
    %1180 = vmatprep.subr.bf16.mxu0 0
    %1181 = vmatpush1.bf16.msra.mxu0 0
    %1182 = vmatprep.subr.bf16.mxu0 0
    %1183 = vmatpush1.bf16.msra.mxu0 0
    %1184 = vmatprep.subr.bf16.mxu0 0
    %1185 = vmatpush1.bf16.msra.mxu0 0
    %1186 = vmatprep.subr.bf16.mxu0 0
    %1187 = vmatpush1.bf16.msra.mxu0 0
    %1188 = vmatprep.subr.bf16.mxu0 0
    %1189 = vmatpush1.bf16.msra.mxu0 0
    %1190 = vmatprep.subr.bf16.mxu0 0
    %1191 = vmatpush1.bf16.msra.mxu0 0
    %1192 = vmatprep.subr.bf16.mxu0 0
    %1193 = vmatpush1.bf16.msra.mxu0 0
    %1194 = vmatprep.subr.bf16.mxu0 0
    %1195 = vmatpush1.bf16.msra.mxu0 0
    %1196 = vmatprep.mubr.bf16.mxu0 0
    %1197 = vmatmul.mubr.bf16.gmra.mrb[0].mxu0 %v1159
    %v1198 = vpop.f32.mrb[0].mxu0
    %v1199 = vadd.f32 0.0, %v1198
    %v1200 = vpop.f32.mrb[0].mxu0
    %v1201 = vpop.f32.mrb[0].mxu0
    %v1202 = vpop.f32.mrb[0].mxu0
    %1203 = vdwg.mxu0
    %1206 = vrot.lane.b32.xlu0 %v1151, 64
    %v1207 = vpop.permute.xlu0 %1206
    %1208 = vrot.lane.b32.xlu0 %v1199, 64
    %v1209 = vpop.permute.xlu0 %1208
    %vm1212 = vcmask 785920
    %1213 = vst.msk [vmem:[#allocation2] sm:$0xff] %vm1212, %v1207
    %1214 = vst.msk [vmem:[#allocation2 + $0x8] sm:$0xff] %vm1212, %v1209
    %1215 = vrot.lane.b32.xlu0 %v506, 32
    %v1216 = vpop.permute.xlu0 %1215
    %1217 = vrot.lane.b32.xlu0 %v508, 32
    %v1218 = vpop.permute.xlu0 %1217
    %v1220 = vsel %vm512, %v1216, 0
    %v1223 = vsel %vm512, %v1218, 0
    %1225 = vmatprep.subr.bf16.mxu0 0
    %1226 = vmatpush1.bf16.xpose.msra.mxu0 %v1223
    %1227 = vmatprep.subr.bf16.mxu0 0
    %1228 = vmatpush1.bf16.xpose.msra.mxu0 0
    %1229 = vmatprep.subr.bf16.mxu0 0
    %1230 = vmatpush1.bf16.xpose.msra.mxu0 0
    %1231 = vmatprep.subr.bf16.mxu0 0
    %1232 = vmatpush1.bf16.xpose.msra.mxu0 0
    %1233 = vmatprep.subr.bf16.mxu0 0
    %1234 = vmatpush1.bf16.xpose.msra.mxu0 0
    %1235 = vmatprep.subr.bf16.mxu0 0
    %1236 = vmatpush1.bf16.xpose.msra.mxu0 0
    %1237 = vmatprep.subr.bf16.mxu0 0
    %1238 = vmatpush1.bf16.xpose.msra.mxu0 0
    %1239 = vmatprep.subr.bf16.mxu0 0
    %1240 = vmatpush1.bf16.xpose.msra.mxu0 0
    %1241 = vmatprep.subr.bf16.mxu0 0
    %1242 = vmatpush1.bf16.xpose.msra.mxu0 0
    %1243 = vmatprep.subr.bf16.mxu0 0
    %1244 = vmatpush1.bf16.xpose.msra.mxu0 0
    %1245 = vmatprep.subr.bf16.mxu0 0
    %1246 = vmatpush1.bf16.xpose.msra.mxu0 0
    %1247 = vmatprep.subr.bf16.mxu0 0
    %1248 = vmatpush1.bf16.xpose.msra.mxu0 0
    %1249 = vmatprep.subr.bf16.mxu0 0
    %1250 = vmatpush1.bf16.xpose.msra.mxu0 0
    %1251 = vmatprep.subr.bf16.mxu0 0
    %1252 = vmatpush1.bf16.xpose.msra.mxu0 0
    %1253 = vmatprep.subr.bf16.mxu0 0
    %1254 = vmatpush1.bf16.xpose.msra.mxu0 0
    %1255 = vmatprep.subr.bf16.mxu0 0
    %1256 = vmatpush1.bf16.xpose.msra.mxu0 0
    %1257 = vmatprep.mubr.bf16.mxu0 0
    %1258 = vmatmul.mubr.bf16.gmra.mrb[0].mxu0 %v1220
    %v1259 = vpop.f32.mrb[0].mxu0
    %v1260 = vadd.f32 0.0, %v1259
    %v1261 = vpop.f32.mrb[0].mxu0
    %v1262 = vpop.f32.mrb[0].mxu0
    %v1263 = vpop.f32.mrb[0].mxu0
    %1264 = vdwg.mxu0
    %1265 = vrot.lane.b32.xlu0 %v507, 32
    %v1266 = vpop.permute.xlu0 %1265
    %1267 = vrot.lane.b32.xlu0 %v509, 32
    %v1268 = vpop.permute.xlu0 %1267
    %v1270 = vsel %vm512, %v1266, 0
    %v1273 = vsel %vm512, %v1268, 0
    %1275 = vmatprep.subr.bf16.mxu0 0
    %1276 = vmatpush1.bf16.xpose.msra.mxu0 %v1273
    %1277 = vmatprep.subr.bf16.mxu0 0
    %1278 = vmatpush1.bf16.xpose.msra.mxu0 0
    %1279 = vmatprep.subr.bf16.mxu0 0
    %1280 = vmatpush1.bf16.xpose.msra.mxu0 0
    %1281 = vmatprep.subr.bf16.mxu0 0
    %1282 = vmatpush1.bf16.xpose.msra.mxu0 0
    %1283 = vmatprep.subr.bf16.mxu0 0
    %1284 = vmatpush1.bf16.xpose.msra.mxu0 0
    %1285 = vmatprep.subr.bf16.mxu0 0
    %1286 = vmatpush1.bf16.xpose.msra.mxu0 0
    %1287 = vmatprep.subr.bf16.mxu0 0
    %1288 = vmatpush1.bf16.xpose.msra.mxu0 0
    %1289 = vmatprep.subr.bf16.mxu0 0
    %1290 = vmatpush1.bf16.xpose.msra.mxu0 0
    %1291 = vmatprep.subr.bf16.mxu0 0
    %1292 = vmatpush1.bf16.xpose.msra.mxu0 0
    %1293 = vmatprep.subr.bf16.mxu0 0
    %1294 = vmatpush1.bf16.xpose.msra.mxu0 0
    %1295 = vmatprep.subr.bf16.mxu0 0
    %1296 = vmatpush1.bf16.xpose.msra.mxu0 0
    %1297 = vmatprep.subr.bf16.mxu0 0
    %1298 = vmatpush1.bf16.xpose.msra.mxu0 0
    %1299 = vmatprep.subr.bf16.mxu0 0
    %1300 = vmatpush1.bf16.xpose.msra.mxu0 0
    %1301 = vmatprep.subr.bf16.mxu0 0
    %1302 = vmatpush1.bf16.xpose.msra.mxu0 0
    %1303 = vmatprep.subr.bf16.mxu0 0
    %1304 = vmatpush1.bf16.xpose.msra.mxu0 0
    %1305 = vmatprep.subr.bf16.mxu0 0
    %1306 = vmatpush1.bf16.xpose.msra.mxu0 0
    %1307 = vmatprep.mubr.bf16.mxu0 0
    %1308 = vmatmul.mubr.bf16.gmra.mrb[0].mxu0 %v1270
    %v1309 = vpop.f32.mrb[0].mxu0
    %v1310 = vadd.f32 0.0, %v1309
    %v1311 = vpop.f32.mrb[0].mxu0
    %v1312 = vpop.f32.mrb[0].mxu0
    %v1313 = vpop.f32.mrb[0].mxu0
    %1314 = vdwg.mxu0
    %v1315 = vmul.f32 %v1260, 0.17677669
    %v1316 = vmul.f32 %v1310, 0.17677669
    %v1317 = vadd.f32 %v1315, %v610
    %v1318 = vadd.f32 %v1316, %v614
    %v1319 = vsel %vm619, %v1317, -inf
    %1320 = vmax.xlane.f32.xlu0 %v1319
    %v1321 = vpop.xlane.xlu0 %1320
    %v1322 = vsel %vm619, %v1318, -inf
    %1323 = vmax.xlane.f32.xlu0 %v1322
    %v1324 = vpop.xlane.xlu0 %1323
    %v1325 = vsub.f32 %v1317, %v1321
    %v1326 = vsub.f32 %v1318, %v1324
    %v1327 = vmul.f32 %v1325, 1.442695
    %v1328 = vpow.pop %v1327
    %v1329 = vmul.f32 %v1326, 1.442695
    %v1330 = vpow.pop %v1329
    %v1331 = vsel %vm619, %v1328, 0.0
    %1332 = vadd.xlane.f32.xlu0 %v1331
    %v1333 = vpop.xlane.xlu0 %1332
    %v1334 = vsel %vm619, %v1330, 0.0
    %1335 = vadd.xlane.f32.xlu0 %v1334
    %v1336 = vpop.xlane.xlu0 %1335
    %v1337 = vrcp.pop %v1333
    %v1338 = vrcp.pop %v1336
    %v1339 = vmul.f32 %v1328, %v1337
    %v1340 = vmul.f32 %v1330, %v1338
    %v1341 = vpack.c.bf16 %v1339, %v1339
    %v1342 = vpack.c.bf16 %v1340, %v1340
    %1343 = vrot.lane.b32.xlu0 %v510, 32
    %v1344 = vpop.permute.xlu0 %1343
    %v1346 = vsel %vm619, %v1341, 0
    %v1349 = vsel %vm647, %v1344, 0
    %1351 = vmatprep.subr.bf16.mxu0 0
    %1352 = vmatpush1.bf16.msra.mxu0 %v1349
    %1353 = vmatprep.subr.bf16.mxu0 0
    %1354 = vmatpush1.bf16.msra.mxu0 0
    %1355 = vmatprep.subr.bf16.mxu0 0
    %1356 = vmatpush1.bf16.msra.mxu0 0
    %1357 = vmatprep.subr.bf16.mxu0 0
    %1358 = vmatpush1.bf16.msra.mxu0 0
    %1359 = vmatprep.subr.bf16.mxu0 0
    %1360 = vmatpush1.bf16.msra.mxu0 0
    %1361 = vmatprep.subr.bf16.mxu0 0
    %1362 = vmatpush1.bf16.msra.mxu0 0
    %1363 = vmatprep.subr.bf16.mxu0 0
    %1364 = vmatpush1.bf16.msra.mxu0 0
    %1365 = vmatprep.subr.bf16.mxu0 0
    %1366 = vmatpush1.bf16.msra.mxu0 0
    %1367 = vmatprep.subr.bf16.mxu0 0
    %1368 = vmatpush1.bf16.msra.mxu0 0
    %1369 = vmatprep.subr.bf16.mxu0 0
    %1370 = vmatpush1.bf16.msra.mxu0 0
    %1371 = vmatprep.subr.bf16.mxu0 0
    %1372 = vmatpush1.bf16.msra.mxu0 0
    %1373 = vmatprep.subr.bf16.mxu0 0
    %1374 = vmatpush1.bf16.msra.mxu0 0
    %1375 = vmatprep.subr.bf16.mxu0 0
    %1376 = vmatpush1.bf16.msra.mxu0 0
    %1377 = vmatprep.subr.bf16.mxu0 0
    %1378 = vmatpush1.bf16.msra.mxu0 0
    %1379 = vmatprep.subr.bf16.mxu0 0
    %1380 = vmatpush1.bf16.msra.mxu0 0
    %1381 = vmatprep.subr.bf16.mxu0 0
    %1382 = vmatpush1.bf16.msra.mxu0 0
    %1383 = vmatprep.mubr.bf16.mxu0 0
    %1384 = vmatmul.mubr.bf16.gmra.mrb[0].mxu0 %v1346
    %v1385 = vpop.f32.mrb[0].mxu0
    %v1386 = vadd.f32 0.0, %v1385
    %v1387 = vpop.f32.mrb[0].mxu0
    %v1388 = vpop.f32.mrb[0].mxu0
    %v1389 = vpop.f32.mrb[0].mxu0
    %1390 = vdwg.mxu0
    %1391 = vrot.lane.b32.xlu0 %v511, 32
    %v1392 = vpop.permute.xlu0 %1391
    %v1394 = vsel %vm619, %v1342, 0
    %v1397 = vsel %vm647, %v1392, 0
    %1399 = vmatprep.subr.bf16.mxu0 0
    %1400 = vmatpush1.bf16.msra.mxu0 %v1397
    %1401 = vmatprep.subr.bf16.mxu0 0
    %1402 = vmatpush1.bf16.msra.mxu0 0
    %1403 = vmatprep.subr.bf16.mxu0 0
    %1404 = vmatpush1.bf16.msra.mxu0 0
    %1405 = vmatprep.subr.bf16.mxu0 0
    %1406 = vmatpush1.bf16.msra.mxu0 0
    %1407 = vmatprep.subr.bf16.mxu0 0
    %1408 = vmatpush1.bf16.msra.mxu0 0
    %1409 = vmatprep.subr.bf16.mxu0 0
    %1410 = vmatpush1.bf16.msra.mxu0 0
    %1411 = vmatprep.subr.bf16.mxu0 0
    %1412 = vmatpush1.bf16.msra.mxu0 0
    %1413 = vmatprep.subr.bf16.mxu0 0
    %1414 = vmatpush1.bf16.msra.mxu0 0
    %1415 = vmatprep.subr.bf16.mxu0 0
    %1416 = vmatpush1.bf16.msra.mxu0 0
    %1417 = vmatprep.subr.bf16.mxu0 0
    %1418 = vmatpush1.bf16.msra.mxu0 0
    %1419 = vmatprep.subr.bf16.mxu0 0
    %1420 = vmatpush1.bf16.msra.mxu0 0
    %1421 = vmatprep.subr.bf16.mxu0 0
    %1422 = vmatpush1.bf16.msra.mxu0 0
    %1423 = vmatprep.subr.bf16.mxu0 0
    %1424 = vmatpush1.bf16.msra.mxu0 0
    %1425 = vmatprep.subr.bf16.mxu0 0
    %1426 = vmatpush1.bf16.msra.mxu0 0
    %1427 = vmatprep.subr.bf16.mxu0 0
    %1428 = vmatpush1.bf16.msra.mxu0 0
    %1429 = vmatprep.subr.bf16.mxu0 0
    %1430 = vmatpush1.bf16.msra.mxu0 0
    %1431 = vmatprep.mubr.bf16.mxu0 0
    %1432 = vmatmul.mubr.bf16.gmra.mrb[0].mxu0 %v1394
    %v1433 = vpop.f32.mrb[0].mxu0
    %v1434 = vadd.f32 0.0, %v1433
    %v1435 = vpop.f32.mrb[0].mxu0
    %v1436 = vpop.f32.mrb[0].mxu0
    %v1437 = vpop.f32.mrb[0].mxu0
    %1438 = vdwg.mxu0
    %1441 = vrot.lane.b32.xlu0 %v1386, 96
    %v1442 = vpop.permute.xlu0 %1441
    %1443 = vrot.lane.b32.xlu0 %v1434, 96
    %v1444 = vpop.permute.xlu0 %1443
    %vm1447 = vcmask 1048320
    %1448 = vst.msk [vmem:[#allocation2] sm:$0xff] %vm1447, %v1442
    %1449 = vst.msk [vmem:[#allocation2 + $0x8] sm:$0xff] %vm1447, %v1444
    %v1450 = vld [vmem:[#allocation2] sm:$0xff]
    %v1451 = vld [vmem:[#allocation2 + $0x8] sm:$0xff]
    %v1452 = vpack.c.bf16 %v1451, %v1450
    %v1453 = vld [vmem:[#allocation12] sm:$0xf]
    %v1454 = vld [vmem:[#allocation12 + $0x4] sm:$0xf]
    %v1455 = vld [vmem:[#allocation12 + $0x8] sm:$0xf]
    %v1456 = vld [vmem:[#allocation12 + $0xc] sm:$0xf]
    %v1457 = vld [vmem:[#allocation12 + $0x10] sm:$0xf]
    %v1458 = vld [vmem:[#allocation12 + $0x14] sm:$0xf]
    %v1459 = vld [vmem:[#allocation12 + $0x18] sm:$0xf]
    %v1460 = vld [vmem:[#allocation12 + $0x1c] sm:$0xf]
    %v1461 = vld [vmem:[#allocation12 + $0x20] sm:$0xf]
    %v1462 = vld [vmem:[#allocation12 + $0x24] sm:$0xf]
    %v1463 = vld [vmem:[#allocation12 + $0x28] sm:$0xf]
    %v1464 = vld [vmem:[#allocation12 + $0x2c] sm:$0xf]
    %v1465 = vld [vmem:[#allocation12 + $0x30] sm:$0xf]
    %v1466 = vld [vmem:[#allocation12 + $0x34] sm:$0xf]
    %v1467 = vld [vmem:[#allocation12 + $0x38] sm:$0xf]
    %v1468 = vld [vmem:[#allocation12 + $0x3c] sm:$0xf]
    %v1469 = vld [vmem:[%s7] sm:$0x1]
    %v1471 = vlaneseq
    %v1472 = vshrl.u32 %v1471, 7
    %v1473 = vsub.s32 0, %v1472
    %v1474 = vrot.slane %v1469, %v1473
    %v1492 = vunpack.c.l.b16 %v1453
    %v1493 = vunpack.c.l.b16 %v1454
    %v1494 = vunpack.c.l.b16 %v1455
    %v1495 = vunpack.c.l.b16 %v1456
    %v1496 = vunpack.c.l.b16 %v1457
    %v1497 = vunpack.c.l.b16 %v1458
    %v1498 = vunpack.c.l.b16 %v1459
    %v1499 = vunpack.c.l.b16 %v1460
    %v1500 = vunpack.c.l.b16 %v1461
    %v1501 = vunpack.c.l.b16 %v1462
    %v1502 = vunpack.c.l.b16 %v1463
    %v1503 = vunpack.c.l.b16 %v1464
    %v1504 = vunpack.c.l.b16 %v1465
    %v1505 = vunpack.c.l.b16 %v1466
    %v1506 = vunpack.c.l.b16 %v1467
    %v1507 = vunpack.c.l.b16 %v1468
    %v1508 = vpack.c.b16 %v1493, %v1492
    %v1509 = vpack.c.b16 %v1495, %v1494
    %v1510 = vpack.c.b16 %v1497, %v1496
    %v1511 = vpack.c.b16 %v1499, %v1498
    %v1512 = vpack.c.b16 %v1501, %v1500
    %v1513 = vpack.c.b16 %v1503, %v1502
    %v1514 = vpack.c.b16 %v1505, %v1504
    %v1515 = vpack.c.b16 %v1507, %v1506
    %1524 = vmatprep.subr.bf16.mxu0 0
    %1525 = vmatpush1.bf16.msra.mxu0 %v1508
    %1526 = vmatprep.subr.bf16.mxu0 0
    %1527 = vmatpush1.bf16.msra.mxu0 %v1509
    %1528 = vmatprep.subr.bf16.mxu0 0
    %1529 = vmatpush1.bf16.msra.mxu0 %v1510
    %1530 = vmatprep.subr.bf16.mxu0 0
    %1531 = vmatpush1.bf16.msra.mxu0 %v1511
    %1532 = vmatprep.subr.bf16.mxu0 0
    %1533 = vmatpush1.bf16.msra.mxu0 %v1512
    %1534 = vmatprep.subr.bf16.mxu0 0
    %1535 = vmatpush1.bf16.msra.mxu0 %v1513
    %1536 = vmatprep.subr.bf16.mxu0 0
    %1537 = vmatpush1.bf16.msra.mxu0 %v1514
    %1538 = vmatprep.subr.bf16.mxu0 0
    %1539 = vmatpush1.bf16.msra.mxu0 %v1515
    %1540 = vmatprep.subr.bf16.mxu0 0
    %1541 = vmatpush1.bf16.msra.mxu0 0
    %1542 = vmatprep.subr.bf16.mxu0 0
    %1543 = vmatpush1.bf16.msra.mxu0 0
    %1544 = vmatprep.subr.bf16.mxu0 0
    %1545 = vmatpush1.bf16.msra.mxu0 0
    %1546 = vmatprep.subr.bf16.mxu0 0
    %1547 = vmatpush1.bf16.msra.mxu0 0
    %1548 = vmatprep.subr.bf16.mxu0 0
    %1549 = vmatpush1.bf16.msra.mxu0 0
    %1550 = vmatprep.subr.bf16.mxu0 0
    %1551 = vmatpush1.bf16.msra.mxu0 0
    %1552 = vmatprep.subr.bf16.mxu0 0
    %1553 = vmatpush1.bf16.msra.mxu0 0
    %1554 = vmatprep.subr.bf16.mxu0 0
    %1555 = vmatpush1.bf16.msra.mxu0 0
    %1556 = vmatprep.mubr.bf16.mxu0 0
    %1557 = vmatmul.mubr.bf16.gmra.mrb[0].mxu0 %v1452
    %v1558 = vpop.f32.mrb[0].mxu0
    %v1559 = vadd.f32 %v1474, %v1558
    %v1560 = vpop.f32.mrb[0].mxu0
    %v1561 = vpop.f32.mrb[0].mxu0
    %v1562 = vadd.f32 %v1474, %v1561
    %v1563 = vpop.f32.mrb[0].mxu0
    %1564 = vdwg.mxu0
    %v1565 = vadd.f32 %v218, %v1559
    %v1566 = vadd.f32 %v219, %v1562
    %v1567 = vld [vmem:[%s8] sm:$0x1]
    %v1568 = vld [vmem:[%s9] sm:$0x1]
    %1569 = vadd.xlane.f32.xlu0 %v1565
    %v1570 = vpop.xlane.xlu0 %1569
    %1571 = vadd.xlane.f32.xlu0 %v1566
    %v1572 = vpop.xlane.xlu0 %1571
    %v1573 = vmul.f32 %v1570, %v185
    %v1574 = vmul.f32 %v1572, %v185
    %v1575 = vsub.f32 %v1565, %v1573
    %v1576 = vsub.f32 %v1566, %v1574
    %v1577 = vmul.f32 %v1575, %v1575
    %v1578 = vmul.f32 %v1576, %v1576
    %1579 = vadd.xlane.f32.xlu0 %v1577
    %v1580 = vpop.xlane.xlu0 %1579
    %1581 = vadd.xlane.f32.xlu0 %v1578
    %v1582 = vpop.xlane.xlu0 %1581
    %v1583 = vmul.f32 %v1580, %v185
    %v1584 = vmul.f32 %v1582, %v185
    %v1585 = vadd.f32 %v1583, 1e-12
    %v1586 = vadd.f32 %v1584, 1e-12
    %v1587 = vrsqrt.pop %v1585
    %v1588 = vrsqrt.pop %v1586
    %v1589 = vmul.f32 %v1575, %v1587
    %v1590 = vmul.f32 %v1576, %v1588
    %v1592 = vlaneseq
    %v1593 = vshrl.u32 %v1592, 7
    %v1594 = vsub.s32 0, %v1593
    %v1595 = vrot.slane %v1567, %v1594
    %v1597 = vmul.f32 %v1589, %v1595
    %v1598 = vmul.f32 %v1590, %v1595
    %v1600 = vlaneseq
    %v1601 = vshrl.u32 %v1600, 7
    %v1602 = vsub.s32 0, %v1601
    %v1603 = vrot.slane %v1568, %v1602
    %v1605 = vadd.f32 %v1597, %v1603
    %v1606 = vadd.f32 %v1598, %v1603
    %v1607 = vpack.c.bf16 %v1606, %v1605
    %v1608 = vld [vmem:[#allocation14] sm:$0xff]
    %v1609 = vld [vmem:[#allocation14 + $0x8] sm:$0xff]
    %v1610 = vld [vmem:[#allocation14 + $0x10] sm:$0xff]
    %v1611 = vld [vmem:[#allocation14 + $0x18] sm:$0xff]
    %v1612 = vld [vmem:[#allocation14 + $0x20] sm:$0xff]
    %v1613 = vld [vmem:[#allocation14 + $0x28] sm:$0xff]
    %v1614 = vld [vmem:[#allocation14 + $0x30] sm:$0xff]
    %v1615 = vld [vmem:[#allocation14 + $0x38] sm:$0xff]
    %v1616 = vld [vmem:[#allocation14 + $0x40] sm:$0xff]
    %v1617 = vld [vmem:[#allocation14 + $0x48] sm:$0xff]
    %v1618 = vld [vmem:[#allocation14 + $0x50] sm:$0xff]
    %v1619 = vld [vmem:[#allocation14 + $0x58] sm:$0xff]
    %v1620 = vld [vmem:[#allocation14 + $0x60] sm:$0xff]
    %v1621 = vld [vmem:[#allocation14 + $0x68] sm:$0xff]
    %v1622 = vld [vmem:[#allocation14 + $0x70] sm:$0xff]
    %v1623 = vld [vmem:[#allocation14 + $0x78] sm:$0xff]
    %v1624 = vld [vmem:[#allocation14 + $0x80] sm:$0xff]
    %v1625 = vld [vmem:[#allocation14 + $0x88] sm:$0xff]
    %v1626 = vld [vmem:[#allocation14 + $0x90] sm:$0xff]
    %v1627 = vld [vmem:[#allocation14 + $0x98] sm:$0xff]
    %v1628 = vld [vmem:[#allocation14 + $0xa0] sm:$0xff]
    %v1629 = vld [vmem:[#allocation14 + $0xa8] sm:$0xff]
    %v1630 = vld [vmem:[#allocation14 + $0xb0] sm:$0xff]
    %v1631 = vld [vmem:[#allocation14 + $0xb8] sm:$0xff]
    %v1632 = vld [vmem:[#allocation14 + $0xc0] sm:$0xff]
    %v1633 = vld [vmem:[#allocation14 + $0xc8] sm:$0xff]
    %v1634 = vld [vmem:[#allocation14 + $0xd0] sm:$0xff]
    %v1635 = vld [vmem:[#allocation14 + $0xd8] sm:$0xff]
    %v1636 = vld [vmem:[#allocation14 + $0xe0] sm:$0xff]
    %v1637 = vld [vmem:[#allocation14 + $0xe8] sm:$0xff]
    %v1638 = vld [vmem:[#allocation14 + $0xf0] sm:$0xff]
    %v1639 = vld [vmem:[#allocation14 + $0xf8] sm:$0xff]
    %v1640 = vld [vmem:[%s11] sm:$0xf]
    %v1642 = vlaneseq
    %v1643 = vshrl.u32 %v1642, 7
    %v1644 = vsub.s32 0, %v1643
    %v1645 = vrot.slane %v1640, %v1644
    %v1646 = vlaneseq
    %v1647 = vshrl.u32 %v1646, 7
    %v1648 = vsub.s32 1, %v1647
    %v1649 = vrot.slane %v1640, %v1648
    %v1650 = vlaneseq
    %v1651 = vshrl.u32 %v1650, 7
    %v1652 = vsub.s32 2, %v1651
    %v1653 = vrot.slane %v1640, %v1652
    %v1654 = vlaneseq
    %v1655 = vshrl.u32 %v1654, 7
    %v1656 = vsub.s32 3, %v1655
    %v1657 = vrot.slane %v1640, %v1656
    %v1694 = vunpack.c.l.b16 %v1608
    %v1695 = vunpack.c.h.b16 %v1608
    %v1696 = vunpack.c.l.b16 %v1609
    %v1697 = vunpack.c.h.b16 %v1609
    %v1698 = vunpack.c.l.b16 %v1610
    %v1699 = vunpack.c.h.b16 %v1610
    %v1700 = vunpack.c.l.b16 %v1611
    %v1701 = vunpack.c.h.b16 %v1611
    %v1702 = vunpack.c.l.b16 %v1612
    %v1703 = vunpack.c.h.b16 %v1612
    %v1704 = vunpack.c.l.b16 %v1613
    %v1705 = vunpack.c.h.b16 %v1613
    %v1706 = vunpack.c.l.b16 %v1614
    %v1707 = vunpack.c.h.b16 %v1614
    %v1708 = vunpack.c.l.b16 %v1615
    %v1709 = vunpack.c.h.b16 %v1615
    %v1710 = vunpack.c.l.b16 %v1616
    %v1711 = vunpack.c.h.b16 %v1616
    %v1712 = vunpack.c.l.b16 %v1617
    %v1713 = vunpack.c.h.b16 %v1617
    %v1714 = vunpack.c.l.b16 %v1618
    %v1715 = vunpack.c.h.b16 %v1618
    %v1716 = vunpack.c.l.b16 %v1619
    %v1717 = vunpack.c.h.b16 %v1619
    %v1718 = vunpack.c.l.b16 %v1620
    %v1719 = vunpack.c.h.b16 %v1620
    %v1720 = vunpack.c.l.b16 %v1621
    %v1721 = vunpack.c.h.b16 %v1621
    %v1722 = vunpack.c.l.b16 %v1622
    %v1723 = vunpack.c.h.b16 %v1622
    %v1724 = vunpack.c.l.b16 %v1623
    %v1725 = vunpack.c.h.b16 %v1623
    %v1726 = vunpack.c.l.b16 %v1624
    %v1727 = vunpack.c.h.b16 %v1624
    %v1728 = vunpack.c.l.b16 %v1625
    %v1729 = vunpack.c.h.b16 %v1625
    %v1730 = vunpack.c.l.b16 %v1626
    %v1731 = vunpack.c.h.b16 %v1626
    %v1732 = vunpack.c.l.b16 %v1627
    %v1733 = vunpack.c.h.b16 %v1627
    %v1734 = vunpack.c.l.b16 %v1628
    %v1735 = vunpack.c.h.b16 %v1628
    %v1736 = vunpack.c.l.b16 %v1629
    %v1737 = vunpack.c.h.b16 %v1629
    %v1738 = vunpack.c.l.b16 %v1630
    %v1739 = vunpack.c.h.b16 %v1630
    %v1740 = vunpack.c.l.b16 %v1631
    %v1741 = vunpack.c.h.b16 %v1631
    %v1742 = vunpack.c.l.b16 %v1632
    %v1743 = vunpack.c.h.b16 %v1632
    %v1744 = vunpack.c.l.b16 %v1633
    %v1745 = vunpack.c.h.b16 %v1633
    %v1746 = vunpack.c.l.b16 %v1634
    %v1747 = vunpack.c.h.b16 %v1634
    %v1748 = vunpack.c.l.b16 %v1635
    %v1749 = vunpack.c.h.b16 %v1635
    %v1750 = vunpack.c.l.b16 %v1636
    %v1751 = vunpack.c.h.b16 %v1636
    %v1752 = vunpack.c.l.b16 %v1637
    %v1753 = vunpack.c.h.b16 %v1637
    %v1754 = vunpack.c.l.b16 %v1638
    %v1755 = vunpack.c.h.b16 %v1638
    %v1756 = vunpack.c.l.b16 %v1639
    %v1757 = vunpack.c.h.b16 %v1639
    %v1758 = vpack.c.b16 %v1698, %v1694
    %v1759 = vpack.c.b16 %v1699, %v1695
    %v1760 = vpack.c.b16 %v1700, %v1696
    %v1761 = vpack.c.b16 %v1701, %v1697
    %v1762 = vpack.c.b16 %v1706, %v1702
    %v1763 = vpack.c.b16 %v1707, %v1703
    %v1764 = vpack.c.b16 %v1708, %v1704
    %v1765 = vpack.c.b16 %v1709, %v1705
    %v1766 = vpack.c.b16 %v1714, %v1710
    %v1767 = vpack.c.b16 %v1715, %v1711
    %v1768 = vpack.c.b16 %v1716, %v1712
    %v1769 = vpack.c.b16 %v1717, %v1713
    %v1770 = vpack.c.b16 %v1722, %v1718
    %v1771 = vpack.c.b16 %v1723, %v1719
    %v1772 = vpack.c.b16 %v1724, %v1720
    %v1773 = vpack.c.b16 %v1725, %v1721
    %v1774 = vpack.c.b16 %v1730, %v1726
    %v1775 = vpack.c.b16 %v1731, %v1727
    %v1776 = vpack.c.b16 %v1732, %v1728
    %v1777 = vpack.c.b16 %v1733, %v1729
    %v1778 = vpack.c.b16 %v1738, %v1734
    %v1779 = vpack.c.b16 %v1739, %v1735
    %v1780 = vpack.c.b16 %v1740, %v1736
    %v1781 = vpack.c.b16 %v1741, %v1737
    %v1782 = vpack.c.b16 %v1746, %v1742
    %v1783 = vpack.c.b16 %v1747, %v1743
    %v1784 = vpack.c.b16 %v1748, %v1744
    %v1785 = vpack.c.b16 %v1749, %v1745
    %v1786 = vpack.c.b16 %v1754, %v1750
    %v1787 = vpack.c.b16 %v1755, %v1751
    %v1788 = vpack.c.b16 %v1756, %v1752
    %v1789 = vpack.c.b16 %v1757, %v1753
    %1822 = vmatprep.subr.bf16.mxu0 %v1759
    %1823 = vmatpush1.bf16.msra.mxu0 %v1758
    %1824 = vmatprep.subr.bf16.mxu0 %v1763
    %1825 = vmatpush1.bf16.msra.mxu0 %v1762
    %1826 = vmatprep.subr.bf16.mxu0 %v1767
    %1827 = vmatpush1.bf16.msra.mxu0 %v1766
    %1828 = vmatprep.subr.bf16.mxu0 %v1771
    %1829 = vmatpush1.bf16.msra.mxu0 %v1770
    %1830 = vmatprep.subr.bf16.mxu0 %v1775
    %1831 = vmatpush1.bf16.msra.mxu0 %v1774
    %1832 = vmatprep.subr.bf16.mxu0 %v1779
    %1833 = vmatpush1.bf16.msra.mxu0 %v1778
    %1834 = vmatprep.subr.bf16.mxu0 %v1783
    %1835 = vmatpush1.bf16.msra.mxu0 %v1782
    %1836 = vmatprep.subr.bf16.mxu0 %v1787
    %1837 = vmatpush1.bf16.msra.mxu0 %v1786
    %1838 = vmatprep.subr.bf16.mxu0 0
    %1839 = vmatpush1.bf16.msra.mxu0 0
    %1840 = vmatprep.subr.bf16.mxu0 0
    %1841 = vmatpush1.bf16.msra.mxu0 0
    %1842 = vmatprep.subr.bf16.mxu0 0
    %1843 = vmatpush1.bf16.msra.mxu0 0
    %1844 = vmatprep.subr.bf16.mxu0 0
    %1845 = vmatpush1.bf16.msra.mxu0 0
    %1846 = vmatprep.subr.bf16.mxu0 0
    %1847 = vmatpush1.bf16.msra.mxu0 0
    %1848 = vmatprep.subr.bf16.mxu0 0
    %1849 = vmatpush1.bf16.msra.mxu0 0
    %1850 = vmatprep.subr.bf16.mxu0 0
    %1851 = vmatpush1.bf16.msra.mxu0 0
    %1852 = vmatprep.subr.bf16.mxu0 0
    %1853 = vmatpush1.bf16.msra.mxu0 0
    %1854 = vmatprep.mubr.bf16.mxu0 0
    %1855 = vmatmul.mubr.bf16.gmra.mrb[0].mxu0 %v1607
    %v1856 = vpop.f32.mrb[0].mxu0
    %v1857 = vadd.f32 %v1645, %v1856
    %v1858 = vpop.f32.mrb[0].mxu0
    %v1859 = vadd.f32 %v1649, %v1858
    %v1860 = vpop.f32.mrb[0].mxu0
    %v1861 = vadd.f32 %v1645, %v1860
    %v1862 = vpop.f32.mrb[0].mxu0
    %v1863 = vadd.f32 %v1649, %v1862
    %1864 = vdwg.mxu0
    %1865 = vmatprep.subr.bf16.mxu0 %v1761
    %1866 = vmatpush1.bf16.msra.mxu0 %v1760
    %1867 = vmatprep.subr.bf16.mxu0 %v1765
    %1868 = vmatpush1.bf16.msra.mxu0 %v1764
    %1869 = vmatprep.subr.bf16.mxu0 %v1769
    %1870 = vmatpush1.bf16.msra.mxu0 %v1768
    %1871 = vmatprep.subr.bf16.mxu0 %v1773
    %1872 = vmatpush1.bf16.msra.mxu0 %v1772
    %1873 = vmatprep.subr.bf16.mxu0 %v1777
    %1874 = vmatpush1.bf16.msra.mxu0 %v1776
    %1875 = vmatprep.subr.bf16.mxu0 %v1781
    %1876 = vmatpush1.bf16.msra.mxu0 %v1780
    %1877 = vmatprep.subr.bf16.mxu0 %v1785
    %1878 = vmatpush1.bf16.msra.mxu0 %v1784
    %1879 = vmatprep.subr.bf16.mxu0 %v1789
    %1880 = vmatpush1.bf16.msra.mxu0 %v1788
    %1881 = vmatprep.subr.bf16.mxu0 0
    %1882 = vmatpush1.bf16.msra.mxu0 0
    %1883 = vmatprep.subr.bf16.mxu0 0
    %1884 = vmatpush1.bf16.msra.mxu0 0
    %1885 = vmatprep.subr.bf16.mxu0 0
    %1886 = vmatpush1.bf16.msra.mxu0 0
    %1887 = vmatprep.subr.bf16.mxu0 0
    %1888 = vmatpush1.bf16.msra.mxu0 0
    %1889 = vmatprep.subr.bf16.mxu0 0
    %1890 = vmatpush1.bf16.msra.mxu0 0
    %1891 = vmatprep.subr.bf16.mxu0 0
    %1892 = vmatpush1.bf16.msra.mxu0 0
    %1893 = vmatprep.subr.bf16.mxu0 0
    %1894 = vmatpush1.bf16.msra.mxu0 0
    %1895 = vmatprep.subr.bf16.mxu0 0
    %1896 = vmatpush1.bf16.msra.mxu0 0
    %1897 = vmatprep.mubr.bf16.mxu0 0
    %1898 = vmatmul.mubr.bf16.gmra.mrb[0].mxu0 %v1607
    %v1899 = vpop.f32.mrb[0].mxu0
    %v1900 = vadd.f32 %v1653, %v1899
    %v1901 = vpop.f32.mrb[0].mxu0
    %v1902 = vadd.f32 %v1657, %v1901
    %v1903 = vpop.f32.mrb[0].mxu0
    %v1904 = vadd.f32 %v1653, %v1903
    %v1905 = vpop.f32.mrb[0].mxu0
    %v1906 = vadd.f32 %v1657, %v1905
    %1907 = vdwg.mxu0
    %v1908 = vmul.f32 %v1857, %v1857
    %v1909 = vmul.f32 %v1859, %v1859
    %v1910 = vmul.f32 %v1900, %v1900
    %v1911 = vmul.f32 %v1902, %v1902
    %v1912 = vmul.f32 %v1861, %v1861
    %v1913 = vmul.f32 %v1863, %v1863
    %v1914 = vmul.f32 %v1904, %v1904
    %v1915 = vmul.f32 %v1906, %v1906
    %v1916 = vmul.f32 %v1857, %v1908
    %v1917 = vmul.f32 %v1859, %v1909
    %v1918 = vmul.f32 %v1900, %v1910
    %v1919 = vmul.f32 %v1902, %v1911
    %v1920 = vmul.f32 %v1861, %v1912
    %v1921 = vmul.f32 %v1863, %v1913
    %v1922 = vmul.f32 %v1904, %v1914
    %v1923 = vmul.f32 %v1906, %v1915
    %v1924 = vmul.f32 %v1916, 0.044715
    %v1925 = vmul.f32 %v1917, 0.044715
    %v1926 = vmul.f32 %v1918, 0.044715
    %v1927 = vmul.f32 %v1919, 0.044715
    %v1928 = vmul.f32 %v1920, 0.044715
    %v1929 = vmul.f32 %v1921, 0.044715
    %v1930 = vmul.f32 %v1922, 0.044715
    %v1931 = vmul.f32 %v1923, 0.044715
    %v1932 = vadd.f32 %v1857, %v1924
    %v1933 = vadd.f32 %v1859, %v1925
    %v1934 = vadd.f32 %v1900, %v1926
    %v1935 = vadd.f32 %v1902, %v1927
    %v1936 = vadd.f32 %v1861, %v1928
    %v1937 = vadd.f32 %v1863, %v1929
    %v1938 = vadd.f32 %v1904, %v1930
    %v1939 = vadd.f32 %v1906, %v1931
    %v1940 = vmul.f32 %v1932, 0.7978846
    %v1941 = vmul.f32 %v1933, 0.7978846
    %v1942 = vmul.f32 %v1934, 0.7978846
    %v1943 = vmul.f32 %v1935, 0.7978846
    %v1944 = vmul.f32 %v1936, 0.7978846
    %v1945 = vmul.f32 %v1937, 0.7978846
    %v1946 = vmul.f32 %v1938, 0.7978846
    %v1947 = vmul.f32 %v1939, 0.7978846
    %v1948 = vtanh.pop %v1940
    %v1949 = vtanh.pop %v1941
    %v1950 = vtanh.pop %v1942
    %v1951 = vtanh.pop %v1943
    %v1952 = vtanh.pop %v1944
    %v1953 = vtanh.pop %v1945
    %v1954 = vtanh.pop %v1946
    %v1955 = vtanh.pop %v1947
    %v1956 = vadd.f32 %v1948, 1.0
    %v1957 = vadd.f32 %v1949, 1.0
    %v1958 = vadd.f32 %v1950, 1.0
    %v1959 = vadd.f32 %v1951, 1.0
    %v1960 = vadd.f32 %v1952, 1.0
    %v1961 = vadd.f32 %v1953, 1.0
    %v1962 = vadd.f32 %v1954, 1.0
    %v1963 = vadd.f32 %v1955, 1.0
    %v1964 = vmul.f32 %v1956, 0.5
    %v1965 = vmul.f32 %v1957, 0.5
    %v1966 = vmul.f32 %v1958, 0.5
    %v1967 = vmul.f32 %v1959, 0.5
    %v1968 = vmul.f32 %v1960, 0.5
    %v1969 = vmul.f32 %v1961, 0.5
    %v1970 = vmul.f32 %v1962, 0.5
    %v1971 = vmul.f32 %v1963, 0.5
    %v1972 = vmul.f32 %v1857, %v1964
    %v1973 = vmul.f32 %v1859, %v1965
    %v1974 = vmul.f32 %v1900, %v1966
    %v1975 = vmul.f32 %v1902, %v1967
    %v1976 = vmul.f32 %v1861, %v1968
    %v1977 = vmul.f32 %v1863, %v1969
    %v1978 = vmul.f32 %v1904, %v1970
    %v1979 = vmul.f32 %v1906, %v1971
    %v1980 = vpack.c.bf16 %v1976, %v1972
    %v1981 = vpack.c.bf16 %v1977, %v1973
    %v1982 = vpack.c.bf16 %v1978, %v1974
    %v1983 = vpack.c.bf16 %v1979, %v1975
    %v1984 = vld [vmem:[#allocation15] sm:$0xf]
    %v1985 = vld [vmem:[#allocation15 + $0x4] sm:$0xf]
    %v1986 = vld [vmem:[#allocation15 + $0x8] sm:$0xf]
    %v1987 = vld [vmem:[#allocation15 + $0xc] sm:$0xf]
    %v1988 = vld [vmem:[#allocation15 + $0x10] sm:$0xf]
    %v1989 = vld [vmem:[#allocation15 + $0x14] sm:$0xf]
    %v1990 = vld [vmem:[#allocation15 + $0x18] sm:$0xf]
    %v1991 = vld [vmem:[#allocation15 + $0x1c] sm:$0xf]
    %v1992 = vld [vmem:[#allocation15 + $0x20] sm:$0xf]
    %v1993 = vld [vmem:[#allocation15 + $0x24] sm:$0xf]
    %v1994 = vld [vmem:[#allocation15 + $0x28] sm:$0xf]
    %v1995 = vld [vmem:[#allocation15 + $0x2c] sm:$0xf]
    %v1996 = vld [vmem:[#allocation15 + $0x30] sm:$0xf]
    %v1997 = vld [vmem:[#allocation15 + $0x34] sm:$0xf]
    %v1998 = vld [vmem:[#allocation15 + $0x38] sm:$0xf]
    %v1999 = vld [vmem:[#allocation15 + $0x3c] sm:$0xf]
    %v2000 = vld [vmem:[#allocation15 + $0x40] sm:$0xf]
    %v2001 = vld [vmem:[#allocation15 + $0x44] sm:$0xf]
    %v2002 = vld [vmem:[#allocation15 + $0x48] sm:$0xf]
    %v2003 = vld [vmem:[#allocation15 + $0x4c] sm:$0xf]
    %v2004 = vld [vmem:[#allocation15 + $0x50] sm:$0xf]
    %v2005 = vld [vmem:[#allocation15 + $0x54] sm:$0xf]
    %v2006 = vld [vmem:[#allocation15 + $0x58] sm:$0xf]
    %v2007 = vld [vmem:[#allocation15 + $0x5c] sm:$0xf]
    %v2008 = vld [vmem:[#allocation15 + $0x60] sm:$0xf]
    %v2009 = vld [vmem:[#allocation15 + $0x64] sm:$0xf]
    %v2010 = vld [vmem:[#allocation15 + $0x68] sm:$0xf]
    %v2011 = vld [vmem:[#allocation15 + $0x6c] sm:$0xf]
    %v2012 = vld [vmem:[#allocation15 + $0x70] sm:$0xf]
    %v2013 = vld [vmem:[#allocation15 + $0x74] sm:$0xf]
    %v2014 = vld [vmem:[#allocation15 + $0x78] sm:$0xf]
    %v2015 = vld [vmem:[#allocation15 + $0x7c] sm:$0xf]
    %v2016 = vld [vmem:[#allocation15 + $0x80] sm:$0xf]
    %v2017 = vld [vmem:[#allocation15 + $0x84] sm:$0xf]
    %v2018 = vld [vmem:[#allocation15 + $0x88] sm:$0xf]
    %v2019 = vld [vmem:[#allocation15 + $0x8c] sm:$0xf]
    %v2020 = vld [vmem:[#allocation15 + $0x90] sm:$0xf]
    %v2021 = vld [vmem:[#allocation15 + $0x94] sm:$0xf]
    %v2022 = vld [vmem:[#allocation15 + $0x98] sm:$0xf]
    %v2023 = vld [vmem:[#allocation15 + $0x9c] sm:$0xf]
    %v2024 = vld [vmem:[#allocation15 + $0xa0] sm:$0xf]
    %v2025 = vld [vmem:[#allocation15 + $0xa4] sm:$0xf]
    %v2026 = vld [vmem:[#allocation15 + $0xa8] sm:$0xf]
    %v2027 = vld [vmem:[#allocation15 + $0xac] sm:$0xf]
    %v2028 = vld [vmem:[#allocation15 + $0xb0] sm:$0xf]
    %v2029 = vld [vmem:[#allocation15 + $0xb4] sm:$0xf]
    %v2030 = vld [vmem:[#allocation15 + $0xb8] sm:$0xf]
    %v2031 = vld [vmem:[#allocation15 + $0xbc] sm:$0xf]
    %v2032 = vld [vmem:[#allocation15 + $0xc0] sm:$0xf]
    %v2033 = vld [vmem:[#allocation15 + $0xc4] sm:$0xf]
    %v2034 = vld [vmem:[#allocation15 + $0xc8] sm:$0xf]
    %v2035 = vld [vmem:[#allocation15 + $0xcc] sm:$0xf]
    %v2036 = vld [vmem:[#allocation15 + $0xd0] sm:$0xf]
    %v2037 = vld [vmem:[#allocation15 + $0xd4] sm:$0xf]
    %v2038 = vld [vmem:[#allocation15 + $0xd8] sm:$0xf]
    %v2039 = vld [vmem:[#allocation15 + $0xdc] sm:$0xf]
    %v2040 = vld [vmem:[#allocation15 + $0xe0] sm:$0xf]
    %v2041 = vld [vmem:[#allocation15 + $0xe4] sm:$0xf]
    %v2042 = vld [vmem:[#allocation15 + $0xe8] sm:$0xf]
    %v2043 = vld [vmem:[#allocation15 + $0xec] sm:$0xf]
    %v2044 = vld [vmem:[#allocation15 + $0xf0] sm:$0xf]
    %v2045 = vld [vmem:[#allocation15 + $0xf4] sm:$0xf]
    %v2046 = vld [vmem:[#allocation15 + $0xf8] sm:$0xf]
    %v2047 = vld [vmem:[#allocation15 + $0xfc] sm:$0xf]
    %v2048 = vld [vmem:[%s13] sm:$0x1]
    %v2050 = vlaneseq
    %v2051 = vshrl.u32 %v2050, 7
    %v2052 = vsub.s32 0, %v2051
    %v2053 = vrot.slane %v2048, %v2052
    %v2119 = vunpack.c.l.b16 %v1984
    %v2120 = vunpack.c.l.b16 %v1985
    %v2121 = vunpack.c.l.b16 %v1986
    %v2122 = vunpack.c.l.b16 %v1987
    %v2123 = vunpack.c.l.b16 %v1988
    %v2124 = vunpack.c.l.b16 %v1989
    %v2125 = vunpack.c.l.b16 %v1990
    %v2126 = vunpack.c.l.b16 %v1991
    %v2127 = vunpack.c.l.b16 %v1992
    %v2128 = vunpack.c.l.b16 %v1993
    %v2129 = vunpack.c.l.b16 %v1994
    %v2130 = vunpack.c.l.b16 %v1995
    %v2131 = vunpack.c.l.b16 %v1996
    %v2132 = vunpack.c.l.b16 %v1997
    %v2133 = vunpack.c.l.b16 %v1998
    %v2134 = vunpack.c.l.b16 %v1999
    %v2135 = vunpack.c.l.b16 %v2000
    %v2136 = vunpack.c.l.b16 %v2001
    %v2137 = vunpack.c.l.b16 %v2002
    %v2138 = vunpack.c.l.b16 %v2003
    %v2139 = vunpack.c.l.b16 %v2004
    %v2140 = vunpack.c.l.b16 %v2005
    %v2141 = vunpack.c.l.b16 %v2006
    %v2142 = vunpack.c.l.b16 %v2007
    %v2143 = vunpack.c.l.b16 %v2008
    %v2144 = vunpack.c.l.b16 %v2009
    %v2145 = vunpack.c.l.b16 %v2010
    %v2146 = vunpack.c.l.b16 %v2011
    %v2147 = vunpack.c.l.b16 %v2012
    %v2148 = vunpack.c.l.b16 %v2013
    %v2149 = vunpack.c.l.b16 %v2014
    %v2150 = vunpack.c.l.b16 %v2015
    %v2151 = vunpack.c.l.b16 %v2016
    %v2152 = vunpack.c.l.b16 %v2017
    %v2153 = vunpack.c.l.b16 %v2018
    %v2154 = vunpack.c.l.b16 %v2019
    %v2155 = vunpack.c.l.b16 %v2020
    %v2156 = vunpack.c.l.b16 %v2021
    %v2157 = vunpack.c.l.b16 %v2022
    %v2158 = vunpack.c.l.b16 %v2023
    %v2159 = vunpack.c.l.b16 %v2024
    %v2160 = vunpack.c.l.b16 %v2025
    %v2161 = vunpack.c.l.b16 %v2026
    %v2162 = vunpack.c.l.b16 %v2027
    %v2163 = vunpack.c.l.b16 %v2028
    %v2164 = vunpack.c.l.b16 %v2029
    %v2165 = vunpack.c.l.b16 %v2030
    %v2166 = vunpack.c.l.b16 %v2031
    %v2167 = vunpack.c.l.b16 %v2032
    %v2168 = vunpack.c.l.b16 %v2033
    %v2169 = vunpack.c.l.b16 %v2034
    %v2170 = vunpack.c.l.b16 %v2035
    %v2171 = vunpack.c.l.b16 %v2036
    %v2172 = vunpack.c.l.b16 %v2037
    %v2173 = vunpack.c.l.b16 %v2038
    %v2174 = vunpack.c.l.b16 %v2039
    %v2175 = vunpack.c.l.b16 %v2040
    %v2176 = vunpack.c.l.b16 %v2041
    %v2177 = vunpack.c.l.b16 %v2042
    %v2178 = vunpack.c.l.b16 %v2043
    %v2179 = vunpack.c.l.b16 %v2044
    %v2180 = vunpack.c.l.b16 %v2045
    %v2181 = vunpack.c.l.b16 %v2046
    %v2182 = vunpack.c.l.b16 %v2047
    %v2183 = vpack.c.b16 %v2120, %v2119
    %v2184 = vpack.c.b16 %v2122, %v2121
    %v2185 = vpack.c.b16 %v2124, %v2123
    %v2186 = vpack.c.b16 %v2126, %v2125
    %v2187 = vpack.c.b16 %v2128, %v2127
    %v2188 = vpack.c.b16 %v2130, %v2129
    %v2189 = vpack.c.b16 %v2132, %v2131
    %v2190 = vpack.c.b16 %v2134, %v2133
    %v2191 = vpack.c.b16 %v2136, %v2135
    %v2192 = vpack.c.b16 %v2138, %v2137
    %v2193 = vpack.c.b16 %v2140, %v2139
    %v2194 = vpack.c.b16 %v2142, %v2141
    %v2195 = vpack.c.b16 %v2144, %v2143
    %v2196 = vpack.c.b16 %v2146, %v2145
    %v2197 = vpack.c.b16 %v2148, %v2147
    %v2198 = vpack.c.b16 %v2150, %v2149
    %v2199 = vpack.c.b16 %v2152, %v2151
    %v2200 = vpack.c.b16 %v2154, %v2153
    %v2201 = vpack.c.b16 %v2156, %v2155
    %v2202 = vpack.c.b16 %v2158, %v2157
    %v2203 = vpack.c.b16 %v2160, %v2159
    %v2204 = vpack.c.b16 %v2162, %v2161
    %v2205 = vpack.c.b16 %v2164, %v2163
    %v2206 = vpack.c.b16 %v2166, %v2165
    %v2207 = vpack.c.b16 %v2168, %v2167
    %v2208 = vpack.c.b16 %v2170, %v2169
    %v2209 = vpack.c.b16 %v2172, %v2171
    %v2210 = vpack.c.b16 %v2174, %v2173
    %v2211 = vpack.c.b16 %v2176, %v2175
    %v2212 = vpack.c.b16 %v2178, %v2177
    %v2213 = vpack.c.b16 %v2180, %v2179
    %v2214 = vpack.c.b16 %v2182, %v2181
    %2247 = vmatprep.subr.bf16.mxu0 0
    %2248 = vmatpush1.bf16.msra.mxu0 %v2183
    %2249 = vmatprep.subr.bf16.mxu0 0
    %2250 = vmatpush1.bf16.msra.mxu0 %v2184
    %2251 = vmatprep.subr.bf16.mxu0 0
    %2252 = vmatpush1.bf16.msra.mxu0 %v2185
    %2253 = vmatprep.subr.bf16.mxu0 0
    %2254 = vmatpush1.bf16.msra.mxu0 %v2186
    %2255 = vmatprep.subr.bf16.mxu0 0
    %2256 = vmatpush1.bf16.msra.mxu0 %v2187
    %2257 = vmatprep.subr.bf16.mxu0 0
    %2258 = vmatpush1.bf16.msra.mxu0 %v2188
    %2259 = vmatprep.subr.bf16.mxu0 0
    %2260 = vmatpush1.bf16.msra.mxu0 %v2189
    %2261 = vmatprep.subr.bf16.mxu0 0
    %2262 = vmatpush1.bf16.msra.mxu0 %v2190
    %2263 = vmatprep.subr.bf16.mxu0 0
    %2264 = vmatpush1.bf16.msra.mxu0 %v2191
    %2265 = vmatprep.subr.bf16.mxu0 0
    %2266 = vmatpush1.bf16.msra.mxu0 %v2192
    %2267 = vmatprep.subr.bf16.mxu0 0
    %2268 = vmatpush1.bf16.msra.mxu0 %v2193
    %2269 = vmatprep.subr.bf16.mxu0 0
    %2270 = vmatpush1.bf16.msra.mxu0 %v2194
    %2271 = vmatprep.subr.bf16.mxu0 0
    %2272 = vmatpush1.bf16.msra.mxu0 %v2195
    %2273 = vmatprep.subr.bf16.mxu0 0
    %2274 = vmatpush1.bf16.msra.mxu0 %v2196
    %2275 = vmatprep.subr.bf16.mxu0 0
    %2276 = vmatpush1.bf16.msra.mxu0 %v2197
    %2277 = vmatprep.subr.bf16.mxu0 0
    %2278 = vmatpush1.bf16.msra.mxu0 %v2198
    %2279 = vmatprep.mubr.bf16.mxu0 %v1981
    %2280 = vmatmul.mubr.bf16.gmra.mrb[0].mxu0 %v1980
    %v2281 = vpop.f32.mrb[0].mxu0
    %v2282 = vadd.f32 %v2053, %v2281
    %v2283 = vpop.f32.mrb[0].mxu0
    %v2284 = vpop.f32.mrb[0].mxu0
    %v2285 = vadd.f32 %v2053, %v2284
    %v2286 = vpop.f32.mrb[0].mxu0
    %2287 = vdwg.mxu0
    %2288 = vmatprep.subr.bf16.mxu0 0
    %2289 = vmatpush1.bf16.msra.mxu0 %v2199
    %2290 = vmatprep.subr.bf16.mxu0 0
    %2291 = vmatpush1.bf16.msra.mxu0 %v2200
    %2292 = vmatprep.subr.bf16.mxu0 0
    %2293 = vmatpush1.bf16.msra.mxu0 %v2201
    %2294 = vmatprep.subr.bf16.mxu0 0
    %2295 = vmatpush1.bf16.msra.mxu0 %v2202
    %2296 = vmatprep.subr.bf16.mxu0 0
    %2297 = vmatpush1.bf16.msra.mxu0 %v2203
    %2298 = vmatprep.subr.bf16.mxu0 0
    %2299 = vmatpush1.bf16.msra.mxu0 %v2204
    %2300 = vmatprep.subr.bf16.mxu0 0
    %2301 = vmatpush1.bf16.msra.mxu0 %v2205
    %2302 = vmatprep.subr.bf16.mxu0 0
    %2303 = vmatpush1.bf16.msra.mxu0 %v2206
    %2304 = vmatprep.subr.bf16.mxu0 0
    %2305 = vmatpush1.bf16.msra.mxu0 %v2207
    %2306 = vmatprep.subr.bf16.mxu0 0
    %2307 = vmatpush1.bf16.msra.mxu0 %v2208
    %2308 = vmatprep.subr.bf16.mxu0 0
    %2309 = vmatpush1.bf16.msra.mxu0 %v2209
    %2310 = vmatprep.subr.bf16.mxu0 0
    %2311 = vmatpush1.bf16.msra.mxu0 %v2210
    %2312 = vmatprep.subr.bf16.mxu0 0
    %2313 = vmatpush1.bf16.msra.mxu0 %v2211
    %2314 = vmatprep.subr.bf16.mxu0 0
    %2315 = vmatpush1.bf16.msra.mxu0 %v2212
    %2316 = vmatprep.subr.bf16.mxu0 0
    %2317 = vmatpush1.bf16.msra.mxu0 %v2213
    %2318 = vmatprep.subr.bf16.mxu0 0
    %2319 = vmatpush1.bf16.msra.mxu0 %v2214
    %2320 = vmatprep.mubr.bf16.mxu0 %v1983
    %2321 = vmatmul.mubr.bf16.gmra.mrb[0].mxu0 %v1982
    %v2322 = vpop.f32.mrb[0].mxu0
    %v2323 = vadd.f32 %v2282, %v2322
    %v2324 = vpop.f32.mrb[0].mxu0
    %v2325 = vpop.f32.mrb[0].mxu0
    %v2326 = vadd.f32 %v2285, %v2325
    %v2327 = vpop.f32.mrb[0].mxu0
    %2328 = vdwg.mxu0
    %v2329 = vadd.f32 %v1605, %v2323
    %v2330 = vadd.f32 %v1606, %v2326
    %v2331 = vld [vmem:[%s14] sm:$0x1]
    %v2332 = vld [vmem:[%s15] sm:$0x1]
    %2333 = vadd.xlane.f32.xlu0 %v2329
    %v2334 = vpop.xlane.xlu0 %2333
    %2335 = vadd.xlane.f32.xlu0 %v2330
    %v2336 = vpop.xlane.xlu0 %2335
    %v2337 = vmul.f32 %v2334, %v185
    %v2338 = vmul.f32 %v2336, %v185
    %v2339 = vsub.f32 %v2329, %v2337
    %v2340 = vsub.f32 %v2330, %v2338
    %v2341 = vmul.f32 %v2339, %v2339
    %v2342 = vmul.f32 %v2340, %v2340
    %2343 = vadd.xlane.f32.xlu0 %v2341
    %v2344 = vpop.xlane.xlu0 %2343
    %2345 = vadd.xlane.f32.xlu0 %v2342
    %v2346 = vpop.xlane.xlu0 %2345
    %v2347 = vmul.f32 %v2344, %v185
    %v2348 = vmul.f32 %v2346, %v185
    %v2349 = vadd.f32 %v2347, 1e-12
    %v2350 = vadd.f32 %v2348, 1e-12
    %v2351 = vrsqrt.pop %v2349
    %v2352 = vrsqrt.pop %v2350
    %v2353 = vmul.f32 %v2339, %v2351
    %v2354 = vmul.f32 %v2340, %v2352
    %v2356 = vlaneseq
    %v2357 = vshrl.u32 %v2356, 7
    %v2358 = vsub.s32 0, %v2357
    %v2359 = vrot.slane %v2331, %v2358
    %v2361 = vmul.f32 %v2353, %v2359
    %v2362 = vmul.f32 %v2354, %v2359
    %v2364 = vlaneseq
    %v2365 = vshrl.u32 %v2364, 7
    %v2366 = vsub.s32 0, %v2365
    %v2367 = vrot.slane %v2332, %v2366
    %v2369 = vadd.f32 %v2361, %v2367
    %v2370 = vadd.f32 %v2362, %v2367
    %v2371 = vpack.c.bf16 %v2370, %v2369
    %s2372 = scalar_lea.vmem [#allocation11], 192
    %v2373 = vld [vmem:[%s2372] sm:$0xff]
    %v2374 = vld [vmem:[%s2372 + $0x8] sm:$0xf]
    %v2375 = vld [vmem:[%s2372 + $0xc] sm:$0xff]
    %v2376 = vld [vmem:[%s2372 + $0x14] sm:$0xf]
    %v2377 = vld [vmem:[%s2372 + $0x18] sm:$0xff]
    %v2378 = vld [vmem:[%s2372 + $0x20] sm:$0xf]
    %v2379 = vld [vmem:[%s2372 + $0x24] sm:$0xff]
    %v2380 = vld [vmem:[%s2372 + $0x2c] sm:$0xf]
    %v2381 = vld [vmem:[%s2372 + $0x30] sm:$0xff]
    %v2382 = vld [vmem:[%s2372 + $0x38] sm:$0xf]
    %v2383 = vld [vmem:[%s2372 + $0x3c] sm:$0xff]
    %v2384 = vld [vmem:[%s2372 + $0x44] sm:$0xf]
    %v2385 = vld [vmem:[%s2372 + $0x48] sm:$0xff]
    %v2386 = vld [vmem:[%s2372 + $0x50] sm:$0xf]
    %v2387 = vld [vmem:[%s2372 + $0x54] sm:$0xff]
    %v2388 = vld [vmem:[%s2372 + $0x5c] sm:$0xf]
    %v2389 = vld [vmem:[%s2372 + $0x60] sm:$0xff]
    %v2390 = vld [vmem:[%s2372 + $0x68] sm:$0xf]
    %v2391 = vld [vmem:[%s2372 + $0x6c] sm:$0xff]
    %v2392 = vld [vmem:[%s2372 + $0x74] sm:$0xf]
    %v2393 = vld [vmem:[%s2372 + $0x78] sm:$0xff]
    %v2394 = vld [vmem:[%s2372 + $0x80] sm:$0xf]
    %v2395 = vld [vmem:[%s2372 + $0x84] sm:$0xff]
    %v2396 = vld [vmem:[%s2372 + $0x8c] sm:$0xf]
    %v2397 = vld [vmem:[%s2372 + $0x90] sm:$0xff]
    %v2398 = vld [vmem:[%s2372 + $0x98] sm:$0xf]
    %v2399 = vld [vmem:[%s2372 + $0x9c] sm:$0xff]
    %v2400 = vld [vmem:[%s2372 + $0xa4] sm:$0xf]
    %v2401 = vld [vmem:[%s2372 + $0xa8] sm:$0xff]
    %v2402 = vld [vmem:[%s2372 + $0xb0] sm:$0xf]
    %v2403 = vld [vmem:[%s2372 + $0xb4] sm:$0xff]
    %v2404 = vld [vmem:[%s2372 + $0xbc] sm:$0xf]
    %s2405 = scalar_lea.vmem %s5, 3
    %v2406 = vld [vmem:[%s2405] sm:$0x7]
    %v2408 = vlaneseq
    %v2409 = vshrl.u32 %v2408, 7
    %v2410 = vsub.s32 0, %v2409
    %v2411 = vrot.slane %v2406, %v2410
    %v2412 = vlaneseq
    %v2413 = vshrl.u32 %v2412, 7
    %v2414 = vsub.s32 1, %v2413
    %v2415 = vrot.slane %v2406, %v2414
    %v2416 = vlaneseq
    %v2417 = vshrl.u32 %v2416, 7
    %v2418 = vsub.s32 2, %v2417
    %v2419 = vrot.slane %v2406, %v2418
    %v2455 = vunpack.c.l.b16 %v2373
    %v2456 = vunpack.c.h.b16 %v2373
    %v2457 = vunpack.c.l.b16 %v2374
    %v2458 = vunpack.c.l.b16 %v2375
    %v2459 = vunpack.c.h.b16 %v2375
    %v2460 = vunpack.c.l.b16 %v2376
    %v2461 = vunpack.c.l.b16 %v2377
    %v2462 = vunpack.c.h.b16 %v2377
    %v2463 = vunpack.c.l.b16 %v2378
    %v2464 = vunpack.c.l.b16 %v2379
    %v2465 = vunpack.c.h.b16 %v2379
    %v2466 = vunpack.c.l.b16 %v2380
    %v2467 = vunpack.c.l.b16 %v2381
    %v2468 = vunpack.c.h.b16 %v2381
    %v2469 = vunpack.c.l.b16 %v2382
    %v2470 = vunpack.c.l.b16 %v2383
    %v2471 = vunpack.c.h.b16 %v2383
    %v2472 = vunpack.c.l.b16 %v2384
    %v2473 = vunpack.c.l.b16 %v2385
    %v2474 = vunpack.c.h.b16 %v2385
    %v2475 = vunpack.c.l.b16 %v2386
    %v2476 = vunpack.c.l.b16 %v2387
    %v2477 = vunpack.c.h.b16 %v2387
    %v2478 = vunpack.c.l.b16 %v2388
    %v2479 = vunpack.c.l.b16 %v2389
    %v2480 = vunpack.c.h.b16 %v2389
    %v2481 = vunpack.c.l.b16 %v2390
    %v2482 = vunpack.c.l.b16 %v2391
    %v2483 = vunpack.c.h.b16 %v2391
    %v2484 = vunpack.c.l.b16 %v2392
    %v2485 = vunpack.c.l.b16 %v2393
    %v2486 = vunpack.c.h.b16 %v2393
    %v2487 = vunpack.c.l.b16 %v2394
    %v2488 = vunpack.c.l.b16 %v2395
    %v2489 = vunpack.c.h.b16 %v2395
    %v2490 = vunpack.c.l.b16 %v2396
    %v2491 = vunpack.c.l.b16 %v2397
    %v2492 = vunpack.c.h.b16 %v2397
    %v2493 = vunpack.c.l.b16 %v2398
    %v2494 = vunpack.c.l.b16 %v2399
    %v2495 = vunpack.c.h.b16 %v2399
    %v2496 = vunpack.c.l.b16 %v2400
    %v2497 = vunpack.c.l.b16 %v2401
    %v2498 = vunpack.c.h.b16 %v2401
    %v2499 = vunpack.c.l.b16 %v2402
    %v2500 = vunpack.c.l.b16 %v2403
    %v2501 = vunpack.c.h.b16 %v2403
    %v2502 = vunpack.c.l.b16 %v2404
    %v2503 = vpack.c.b16 %v2458, %v2455
    %v2504 = vpack.c.b16 %v2459, %v2456
    %v2505 = vpack.c.b16 %v2460, %v2457
    %v2506 = vpack.c.b16 %v2464, %v2461
    %v2507 = vpack.c.b16 %v2465, %v2462
    %v2508 = vpack.c.b16 %v2466, %v2463
    %v2509 = vpack.c.b16 %v2470, %v2467
    %v2510 = vpack.c.b16 %v2471, %v2468
    %v2511 = vpack.c.b16 %v2472, %v2469
    %v2512 = vpack.c.b16 %v2476, %v2473
    %v2513 = vpack.c.b16 %v2477, %v2474
    %v2514 = vpack.c.b16 %v2478, %v2475
    %v2515 = vpack.c.b16 %v2482, %v2479
    %v2516 = vpack.c.b16 %v2483, %v2480
    %v2517 = vpack.c.b16 %v2484, %v2481
    %v2518 = vpack.c.b16 %v2488, %v2485
    %v2519 = vpack.c.b16 %v2489, %v2486
    %v2520 = vpack.c.b16 %v2490, %v2487
    %v2521 = vpack.c.b16 %v2494, %v2491
    %v2522 = vpack.c.b16 %v2495, %v2492
    %v2523 = vpack.c.b16 %v2496, %v2493
    %v2524 = vpack.c.b16 %v2500, %v2497
    %v2525 = vpack.c.b16 %v2501, %v2498
    %v2526 = vpack.c.b16 %v2502, %v2499
    %2551 = vmatprep.subr.bf16.mxu0 %v2504
    %2552 = vmatpush1.bf16.msra.mxu0 %v2503
    %2553 = vmatprep.subr.bf16.mxu0 %v2507
    %2554 = vmatpush1.bf16.msra.mxu0 %v2506
    %2555 = vmatprep.subr.bf16.mxu0 %v2510
    %2556 = vmatpush1.bf16.msra.mxu0 %v2509
    %2557 = vmatprep.subr.bf16.mxu0 %v2513
    %2558 = vmatpush1.bf16.msra.mxu0 %v2512
    %2559 = vmatprep.subr.bf16.mxu0 %v2516
    %2560 = vmatpush1.bf16.msra.mxu0 %v2515
    %2561 = vmatprep.subr.bf16.mxu0 %v2519
    %2562 = vmatpush1.bf16.msra.mxu0 %v2518
    %2563 = vmatprep.subr.bf16.mxu0 %v2522
    %2564 = vmatpush1.bf16.msra.mxu0 %v2521
    %2565 = vmatprep.subr.bf16.mxu0 %v2525
    %2566 = vmatpush1.bf16.msra.mxu0 %v2524
    %2567 = vmatprep.subr.bf16.mxu0 0
    %2568 = vmatpush1.bf16.msra.mxu0 0
    %2569 = vmatprep.subr.bf16.mxu0 0
    %2570 = vmatpush1.bf16.msra.mxu0 0
    %2571 = vmatprep.subr.bf16.mxu0 0
    %2572 = vmatpush1.bf16.msra.mxu0 0
    %2573 = vmatprep.subr.bf16.mxu0 0
    %2574 = vmatpush1.bf16.msra.mxu0 0
    %2575 = vmatprep.subr.bf16.mxu0 0
    %2576 = vmatpush1.bf16.msra.mxu0 0
    %2577 = vmatprep.subr.bf16.mxu0 0
    %2578 = vmatpush1.bf16.msra.mxu0 0
    %2579 = vmatprep.subr.bf16.mxu0 0
    %2580 = vmatpush1.bf16.msra.mxu0 0
    %2581 = vmatprep.subr.bf16.mxu0 0
    %2582 = vmatpush1.bf16.msra.mxu0 0
    %2583 = vmatprep.mubr.bf16.mxu0 0
    %2584 = vmatmul.mubr.bf16.gmra.mrb[0].mxu0 %v2371
    %v2585 = vpop.f32.mrb[0].mxu0
    %v2586 = vadd.f32 %v2411, %v2585
    %v2587 = vpop.f32.mrb[0].mxu0
    %v2588 = vadd.f32 %v2415, %v2587
    %v2589 = vpop.f32.mrb[0].mxu0
    %v2590 = vadd.f32 %v2411, %v2589
    %v2591 = vpop.f32.mrb[0].mxu0
    %v2592 = vadd.f32 %v2415, %v2591
    %2593 = vdwg.mxu0
    %2594 = vmatprep.subr.bf16.mxu0 0
    %2595 = vmatpush1.bf16.msra.mxu0 %v2505
    %2596 = vmatprep.subr.bf16.mxu0 0
    %2597 = vmatpush1.bf16.msra.mxu0 %v2508
    %2598 = vmatprep.subr.bf16.mxu0 0
    %2599 = vmatpush1.bf16.msra.mxu0 %v2511
    %2600 = vmatprep.subr.bf16.mxu0 0
    %2601 = vmatpush1.bf16.msra.mxu0 %v2514
    %2602 = vmatprep.subr.bf16.mxu0 0
    %2603 = vmatpush1.bf16.msra.mxu0 %v2517
    %2604 = vmatprep.subr.bf16.mxu0 0
    %2605 = vmatpush1.bf16.msra.mxu0 %v2520
    %2606 = vmatprep.subr.bf16.mxu0 0
    %2607 = vmatpush1.bf16.msra.mxu0 %v2523
    %2608 = vmatprep.subr.bf16.mxu0 0
    %2609 = vmatpush1.bf16.msra.mxu0 %v2526
    %2610 = vmatprep.subr.bf16.mxu0 0
    %2611 = vmatpush1.bf16.msra.mxu0 0
    %2612 = vmatprep.subr.bf16.mxu0 0
    %2613 = vmatpush1.bf16.msra.mxu0 0
    %2614 = vmatprep.subr.bf16.mxu0 0
    %2615 = vmatpush1.bf16.msra.mxu0 0
    %2616 = vmatprep.subr.bf16.mxu0 0
    %2617 = vmatpush1.bf16.msra.mxu0 0
    %2618 = vmatprep.subr.bf16.mxu0 0
    %2619 = vmatpush1.bf16.msra.mxu0 0
    %2620 = vmatprep.subr.bf16.mxu0 0
    %2621 = vmatpush1.bf16.msra.mxu0 0
    %2622 = vmatprep.subr.bf16.mxu0 0
    %2623 = vmatpush1.bf16.msra.mxu0 0
    %2624 = vmatprep.subr.bf16.mxu0 0
    %2625 = vmatpush1.bf16.msra.mxu0 0
    %2626 = vmatprep.mubr.bf16.mxu0 0
    %2627 = vmatmul.mubr.bf16.gmra.mrb[0].mxu0 %v2371
    %v2628 = vpop.f32.mrb[0].mxu0
    %v2629 = vadd.f32 %v2419, %v2628
    %v2630 = vpop.f32.mrb[0].mxu0
    %v2631 = vpop.f32.mrb[0].mxu0
    %v2632 = vadd.f32 %v2419, %v2631
    %v2633 = vpop.f32.mrb[0].mxu0
    %2634 = vdwg.mxu0
    %v2635 = vpack.c.bf16 %v2586, %v2586
    %v2636 = vpack.c.bf16 %v2590, %v2590
    %v2637 = vpack.c.bf16 %v2588, %v2588
    %v2638 = vpack.c.bf16 %v2592, %v2592
    %v2639 = vpack.c.bf16 %v2629, %v2629
    %v2640 = vpack.c.bf16 %v2632, %v2632
    %v2642 = vsel %vm512, %v2635, 0
    %v2645 = vsel %vm512, %v2637, 0
    %2647 = vmatprep.subr.bf16.mxu0 0
    %2648 = vmatpush1.bf16.xpose.msra.mxu0 %v2645
    %2649 = vmatprep.subr.bf16.mxu0 0
    %2650 = vmatpush1.bf16.xpose.msra.mxu0 0
    %2651 = vmatprep.subr.bf16.mxu0 0
    %2652 = vmatpush1.bf16.xpose.msra.mxu0 0
    %2653 = vmatprep.subr.bf16.mxu0 0
    %2654 = vmatpush1.bf16.xpose.msra.mxu0 0
    %2655 = vmatprep.subr.bf16.mxu0 0
    %2656 = vmatpush1.bf16.xpose.msra.mxu0 0
    %2657 = vmatprep.subr.bf16.mxu0 0
    %2658 = vmatpush1.bf16.xpose.msra.mxu0 0
    %2659 = vmatprep.subr.bf16.mxu0 0
    %2660 = vmatpush1.bf16.xpose.msra.mxu0 0
    %2661 = vmatprep.subr.bf16.mxu0 0
    %2662 = vmatpush1.bf16.xpose.msra.mxu0 0
    %2663 = vmatprep.subr.bf16.mxu0 0
    %2664 = vmatpush1.bf16.xpose.msra.mxu0 0
    %2665 = vmatprep.subr.bf16.mxu0 0
    %2666 = vmatpush1.bf16.xpose.msra.mxu0 0
    %2667 = vmatprep.subr.bf16.mxu0 0
    %2668 = vmatpush1.bf16.xpose.msra.mxu0 0
    %2669 = vmatprep.subr.bf16.mxu0 0
    %2670 = vmatpush1.bf16.xpose.msra.mxu0 0
    %2671 = vmatprep.subr.bf16.mxu0 0
    %2672 = vmatpush1.bf16.xpose.msra.mxu0 0
    %2673 = vmatprep.subr.bf16.mxu0 0
    %2674 = vmatpush1.bf16.xpose.msra.mxu0 0
    %2675 = vmatprep.subr.bf16.mxu0 0
    %2676 = vmatpush1.bf16.xpose.msra.mxu0 0
    %2677 = vmatprep.subr.bf16.mxu0 0
    %2678 = vmatpush1.bf16.xpose.msra.mxu0 0
    %2679 = vmatprep.mubr.bf16.mxu0 0
    %2680 = vmatmul.mubr.bf16.gmra.mrb[0].mxu0 %v2642
    %v2681 = vpop.f32.mrb[0].mxu0
    %v2682 = vadd.f32 0.0, %v2681
    %v2683 = vpop.f32.mrb[0].mxu0
    %v2684 = vpop.f32.mrb[0].mxu0
    %v2685 = vpop.f32.mrb[0].mxu0
    %2686 = vdwg.mxu0
    %v2688 = vsel %vm512, %v2636, 0
    %v2691 = vsel %vm512, %v2638, 0
    %2693 = vmatprep.subr.bf16.mxu0 0
    %2694 = vmatpush1.bf16.xpose.msra.mxu0 %v2691
    %2695 = vmatprep.subr.bf16.mxu0 0
    %2696 = vmatpush1.bf16.xpose.msra.mxu0 0
    %2697 = vmatprep.subr.bf16.mxu0 0
    %2698 = vmatpush1.bf16.xpose.msra.mxu0 0
    %2699 = vmatprep.subr.bf16.mxu0 0
    %2700 = vmatpush1.bf16.xpose.msra.mxu0 0
    %2701 = vmatprep.subr.bf16.mxu0 0
    %2702 = vmatpush1.bf16.xpose.msra.mxu0 0
    %2703 = vmatprep.subr.bf16.mxu0 0
    %2704 = vmatpush1.bf16.xpose.msra.mxu0 0
    %2705 = vmatprep.subr.bf16.mxu0 0
    %2706 = vmatpush1.bf16.xpose.msra.mxu0 0
    %2707 = vmatprep.subr.bf16.mxu0 0
    %2708 = vmatpush1.bf16.xpose.msra.mxu0 0
    %2709 = vmatprep.subr.bf16.mxu0 0
    %2710 = vmatpush1.bf16.xpose.msra.mxu0 0
    %2711 = vmatprep.subr.bf16.mxu0 0
    %2712 = vmatpush1.bf16.xpose.msra.mxu0 0
    %2713 = vmatprep.subr.bf16.mxu0 0
    %2714 = vmatpush1.bf16.xpose.msra.mxu0 0
    %2715 = vmatprep.subr.bf16.mxu0 0
    %2716 = vmatpush1.bf16.xpose.msra.mxu0 0
    %2717 = vmatprep.subr.bf16.mxu0 0
    %2718 = vmatpush1.bf16.xpose.msra.mxu0 0
    %2719 = vmatprep.subr.bf16.mxu0 0
    %2720 = vmatpush1.bf16.xpose.msra.mxu0 0
    %2721 = vmatprep.subr.bf16.mxu0 0
    %2722 = vmatpush1.bf16.xpose.msra.mxu0 0
    %2723 = vmatprep.subr.bf16.mxu0 0
    %2724 = vmatpush1.bf16.xpose.msra.mxu0 0
    %2725 = vmatprep.mubr.bf16.mxu0 0
    %2726 = vmatmul.mubr.bf16.gmra.mrb[0].mxu0 %v2688
    %v2727 = vpop.f32.mrb[0].mxu0
    %v2728 = vadd.f32 0.0, %v2727
    %v2729 = vpop.f32.mrb[0].mxu0
    %v2730 = vpop.f32.mrb[0].mxu0
    %v2731 = vpop.f32.mrb[0].mxu0
    %2732 = vdwg.mxu0
    %v2733 = vmul.f32 %v2682, 0.17677669
    %v2734 = vmul.f32 %v2728, 0.17677669
    %v2735 = vadd.f32 %v2733, %v610
    %v2736 = vadd.f32 %v2734, %v614
    %v2737 = vsel %vm619, %v2735, -inf
    %2738 = vmax.xlane.f32.xlu0 %v2737
    %v2739 = vpop.xlane.xlu0 %2738
    %v2740 = vsel %vm619, %v2736, -inf
    %2741 = vmax.xlane.f32.xlu0 %v2740
    %v2742 = vpop.xlane.xlu0 %2741
    %v2743 = vsub.f32 %v2735, %v2739
    %v2744 = vsub.f32 %v2736, %v2742
    %v2745 = vmul.f32 %v2743, 1.442695
    %v2746 = vpow.pop %v2745
    %v2747 = vmul.f32 %v2744, 1.442695
    %v2748 = vpow.pop %v2747
    %v2749 = vsel %vm619, %v2746, 0.0
    %2750 = vadd.xlane.f32.xlu0 %v2749
    %v2751 = vpop.xlane.xlu0 %2750
    %v2752 = vsel %vm619, %v2748, 0.0
    %2753 = vadd.xlane.f32.xlu0 %v2752
    %v2754 = vpop.xlane.xlu0 %2753
    %v2755 = vrcp.pop %v2751
    %v2756 = vrcp.pop %v2754
    %v2757 = vmul.f32 %v2746, %v2755
    %v2758 = vmul.f32 %v2748, %v2756
    %v2759 = vpack.c.bf16 %v2757, %v2757
    %v2760 = vpack.c.bf16 %v2758, %v2758
    %v2762 = vsel %vm619, %v2759, 0
    %v2765 = vsel %vm647, %v2639, 0
    %2767 = vmatprep.subr.bf16.mxu0 0
    %2768 = vmatpush1.bf16.msra.mxu0 %v2765
    %2769 = vmatprep.subr.bf16.mxu0 0
    %2770 = vmatpush1.bf16.msra.mxu0 0
    %2771 = vmatprep.subr.bf16.mxu0 0
    %2772 = vmatpush1.bf16.msra.mxu0 0
    %2773 = vmatprep.subr.bf16.mxu0 0
    %2774 = vmatpush1.bf16.msra.mxu0 0
    %2775 = vmatprep.subr.bf16.mxu0 0
    %2776 = vmatpush1.bf16.msra.mxu0 0
    %2777 = vmatprep.subr.bf16.mxu0 0
    %2778 = vmatpush1.bf16.msra.mxu0 0
    %2779 = vmatprep.subr.bf16.mxu0 0
    %2780 = vmatpush1.bf16.msra.mxu0 0
    %2781 = vmatprep.subr.bf16.mxu0 0
    %2782 = vmatpush1.bf16.msra.mxu0 0
    %2783 = vmatprep.subr.bf16.mxu0 0
    %2784 = vmatpush1.bf16.msra.mxu0 0
    %2785 = vmatprep.subr.bf16.mxu0 0
    %2786 = vmatpush1.bf16.msra.mxu0 0
    %2787 = vmatprep.subr.bf16.mxu0 0
    %2788 = vmatpush1.bf16.msra.mxu0 0
    %2789 = vmatprep.subr.bf16.mxu0 0
    %2790 = vmatpush1.bf16.msra.mxu0 0
    %2791 = vmatprep.subr.bf16.mxu0 0
    %2792 = vmatpush1.bf16.msra.mxu0 0
    %2793 = vmatprep.subr.bf16.mxu0 0
    %2794 = vmatpush1.bf16.msra.mxu0 0
    %2795 = vmatprep.subr.bf16.mxu0 0
    %2796 = vmatpush1.bf16.msra.mxu0 0
    %2797 = vmatprep.subr.bf16.mxu0 0
    %2798 = vmatpush1.bf16.msra.mxu0 0
    %2799 = vmatprep.mubr.bf16.mxu0 0
    %2800 = vmatmul.mubr.bf16.gmra.mrb[0].mxu0 %v2762
    %v2801 = vpop.f32.mrb[0].mxu0
    %v2802 = vadd.f32 0.0, %v2801
    %v2803 = vpop.f32.mrb[0].mxu0
    %v2804 = vpop.f32.mrb[0].mxu0
    %v2805 = vpop.f32.mrb[0].mxu0
    %2806 = vdwg.mxu0
    %v2808 = vsel %vm619, %v2760, 0
    %v2811 = vsel %vm647, %v2640, 0
    %2813 = vmatprep.subr.bf16.mxu0 0
    %2814 = vmatpush1.bf16.msra.mxu0 %v2811
    %2815 = vmatprep.subr.bf16.mxu0 0
    %2816 = vmatpush1.bf16.msra.mxu0 0
    %2817 = vmatprep.subr.bf16.mxu0 0
    %2818 = vmatpush1.bf16.msra.mxu0 0
    %2819 = vmatprep.subr.bf16.mxu0 0
    %2820 = vmatpush1.bf16.msra.mxu0 0
    %2821 = vmatprep.subr.bf16.mxu0 0
    %2822 = vmatpush1.bf16.msra.mxu0 0
    %2823 = vmatprep.subr.bf16.mxu0 0
    %2824 = vmatpush1.bf16.msra.mxu0 0
    %2825 = vmatprep.subr.bf16.mxu0 0
    %2826 = vmatpush1.bf16.msra.mxu0 0
    %2827 = vmatprep.subr.bf16.mxu0 0
    %2828 = vmatpush1.bf16.msra.mxu0 0
    %2829 = vmatprep.subr.bf16.mxu0 0
    %2830 = vmatpush1.bf16.msra.mxu0 0
    %2831 = vmatprep.subr.bf16.mxu0 0
    %2832 = vmatpush1.bf16.msra.mxu0 0
    %2833 = vmatprep.subr.bf16.mxu0 0
    %2834 = vmatpush1.bf16.msra.mxu0 0
    %2835 = vmatprep.subr.bf16.mxu0 0
    %2836 = vmatpush1.bf16.msra.mxu0 0
    %2837 = vmatprep.subr.bf16.mxu0 0
    %2838 = vmatpush1.bf16.msra.mxu0 0
    %2839 = vmatprep.subr.bf16.mxu0 0
    %2840 = vmatpush1.bf16.msra.mxu0 0
    %2841 = vmatprep.subr.bf16.mxu0 0
    %2842 = vmatpush1.bf16.msra.mxu0 0
    %2843 = vmatprep.subr.bf16.mxu0 0
    %2844 = vmatpush1.bf16.msra.mxu0 0
    %2845 = vmatprep.mubr.bf16.mxu0 0
    %2846 = vmatmul.mubr.bf16.gmra.mrb[0].mxu0 %v2808
    %v2847 = vpop.f32.mrb[0].mxu0
    %v2848 = vadd.f32 0.0, %v2847
    %v2849 = vpop.f32.mrb[0].mxu0
    %v2850 = vpop.f32.mrb[0].mxu0
    %v2851 = vpop.f32.mrb[0].mxu0
    %2852 = vdwg.mxu0
    %2853 = vst.msk [vmem:[#allocation2] sm:$0xff] %vm512, %v2802
    %2854 = vst.msk [vmem:[#allocation2 + $0x8] sm:$0xff] %vm512, %v2848
    %2856 = vrot.lane.b32.xlu0 %v2635, 96
    %v2857 = vpop.permute.xlu0 %2856
    %2859 = vrot.lane.b32.xlu0 %v2637, 96
    %v2860 = vpop.permute.xlu0 %2859
    %v2862 = vsel %vm512, %v2857, 0
    %v2865 = vsel %vm512, %v2860, 0
    %2867 = vmatprep.subr.bf16.mxu0 0
    %2868 = vmatpush1.bf16.xpose.msra.mxu0 %v2865
    %2869 = vmatprep.subr.bf16.mxu0 0
    %2870 = vmatpush1.bf16.xpose.msra.mxu0 0
    %2871 = vmatprep.subr.bf16.mxu0 0
    %2872 = vmatpush1.bf16.xpose.msra.mxu0 0
    %2873 = vmatprep.subr.bf16.mxu0 0
    %2874 = vmatpush1.bf16.xpose.msra.mxu0 0
    %2875 = vmatprep.subr.bf16.mxu0 0
    %2876 = vmatpush1.bf16.xpose.msra.mxu0 0
    %2877 = vmatprep.subr.bf16.mxu0 0
    %2878 = vmatpush1.bf16.xpose.msra.mxu0 0
    %2879 = vmatprep.subr.bf16.mxu0 0
    %2880 = vmatpush1.bf16.xpose.msra.mxu0 0
    %2881 = vmatprep.subr.bf16.mxu0 0
    %2882 = vmatpush1.bf16.xpose.msra.mxu0 0
    %2883 = vmatprep.subr.bf16.mxu0 0
    %2884 = vmatpush1.bf16.xpose.msra.mxu0 0
    %2885 = vmatprep.subr.bf16.mxu0 0
    %2886 = vmatpush1.bf16.xpose.msra.mxu0 0
    %2887 = vmatprep.subr.bf16.mxu0 0
    %2888 = vmatpush1.bf16.xpose.msra.mxu0 0
    %2889 = vmatprep.subr.bf16.mxu0 0
    %2890 = vmatpush1.bf16.xpose.msra.mxu0 0
    %2891 = vmatprep.subr.bf16.mxu0 0
    %2892 = vmatpush1.bf16.xpose.msra.mxu0 0
    %2893 = vmatprep.subr.bf16.mxu0 0
    %2894 = vmatpush1.bf16.xpose.msra.mxu0 0
    %2895 = vmatprep.subr.bf16.mxu0 0
    %2896 = vmatpush1.bf16.xpose.msra.mxu0 0
    %2897 = vmatprep.subr.bf16.mxu0 0
    %2898 = vmatpush1.bf16.xpose.msra.mxu0 0
    %2899 = vmatprep.mubr.bf16.mxu0 0
    %2900 = vmatmul.mubr.bf16.gmra.mrb[0].mxu0 %v2862
    %v2901 = vpop.f32.mrb[0].mxu0
    %v2902 = vadd.f32 0.0, %v2901
    %v2903 = vpop.f32.mrb[0].mxu0
    %v2904 = vpop.f32.mrb[0].mxu0
    %v2905 = vpop.f32.mrb[0].mxu0
    %2906 = vdwg.mxu0
    %2908 = vrot.lane.b32.xlu0 %v2636, 96
    %v2909 = vpop.permute.xlu0 %2908
    %2911 = vrot.lane.b32.xlu0 %v2638, 96
    %v2912 = vpop.permute.xlu0 %2911
    %v2914 = vsel %vm512, %v2909, 0
    %v2917 = vsel %vm512, %v2912, 0
    %2919 = vmatprep.subr.bf16.mxu0 0
    %2920 = vmatpush1.bf16.xpose.msra.mxu0 %v2917
    %2921 = vmatprep.subr.bf16.mxu0 0
    %2922 = vmatpush1.bf16.xpose.msra.mxu0 0
    %2923 = vmatprep.subr.bf16.mxu0 0
    %2924 = vmatpush1.bf16.xpose.msra.mxu0 0
    %2925 = vmatprep.subr.bf16.mxu0 0
    %2926 = vmatpush1.bf16.xpose.msra.mxu0 0
    %2927 = vmatprep.subr.bf16.mxu0 0
    %2928 = vmatpush1.bf16.xpose.msra.mxu0 0
    %2929 = vmatprep.subr.bf16.mxu0 0
    %2930 = vmatpush1.bf16.xpose.msra.mxu0 0
    %2931 = vmatprep.subr.bf16.mxu0 0
    %2932 = vmatpush1.bf16.xpose.msra.mxu0 0
    %2933 = vmatprep.subr.bf16.mxu0 0
    %2934 = vmatpush1.bf16.xpose.msra.mxu0 0
    %2935 = vmatprep.subr.bf16.mxu0 0
    %2936 = vmatpush1.bf16.xpose.msra.mxu0 0
    %2937 = vmatprep.subr.bf16.mxu0 0
    %2938 = vmatpush1.bf16.xpose.msra.mxu0 0
    %2939 = vmatprep.subr.bf16.mxu0 0
    %2940 = vmatpush1.bf16.xpose.msra.mxu0 0
    %2941 = vmatprep.subr.bf16.mxu0 0
    %2942 = vmatpush1.bf16.xpose.msra.mxu0 0
    %2943 = vmatprep.subr.bf16.mxu0 0
    %2944 = vmatpush1.bf16.xpose.msra.mxu0 0
    %2945 = vmatprep.subr.bf16.mxu0 0
    %2946 = vmatpush1.bf16.xpose.msra.mxu0 0
    %2947 = vmatprep.subr.bf16.mxu0 0
    %2948 = vmatpush1.bf16.xpose.msra.mxu0 0
    %2949 = vmatprep.subr.bf16.mxu0 0
    %2950 = vmatpush1.bf16.xpose.msra.mxu0 0
    %2951 = vmatprep.mubr.bf16.mxu0 0
    %2952 = vmatmul.mubr.bf16.gmra.mrb[0].mxu0 %v2914
    %v2953 = vpop.f32.mrb[0].mxu0
    %v2954 = vadd.f32 0.0, %v2953
    %v2955 = vpop.f32.mrb[0].mxu0
    %v2956 = vpop.f32.mrb[0].mxu0
    %v2957 = vpop.f32.mrb[0].mxu0
    %2958 = vdwg.mxu0
    %v2959 = vmul.f32 %v2902, 0.17677669
    %v2960 = vmul.f32 %v2954, 0.17677669
    %v2961 = vadd.f32 %v2959, %v610
    %v2962 = vadd.f32 %v2960, %v614
    %v2963 = vsel %vm619, %v2961, -inf
    %2964 = vmax.xlane.f32.xlu0 %v2963
    %v2965 = vpop.xlane.xlu0 %2964
    %v2966 = vsel %vm619, %v2962, -inf
    %2967 = vmax.xlane.f32.xlu0 %v2966
    %v2968 = vpop.xlane.xlu0 %2967
    %v2969 = vsub.f32 %v2961, %v2965
    %v2970 = vsub.f32 %v2962, %v2968
    %v2971 = vmul.f32 %v2969, 1.442695
    %v2972 = vpow.pop %v2971
    %v2973 = vmul.f32 %v2970, 1.442695
    %v2974 = vpow.pop %v2973
    %v2975 = vsel %vm619, %v2972, 0.0
    %2976 = vadd.xlane.f32.xlu0 %v2975
    %v2977 = vpop.xlane.xlu0 %2976
    %v2978 = vsel %vm619, %v2974, 0.0
    %2979 = vadd.xlane.f32.xlu0 %v2978
    %v2980 = vpop.xlane.xlu0 %2979
    %v2981 = vrcp.pop %v2977
    %v2982 = vrcp.pop %v2980
    %v2983 = vmul.f32 %v2972, %v2981
    %v2984 = vmul.f32 %v2974, %v2982
    %v2985 = vpack.c.bf16 %v2983, %v2983
    %v2986 = vpack.c.bf16 %v2984, %v2984
    %2988 = vrot.lane.b32.xlu0 %v2639, 96
    %v2989 = vpop.permute.xlu0 %2988
    %v2991 = vsel %vm619, %v2985, 0
    %v2994 = vsel %vm647, %v2989, 0
    %2996 = vmatprep.subr.bf16.mxu0 0
    %2997 = vmatpush1.bf16.msra.mxu0 %v2994
    %2998 = vmatprep.subr.bf16.mxu0 0
    %2999 = vmatpush1.bf16.msra.mxu0 0
    %3000 = vmatprep.subr.bf16.mxu0 0
    %3001 = vmatpush1.bf16.msra.mxu0 0
    %3002 = vmatprep.subr.bf16.mxu0 0
    %3003 = vmatpush1.bf16.msra.mxu0 0
    %3004 = vmatprep.subr.bf16.mxu0 0
    %3005 = vmatpush1.bf16.msra.mxu0 0
    %3006 = vmatprep.subr.bf16.mxu0 0
    %3007 = vmatpush1.bf16.msra.mxu0 0
    %3008 = vmatprep.subr.bf16.mxu0 0
    %3009 = vmatpush1.bf16.msra.mxu0 0
    %3010 = vmatprep.subr.bf16.mxu0 0
    %3011 = vmatpush1.bf16.msra.mxu0 0
    %3012 = vmatprep.subr.bf16.mxu0 0
    %3013 = vmatpush1.bf16.msra.mxu0 0
    %3014 = vmatprep.subr.bf16.mxu0 0
    %3015 = vmatpush1.bf16.msra.mxu0 0
    %3016 = vmatprep.subr.bf16.mxu0 0
    %3017 = vmatpush1.bf16.msra.mxu0 0
    %3018 = vmatprep.subr.bf16.mxu0 0
    %3019 = vmatpush1.bf16.msra.mxu0 0
    %3020 = vmatprep.subr.bf16.mxu0 0
    %3021 = vmatpush1.bf16.msra.mxu0 0
    %3022 = vmatprep.subr.bf16.mxu0 0
    %3023 = vmatpush1.bf16.msra.mxu0 0
    %3024 = vmatprep.subr.bf16.mxu0 0
    %3025 = vmatpush1.bf16.msra.mxu0 0
    %3026 = vmatprep.subr.bf16.mxu0 0
    %3027 = vmatpush1.bf16.msra.mxu0 0
    %3028 = vmatprep.mubr.bf16.mxu0 0
    %3029 = vmatmul.mubr.bf16.gmra.mrb[0].mxu0 %v2991
    %v3030 = vpop.f32.mrb[0].mxu0
    %v3031 = vadd.f32 0.0, %v3030
    %v3032 = vpop.f32.mrb[0].mxu0
    %v3033 = vpop.f32.mrb[0].mxu0
    %v3034 = vpop.f32.mrb[0].mxu0
    %3035 = vdwg.mxu0
    %3037 = vrot.lane.b32.xlu0 %v2640, 96
    %v3038 = vpop.permute.xlu0 %3037
    %v3040 = vsel %vm619, %v2986, 0
    %v3043 = vsel %vm647, %v3038, 0
    %3045 = vmatprep.subr.bf16.mxu0 0
    %3046 = vmatpush1.bf16.msra.mxu0 %v3043
    %3047 = vmatprep.subr.bf16.mxu0 0
    %3048 = vmatpush1.bf16.msra.mxu0 0
    %3049 = vmatprep.subr.bf16.mxu0 0
    %3050 = vmatpush1.bf16.msra.mxu0 0
    %3051 = vmatprep.subr.bf16.mxu0 0
    %3052 = vmatpush1.bf16.msra.mxu0 0
    %3053 = vmatprep.subr.bf16.mxu0 0
    %3054 = vmatpush1.bf16.msra.mxu0 0
    %3055 = vmatprep.subr.bf16.mxu0 0
    %3056 = vmatpush1.bf16.msra.mxu0 0
    %3057 = vmatprep.subr.bf16.mxu0 0
    %3058 = vmatpush1.bf16.msra.mxu0 0
    %3059 = vmatprep.subr.bf16.mxu0 0
    %3060 = vmatpush1.bf16.msra.mxu0 0
    %3061 = vmatprep.subr.bf16.mxu0 0
    %3062 = vmatpush1.bf16.msra.mxu0 0
    %3063 = vmatprep.subr.bf16.mxu0 0
    %3064 = vmatpush1.bf16.msra.mxu0 0
    %3065 = vmatprep.subr.bf16.mxu0 0
    %3066 = vmatpush1.bf16.msra.mxu0 0
    %3067 = vmatprep.subr.bf16.mxu0 0
    %3068 = vmatpush1.bf16.msra.mxu0 0
    %3069 = vmatprep.subr.bf16.mxu0 0
    %3070 = vmatpush1.bf16.msra.mxu0 0
    %3071 = vmatprep.subr.bf16.mxu0 0
    %3072 = vmatpush1.bf16.msra.mxu0 0
    %3073 = vmatprep.subr.bf16.mxu0 0
    %3074 = vmatpush1.bf16.msra.mxu0 0
    %3075 = vmatprep.subr.bf16.mxu0 0
    %3076 = vmatpush1.bf16.msra.mxu0 0
    %3077 = vmatprep.mubr.bf16.mxu0 0
    %3078 = vmatmul.mubr.bf16.gmra.mrb[0].mxu0 %v3040
    %v3079 = vpop.f32.mrb[0].mxu0
    %v3080 = vadd.f32 0.0, %v3079
    %v3081 = vpop.f32.mrb[0].mxu0
    %v3082 = vpop.f32.mrb[0].mxu0
    %v3083 = vpop.f32.mrb[0].mxu0
    %3084 = vdwg.mxu0
    %3087 = vrot.lane.b32.xlu0 %v3031, 32
    %v3088 = vpop.permute.xlu0 %3087
    %3089 = vrot.lane.b32.xlu0 %v3080, 32
    %v3090 = vpop.permute.xlu0 %3089
    %3093 = vst.msk [vmem:[#allocation2] sm:$0xff] %vm977, %v3088
    %3094 = vst.msk [vmem:[#allocation2 + $0x8] sm:$0xff] %vm977, %v3090
    %3095 = vrot.lane.b32.xlu0 %v2635, 64
    %v3096 = vpop.permute.xlu0 %3095
    %3097 = vrot.lane.b32.xlu0 %v2637, 64
    %v3098 = vpop.permute.xlu0 %3097
    %v3100 = vsel %vm512, %v3096, 0
    %v3103 = vsel %vm512, %v3098, 0
    %3105 = vmatprep.subr.bf16.mxu0 0
    %3106 = vmatpush1.bf16.xpose.msra.mxu0 %v3103
    %3107 = vmatprep.subr.bf16.mxu0 0
    %3108 = vmatpush1.bf16.xpose.msra.mxu0 0
    %3109 = vmatprep.subr.bf16.mxu0 0
    %3110 = vmatpush1.bf16.xpose.msra.mxu0 0
    %3111 = vmatprep.subr.bf16.mxu0 0
    %3112 = vmatpush1.bf16.xpose.msra.mxu0 0
    %3113 = vmatprep.subr.bf16.mxu0 0
    %3114 = vmatpush1.bf16.xpose.msra.mxu0 0
    %3115 = vmatprep.subr.bf16.mxu0 0
    %3116 = vmatpush1.bf16.xpose.msra.mxu0 0
    %3117 = vmatprep.subr.bf16.mxu0 0
    %3118 = vmatpush1.bf16.xpose.msra.mxu0 0
    %3119 = vmatprep.subr.bf16.mxu0 0
    %3120 = vmatpush1.bf16.xpose.msra.mxu0 0
    %3121 = vmatprep.subr.bf16.mxu0 0
    %3122 = vmatpush1.bf16.xpose.msra.mxu0 0
    %3123 = vmatprep.subr.bf16.mxu0 0
    %3124 = vmatpush1.bf16.xpose.msra.mxu0 0
    %3125 = vmatprep.subr.bf16.mxu0 0
    %3126 = vmatpush1.bf16.xpose.msra.mxu0 0
    %3127 = vmatprep.subr.bf16.mxu0 0
    %3128 = vmatpush1.bf16.xpose.msra.mxu0 0
    %3129 = vmatprep.subr.bf16.mxu0 0
    %3130 = vmatpush1.bf16.xpose.msra.mxu0 0
    %3131 = vmatprep.subr.bf16.mxu0 0
    %3132 = vmatpush1.bf16.xpose.msra.mxu0 0
    %3133 = vmatprep.subr.bf16.mxu0 0
    %3134 = vmatpush1.bf16.xpose.msra.mxu0 0
    %3135 = vmatprep.subr.bf16.mxu0 0
    %3136 = vmatpush1.bf16.xpose.msra.mxu0 0
    %3137 = vmatprep.mubr.bf16.mxu0 0
    %3138 = vmatmul.mubr.bf16.gmra.mrb[0].mxu0 %v3100
    %v3139 = vpop.f32.mrb[0].mxu0
    %v3140 = vadd.f32 0.0, %v3139
    %v3141 = vpop.f32.mrb[0].mxu0
    %v3142 = vpop.f32.mrb[0].mxu0
    %v3143 = vpop.f32.mrb[0].mxu0
    %3144 = vdwg.mxu0
    %3145 = vrot.lane.b32.xlu0 %v2636, 64
    %v3146 = vpop.permute.xlu0 %3145
    %3147 = vrot.lane.b32.xlu0 %v2638, 64
    %v3148 = vpop.permute.xlu0 %3147
    %v3150 = vsel %vm512, %v3146, 0
    %v3153 = vsel %vm512, %v3148, 0
    %3155 = vmatprep.subr.bf16.mxu0 0
    %3156 = vmatpush1.bf16.xpose.msra.mxu0 %v3153
    %3157 = vmatprep.subr.bf16.mxu0 0
    %3158 = vmatpush1.bf16.xpose.msra.mxu0 0
    %3159 = vmatprep.subr.bf16.mxu0 0
    %3160 = vmatpush1.bf16.xpose.msra.mxu0 0
    %3161 = vmatprep.subr.bf16.mxu0 0
    %3162 = vmatpush1.bf16.xpose.msra.mxu0 0
    %3163 = vmatprep.subr.bf16.mxu0 0
    %3164 = vmatpush1.bf16.xpose.msra.mxu0 0
    %3165 = vmatprep.subr.bf16.mxu0 0
    %3166 = vmatpush1.bf16.xpose.msra.mxu0 0
    %3167 = vmatprep.subr.bf16.mxu0 0
    %3168 = vmatpush1.bf16.xpose.msra.mxu0 0
    %3169 = vmatprep.subr.bf16.mxu0 0
    %3170 = vmatpush1.bf16.xpose.msra.mxu0 0
    %3171 = vmatprep.subr.bf16.mxu0 0
    %3172 = vmatpush1.bf16.xpose.msra.mxu0 0
    %3173 = vmatprep.subr.bf16.mxu0 0
    %3174 = vmatpush1.bf16.xpose.msra.mxu0 0
    %3175 = vmatprep.subr.bf16.mxu0 0
    %3176 = vmatpush1.bf16.xpose.msra.mxu0 0
    %3177 = vmatprep.subr.bf16.mxu0 0
    %3178 = vmatpush1.bf16.xpose.msra.mxu0 0
    %3179 = vmatprep.subr.bf16.mxu0 0
    %3180 = vmatpush1.bf16.xpose.msra.mxu0 0
    %3181 = vmatprep.subr.bf16.mxu0 0
    %3182 = vmatpush1.bf16.xpose.msra.mxu0 0
    %3183 = vmatprep.subr.bf16.mxu0 0
    %3184 = vmatpush1.bf16.xpose.msra.mxu0 0
    %3185 = vmatprep.subr.bf16.mxu0 0
    %3186 = vmatpush1.bf16.xpose.msra.mxu0 0
    %3187 = vmatprep.mubr.bf16.mxu0 0
    %3188 = vmatmul.mubr.bf16.gmra.mrb[0].mxu0 %v3150
    %v3189 = vpop.f32.mrb[0].mxu0
    %v3190 = vadd.f32 0.0, %v3189
    %v3191 = vpop.f32.mrb[0].mxu0
    %v3192 = vpop.f32.mrb[0].mxu0
    %v3193 = vpop.f32.mrb[0].mxu0
    %3194 = vdwg.mxu0
    %v3195 = vmul.f32 %v3140, 0.17677669
    %v3196 = vmul.f32 %v3190, 0.17677669
    %v3197 = vadd.f32 %v3195, %v610
    %v3198 = vadd.f32 %v3196, %v614
    %v3199 = vsel %vm619, %v3197, -inf
    %3200 = vmax.xlane.f32.xlu0 %v3199
    %v3201 = vpop.xlane.xlu0 %3200
    %v3202 = vsel %vm619, %v3198, -inf
    %3203 = vmax.xlane.f32.xlu0 %v3202
    %v3204 = vpop.xlane.xlu0 %3203
    %v3205 = vsub.f32 %v3197, %v3201
    %v3206 = vsub.f32 %v3198, %v3204
    %v3207 = vmul.f32 %v3205, 1.442695
    %v3208 = vpow.pop %v3207
    %v3209 = vmul.f32 %v3206, 1.442695
    %v3210 = vpow.pop %v3209
    %v3211 = vsel %vm619, %v3208, 0.0
    %3212 = vadd.xlane.f32.xlu0 %v3211
    %v3213 = vpop.xlane.xlu0 %3212
    %v3214 = vsel %vm619, %v3210, 0.0
    %3215 = vadd.xlane.f32.xlu0 %v3214
    %v3216 = vpop.xlane.xlu0 %3215
    %v3217 = vrcp.pop %v3213
    %v3218 = vrcp.pop %v3216
    %v3219 = vmul.f32 %v3208, %v3217
    %v3220 = vmul.f32 %v3210, %v3218
    %v3221 = vpack.c.bf16 %v3219, %v3219
    %v3222 = vpack.c.bf16 %v3220, %v3220
    %3223 = vrot.lane.b32.xlu0 %v2639, 64
    %v3224 = vpop.permute.xlu0 %3223
    %v3226 = vsel %vm619, %v3221, 0
    %v3229 = vsel %vm647, %v3224, 0
    %3231 = vmatprep.subr.bf16.mxu0 0
    %3232 = vmatpush1.bf16.msra.mxu0 %v3229
    %3233 = vmatprep.subr.bf16.mxu0 0
    %3234 = vmatpush1.bf16.msra.mxu0 0
    %3235 = vmatprep.subr.bf16.mxu0 0
    %3236 = vmatpush1.bf16.msra.mxu0 0
    %3237 = vmatprep.subr.bf16.mxu0 0
    %3238 = vmatpush1.bf16.msra.mxu0 0
    %3239 = vmatprep.subr.bf16.mxu0 0
    %3240 = vmatpush1.bf16.msra.mxu0 0
    %3241 = vmatprep.subr.bf16.mxu0 0
    %3242 = vmatpush1.bf16.msra.mxu0 0
    %3243 = vmatprep.subr.bf16.mxu0 0
    %3244 = vmatpush1.bf16.msra.mxu0 0
    %3245 = vmatprep.subr.bf16.mxu0 0
    %3246 = vmatpush1.bf16.msra.mxu0 0
    %3247 = vmatprep.subr.bf16.mxu0 0
    %3248 = vmatpush1.bf16.msra.mxu0 0
    %3249 = vmatprep.subr.bf16.mxu0 0
    %3250 = vmatpush1.bf16.msra.mxu0 0
    %3251 = vmatprep.subr.bf16.mxu0 0
    %3252 = vmatpush1.bf16.msra.mxu0 0
    %3253 = vmatprep.subr.bf16.mxu0 0
    %3254 = vmatpush1.bf16.msra.mxu0 0
    %3255 = vmatprep.subr.bf16.mxu0 0
    %3256 = vmatpush1.bf16.msra.mxu0 0
    %3257 = vmatprep.subr.bf16.mxu0 0
    %3258 = vmatpush1.bf16.msra.mxu0 0
    %3259 = vmatprep.subr.bf16.mxu0 0
    %3260 = vmatpush1.bf16.msra.mxu0 0
    %3261 = vmatprep.subr.bf16.mxu0 0
    %3262 = vmatpush1.bf16.msra.mxu0 0
    %3263 = vmatprep.mubr.bf16.mxu0 0
    %3264 = vmatmul.mubr.bf16.gmra.mrb[0].mxu0 %v3226
    %v3265 = vpop.f32.mrb[0].mxu0
    %v3266 = vadd.f32 0.0, %v3265
    %v3267 = vpop.f32.mrb[0].mxu0
    %v3268 = vpop.f32.mrb[0].mxu0
    %v3269 = vpop.f32.mrb[0].mxu0
    %3270 = vdwg.mxu0
    %3271 = vrot.lane.b32.xlu0 %v2640, 64
    %v3272 = vpop.permute.xlu0 %3271
    %v3274 = vsel %vm619, %v3222, 0
    %v3277 = vsel %vm647, %v3272, 0
    %3279 = vmatprep.subr.bf16.mxu0 0
    %3280 = vmatpush1.bf16.msra.mxu0 %v3277
    %3281 = vmatprep.subr.bf16.mxu0 0
    %3282 = vmatpush1.bf16.msra.mxu0 0
    %3283 = vmatprep.subr.bf16.mxu0 0
    %3284 = vmatpush1.bf16.msra.mxu0 0
    %3285 = vmatprep.subr.bf16.mxu0 0
    %3286 = vmatpush1.bf16.msra.mxu0 0
    %3287 = vmatprep.subr.bf16.mxu0 0
    %3288 = vmatpush1.bf16.msra.mxu0 0
    %3289 = vmatprep.subr.bf16.mxu0 0
    %3290 = vmatpush1.bf16.msra.mxu0 0
    %3291 = vmatprep.subr.bf16.mxu0 0
    %3292 = vmatpush1.bf16.msra.mxu0 0
    %3293 = vmatprep.subr.bf16.mxu0 0
    %3294 = vmatpush1.bf16.msra.mxu0 0
    %3295 = vmatprep.subr.bf16.mxu0 0
    %3296 = vmatpush1.bf16.msra.mxu0 0
    %3297 = vmatprep.subr.bf16.mxu0 0
    %3298 = vmatpush1.bf16.msra.mxu0 0
    %3299 = vmatprep.subr.bf16.mxu0 0
    %3300 = vmatpush1.bf16.msra.mxu0 0
    %3301 = vmatprep.subr.bf16.mxu0 0
    %3302 = vmatpush1.bf16.msra.mxu0 0
    %3303 = vmatprep.subr.bf16.mxu0 0
    %3304 = vmatpush1.bf16.msra.mxu0 0
    %3305 = vmatprep.subr.bf16.mxu0 0
    %3306 = vmatpush1.bf16.msra.mxu0 0
    %3307 = vmatprep.subr.bf16.mxu0 0
    %3308 = vmatpush1.bf16.msra.mxu0 0
    %3309 = vmatprep.subr.bf16.mxu0 0
    %3310 = vmatpush1.bf16.msra.mxu0 0
    %3311 = vmatprep.mubr.bf16.mxu0 0
    %3312 = vmatmul.mubr.bf16.gmra.mrb[0].mxu0 %v3274
    %v3313 = vpop.f32.mrb[0].mxu0
    %v3314 = vadd.f32 0.0, %v3313
    %v3315 = vpop.f32.mrb[0].mxu0
    %v3316 = vpop.f32.mrb[0].mxu0
    %v3317 = vpop.f32.mrb[0].mxu0
    %3318 = vdwg.mxu0
    %3321 = vrot.lane.b32.xlu0 %v3266, 64
    %v3322 = vpop.permute.xlu0 %3321
    %3323 = vrot.lane.b32.xlu0 %v3314, 64
    %v3324 = vpop.permute.xlu0 %3323
    %3327 = vst.msk [vmem:[#allocation2] sm:$0xff] %vm1212, %v3322
    %3328 = vst.msk [vmem:[#allocation2 + $0x8] sm:$0xff] %vm1212, %v3324
    %3329 = vrot.lane.b32.xlu0 %v2635, 32
    %v3330 = vpop.permute.xlu0 %3329
    %3331 = vrot.lane.b32.xlu0 %v2637, 32
    %v3332 = vpop.permute.xlu0 %3331
    %v3334 = vsel %vm512, %v3330, 0
    %v3337 = vsel %vm512, %v3332, 0
    %3339 = vmatprep.subr.bf16.mxu0 0
    %3340 = vmatpush1.bf16.xpose.msra.mxu0 %v3337
    %3341 = vmatprep.subr.bf16.mxu0 0
    %3342 = vmatpush1.bf16.xpose.msra.mxu0 0
    %3343 = vmatprep.subr.bf16.mxu0 0
    %3344 = vmatpush1.bf16.xpose.msra.mxu0 0
    %3345 = vmatprep.subr.bf16.mxu0 0
    %3346 = vmatpush1.bf16.xpose.msra.mxu0 0
    %3347 = vmatprep.subr.bf16.mxu0 0
    %3348 = vmatpush1.bf16.xpose.msra.mxu0 0
    %3349 = vmatprep.subr.bf16.mxu0 0
    %3350 = vmatpush1.bf16.xpose.msra.mxu0 0
    %3351 = vmatprep.subr.bf16.mxu0 0
    %3352 = vmatpush1.bf16.xpose.msra.mxu0 0
    %3353 = vmatprep.subr.bf16.mxu0 0
    %3354 = vmatpush1.bf16.xpose.msra.mxu0 0
    %3355 = vmatprep.subr.bf16.mxu0 0
    %3356 = vmatpush1.bf16.xpose.msra.mxu0 0
    %3357 = vmatprep.subr.bf16.mxu0 0
    %3358 = vmatpush1.bf16.xpose.msra.mxu0 0
    %3359 = vmatprep.subr.bf16.mxu0 0
    %3360 = vmatpush1.bf16.xpose.msra.mxu0 0
    %3361 = vmatprep.subr.bf16.mxu0 0
    %3362 = vmatpush1.bf16.xpose.msra.mxu0 0
    %3363 = vmatprep.subr.bf16.mxu0 0
    %3364 = vmatpush1.bf16.xpose.msra.mxu0 0
    %3365 = vmatprep.subr.bf16.mxu0 0
    %3366 = vmatpush1.bf16.xpose.msra.mxu0 0
    %3367 = vmatprep.subr.bf16.mxu0 0
    %3368 = vmatpush1.bf16.xpose.msra.mxu0 0
    %3369 = vmatprep.subr.bf16.mxu0 0
    %3370 = vmatpush1.bf16.xpose.msra.mxu0 0
    %3371 = vmatprep.mubr.bf16.mxu0 0
    %3372 = vmatmul.mubr.bf16.gmra.mrb[0].mxu0 %v3334
    %v3373 = vpop.f32.mrb[0].mxu0
    %v3374 = vadd.f32 0.0, %v3373
    %v3375 = vpop.f32.mrb[0].mxu0
    %v3376 = vpop.f32.mrb[0].mxu0
    %v3377 = vpop.f32.mrb[0].mxu0
    %3378 = vdwg.mxu0
    %3379 = vrot.lane.b32.xlu0 %v2636, 32
    %v3380 = vpop.permute.xlu0 %3379
    %3381 = vrot.lane.b32.xlu0 %v2638, 32
    %v3382 = vpop.permute.xlu0 %3381
    %v3384 = vsel %vm512, %v3380, 0
    %v3387 = vsel %vm512, %v3382, 0
    %3389 = vmatprep.subr.bf16.mxu0 0
    %3390 = vmatpush1.bf16.xpose.msra.mxu0 %v3387
    %3391 = vmatprep.subr.bf16.mxu0 0
    %3392 = vmatpush1.bf16.xpose.msra.mxu0 0
    %3393 = vmatprep.subr.bf16.mxu0 0
    %3394 = vmatpush1.bf16.xpose.msra.mxu0 0
    %3395 = vmatprep.subr.bf16.mxu0 0
    %3396 = vmatpush1.bf16.xpose.msra.mxu0 0
    %3397 = vmatprep.subr.bf16.mxu0 0
    %3398 = vmatpush1.bf16.xpose.msra.mxu0 0
    %3399 = vmatprep.subr.bf16.mxu0 0
    %3400 = vmatpush1.bf16.xpose.msra.mxu0 0
    %3401 = vmatprep.subr.bf16.mxu0 0
    %3402 = vmatpush1.bf16.xpose.msra.mxu0 0
    %3403 = vmatprep.subr.bf16.mxu0 0
    %3404 = vmatpush1.bf16.xpose.msra.mxu0 0
    %3405 = vmatprep.subr.bf16.mxu0 0
    %3406 = vmatpush1.bf16.xpose.msra.mxu0 0
    %3407 = vmatprep.subr.bf16.mxu0 0
    %3408 = vmatpush1.bf16.xpose.msra.mxu0 0
    %3409 = vmatprep.subr.bf16.mxu0 0
    %3410 = vmatpush1.bf16.xpose.msra.mxu0 0
    %3411 = vmatprep.subr.bf16.mxu0 0
    %3412 = vmatpush1.bf16.xpose.msra.mxu0 0
    %3413 = vmatprep.subr.bf16.mxu0 0
    %3414 = vmatpush1.bf16.xpose.msra.mxu0 0
    %3415 = vmatprep.subr.bf16.mxu0 0
    %3416 = vmatpush1.bf16.xpose.msra.mxu0 0
    %3417 = vmatprep.subr.bf16.mxu0 0
    %3418 = vmatpush1.bf16.xpose.msra.mxu0 0
    %3419 = vmatprep.subr.bf16.mxu0 0
    %3420 = vmatpush1.bf16.xpose.msra.mxu0 0
    %3421 = vmatprep.mubr.bf16.mxu0 0
    %3422 = vmatmul.mubr.bf16.gmra.mrb[0].mxu0 %v3384
    %v3423 = vpop.f32.mrb[0].mxu0
    %v3424 = vadd.f32 0.0, %v3423
    %v3425 = vpop.f32.mrb[0].mxu0
    %v3426 = vpop.f32.mrb[0].mxu0
    %v3427 = vpop.f32.mrb[0].mxu0
    %3428 = vdwg.mxu0
    %v3429 = vmul.f32 %v3374, 0.17677669
    %v3430 = vmul.f32 %v3424, 0.17677669
    %v3431 = vadd.f32 %v3429, %v610
    %v3432 = vadd.f32 %v3430, %v614
    %v3433 = vsel %vm619, %v3431, -inf
    %3434 = vmax.xlane.f32.xlu0 %v3433
    %v3435 = vpop.xlane.xlu0 %3434
    %v3436 = vsel %vm619, %v3432, -inf
    %3437 = vmax.xlane.f32.xlu0 %v3436
    %v3438 = vpop.xlane.xlu0 %3437
    %v3439 = vsub.f32 %v3431, %v3435
    %v3440 = vsub.f32 %v3432, %v3438
    %v3441 = vmul.f32 %v3439, 1.442695
    %v3442 = vpow.pop %v3441
    %v3443 = vmul.f32 %v3440, 1.442695
    %v3444 = vpow.pop %v3443
    %v3445 = vsel %vm619, %v3442, 0.0
    %3446 = vadd.xlane.f32.xlu0 %v3445
    %v3447 = vpop.xlane.xlu0 %3446
    %v3448 = vsel %vm619, %v3444, 0.0
    %3449 = vadd.xlane.f32.xlu0 %v3448
    %v3450 = vpop.xlane.xlu0 %3449
    %v3451 = vrcp.pop %v3447
    %v3452 = vrcp.pop %v3450
    %v3453 = vmul.f32 %v3442, %v3451
    %v3454 = vmul.f32 %v3444, %v3452
    %v3455 = vpack.c.bf16 %v3453, %v3453
    %v3456 = vpack.c.bf16 %v3454, %v3454
    %3457 = vrot.lane.b32.xlu0 %v2639, 32
    %v3458 = vpop.permute.xlu0 %3457
    %v3460 = vsel %vm619, %v3455, 0
    %v3463 = vsel %vm647, %v3458, 0
    %3465 = vmatprep.subr.bf16.mxu0 0
    %3466 = vmatpush1.bf16.msra.mxu0 %v3463
    %3467 = vmatprep.subr.bf16.mxu0 0
    %3468 = vmatpush1.bf16.msra.mxu0 0
    %3469 = vmatprep.subr.bf16.mxu0 0
    %3470 = vmatpush1.bf16.msra.mxu0 0
    %3471 = vmatprep.subr.bf16.mxu0 0
    %3472 = vmatpush1.bf16.msra.mxu0 0
    %3473 = vmatprep.subr.bf16.mxu0 0
    %3474 = vmatpush1.bf16.msra.mxu0 0
    %3475 = vmatprep.subr.bf16.mxu0 0
    %3476 = vmatpush1.bf16.msra.mxu0 0
    %3477 = vmatprep.subr.bf16.mxu0 0
    %3478 = vmatpush1.bf16.msra.mxu0 0
    %3479 = vmatprep.subr.bf16.mxu0 0
    %3480 = vmatpush1.bf16.msra.mxu0 0
    %3481 = vmatprep.subr.bf16.mxu0 0
    %3482 = vmatpush1.bf16.msra.mxu0 0
    %3483 = vmatprep.subr.bf16.mxu0 0
    %3484 = vmatpush1.bf16.msra.mxu0 0
    %3485 = vmatprep.subr.bf16.mxu0 0
    %3486 = vmatpush1.bf16.msra.mxu0 0
    %3487 = vmatprep.subr.bf16.mxu0 0
    %3488 = vmatpush1.bf16.msra.mxu0 0
    %3489 = vmatprep.subr.bf16.mxu0 0
    %3490 = vmatpush1.bf16.msra.mxu0 0
    %3491 = vmatprep.subr.bf16.mxu0 0
    %3492 = vmatpush1.bf16.msra.mxu0 0
    %3493 = vmatprep.subr.bf16.mxu0 0
    %3494 = vmatpush1.bf16.msra.mxu0 0
    %3495 = vmatprep.subr.bf16.mxu0 0
    %3496 = vmatpush1.bf16.msra.mxu0 0
    %3497 = vmatprep.mubr.bf16.mxu0 0
    %3498 = vmatmul.mubr.bf16.gmra.mrb[0].mxu0 %v3460
    %v3499 = vpop.f32.mrb[0].mxu0
    %v3500 = vadd.f32 0.0, %v3499
    %v3501 = vpop.f32.mrb[0].mxu0
    %v3502 = vpop.f32.mrb[0].mxu0
    %v3503 = vpop.f32.mrb[0].mxu0
    %3504 = vdwg.mxu0
    %3505 = vrot.lane.b32.xlu0 %v2640, 32
    %v3506 = vpop.permute.xlu0 %3505
    %v3508 = vsel %vm619, %v3456, 0
    %v3511 = vsel %vm647, %v3506, 0
    %3513 = vmatprep.subr.bf16.mxu0 0
    %3514 = vmatpush1.bf16.msra.mxu0 %v3511
    %3515 = vmatprep.subr.bf16.mxu0 0
    %3516 = vmatpush1.bf16.msra.mxu0 0
    %3517 = vmatprep.subr.bf16.mxu0 0
    %3518 = vmatpush1.bf16.msra.mxu0 0
    %3519 = vmatprep.subr.bf16.mxu0 0
    %3520 = vmatpush1.bf16.msra.mxu0 0
    %3521 = vmatprep.subr.bf16.mxu0 0
    %3522 = vmatpush1.bf16.msra.mxu0 0
    %3523 = vmatprep.subr.bf16.mxu0 0
    %3524 = vmatpush1.bf16.msra.mxu0 0
    %3525 = vmatprep.subr.bf16.mxu0 0
    %3526 = vmatpush1.bf16.msra.mxu0 0
    %3527 = vmatprep.subr.bf16.mxu0 0
    %3528 = vmatpush1.bf16.msra.mxu0 0
    %3529 = vmatprep.subr.bf16.mxu0 0
    %3530 = vmatpush1.bf16.msra.mxu0 0
    %3531 = vmatprep.subr.bf16.mxu0 0
    %3532 = vmatpush1.bf16.msra.mxu0 0
    %3533 = vmatprep.subr.bf16.mxu0 0
    %3534 = vmatpush1.bf16.msra.mxu0 0
    %3535 = vmatprep.subr.bf16.mxu0 0
    %3536 = vmatpush1.bf16.msra.mxu0 0
    %3537 = vmatprep.subr.bf16.mxu0 0
    %3538 = vmatpush1.bf16.msra.mxu0 0
    %3539 = vmatprep.subr.bf16.mxu0 0
    %3540 = vmatpush1.bf16.msra.mxu0 0
    %3541 = vmatprep.subr.bf16.mxu0 0
    %3542 = vmatpush1.bf16.msra.mxu0 0
    %3543 = vmatprep.subr.bf16.mxu0 0
    %3544 = vmatpush1.bf16.msra.mxu0 0
    %3545 = vmatprep.mubr.bf16.mxu0 0
    %3546 = vmatmul.mubr.bf16.gmra.mrb[0].mxu0 %v3508
    %v3547 = vpop.f32.mrb[0].mxu0
    %v3548 = vadd.f32 0.0, %v3547
    %v3549 = vpop.f32.mrb[0].mxu0
    %v3550 = vpop.f32.mrb[0].mxu0
    %v3551 = vpop.f32.mrb[0].mxu0
    %3552 = vdwg.mxu0
    %3555 = vrot.lane.b32.xlu0 %v3500, 96
    %v3556 = vpop.permute.xlu0 %3555
    %3557 = vrot.lane.b32.xlu0 %v3548, 96
    %v3558 = vpop.permute.xlu0 %3557
    %3561 = vst.msk [vmem:[#allocation2] sm:$0xff] %vm1447, %v3556
    %3562 = vst.msk [vmem:[#allocation2 + $0x8] sm:$0xff] %vm1447, %v3558
    %v3563 = vld [vmem:[#allocation2] sm:$0xff]
    %v3564 = vld [vmem:[#allocation2 + $0x8] sm:$0xff]
    %v3565 = vpack.c.bf16 %v3564, %v3563
    %s3566 = scalar_lea.vmem [#allocation12], 64
    %v3567 = vld [vmem:[%s3566] sm:$0xf]
    %v3568 = vld [vmem:[%s3566 + $0x4] sm:$0xf]
    %v3569 = vld [vmem:[%s3566 + $0x8] sm:$0xf]
    %v3570 = vld [vmem:[%s3566 + $0xc] sm:$0xf]
    %v3571 = vld [vmem:[%s3566 + $0x10] sm:$0xf]
    %v3572 = vld [vmem:[%s3566 + $0x14] sm:$0xf]
    %v3573 = vld [vmem:[%s3566 + $0x18] sm:$0xf]
    %v3574 = vld [vmem:[%s3566 + $0x1c] sm:$0xf]
    %v3575 = vld [vmem:[%s3566 + $0x20] sm:$0xf]
    %v3576 = vld [vmem:[%s3566 + $0x24] sm:$0xf]
    %v3577 = vld [vmem:[%s3566 + $0x28] sm:$0xf]
    %v3578 = vld [vmem:[%s3566 + $0x2c] sm:$0xf]
    %v3579 = vld [vmem:[%s3566 + $0x30] sm:$0xf]
    %v3580 = vld [vmem:[%s3566 + $0x34] sm:$0xf]
    %v3581 = vld [vmem:[%s3566 + $0x38] sm:$0xf]
    %v3582 = vld [vmem:[%s3566 + $0x3c] sm:$0xf]
    %s3583 = scalar_lea.vmem %s7, 1
    %v3584 = vld [vmem:[%s3583] sm:$0x1]
    %v3586 = vlaneseq
    %v3587 = vshrl.u32 %v3586, 7
    %v3588 = vsub.s32 0, %v3587
    %v3589 = vrot.slane %v3584, %v3588
    %v3607 = vunpack.c.l.b16 %v3567
    %v3608 = vunpack.c.l.b16 %v3568
    %v3609 = vunpack.c.l.b16 %v3569
    %v3610 = vunpack.c.l.b16 %v3570
    %v3611 = vunpack.c.l.b16 %v3571
    %v3612 = vunpack.c.l.b16 %v3572
    %v3613 = vunpack.c.l.b16 %v3573
    %v3614 = vunpack.c.l.b16 %v3574
    %v3615 = vunpack.c.l.b16 %v3575
    %v3616 = vunpack.c.l.b16 %v3576
    %v3617 = vunpack.c.l.b16 %v3577
    %v3618 = vunpack.c.l.b16 %v3578
    %v3619 = vunpack.c.l.b16 %v3579
    %v3620 = vunpack.c.l.b16 %v3580
    %v3621 = vunpack.c.l.b16 %v3581
    %v3622 = vunpack.c.l.b16 %v3582
    %v3623 = vpack.c.b16 %v3608, %v3607
    %v3624 = vpack.c.b16 %v3610, %v3609
    %v3625 = vpack.c.b16 %v3612, %v3611
    %v3626 = vpack.c.b16 %v3614, %v3613
    %v3627 = vpack.c.b16 %v3616, %v3615
    %v3628 = vpack.c.b16 %v3618, %v3617
    %v3629 = vpack.c.b16 %v3620, %v3619
    %v3630 = vpack.c.b16 %v3622, %v3621
    %3639 = vmatprep.subr.bf16.mxu0 0
    %3640 = vmatpush1.bf16.msra.mxu0 %v3623
    %3641 = vmatprep.subr.bf16.mxu0 0
    %3642 = vmatpush1.bf16.msra.mxu0 %v3624
    %3643 = vmatprep.subr.bf16.mxu0 0
    %3644 = vmatpush1.bf16.msra.mxu0 %v3625
    %3645 = vmatprep.subr.bf16.mxu0 0
    %3646 = vmatpush1.bf16.msra.mxu0 %v3626
    %3647 = vmatprep.subr.bf16.mxu0 0
    %3648 = vmatpush1.bf16.msra.mxu0 %v3627
    %3649 = vmatprep.subr.bf16.mxu0 0
    %3650 = vmatpush1.bf16.msra.mxu0 %v3628
    %3651 = vmatprep.subr.bf16.mxu0 0
    %3652 = vmatpush1.bf16.msra.mxu0 %v3629
    %3653 = vmatprep.subr.bf16.mxu0 0
    %3654 = vmatpush1.bf16.msra.mxu0 %v3630
    %3655 = vmatprep.subr.bf16.mxu0 0
    %3656 = vmatpush1.bf16.msra.mxu0 0
    %3657 = vmatprep.subr.bf16.mxu0 0
    %3658 = vmatpush1.bf16.msra.mxu0 0
    %3659 = vmatprep.subr.bf16.mxu0 0
    %3660 = vmatpush1.bf16.msra.mxu0 0
    %3661 = vmatprep.subr.bf16.mxu0 0
    %3662 = vmatpush1.bf16.msra.mxu0 0
    %3663 = vmatprep.subr.bf16.mxu0 0
    %3664 = vmatpush1.bf16.msra.mxu0 0
    %3665 = vmatprep.subr.bf16.mxu0 0
    %3666 = vmatpush1.bf16.msra.mxu0 0
    %3667 = vmatprep.subr.bf16.mxu0 0
    %3668 = vmatpush1.bf16.msra.mxu0 0
    %3669 = vmatprep.subr.bf16.mxu0 0
    %3670 = vmatpush1.bf16.msra.mxu0 0
    %3671 = vmatprep.mubr.bf16.mxu0 0
    %3672 = vmatmul.mubr.bf16.gmra.mrb[0].mxu0 %v3565
    %v3673 = vpop.f32.mrb[0].mxu0
    %v3674 = vadd.f32 %v3589, %v3673
    %v3675 = vpop.f32.mrb[0].mxu0
    %v3676 = vpop.f32.mrb[0].mxu0
    %v3677 = vadd.f32 %v3589, %v3676
    %v3678 = vpop.f32.mrb[0].mxu0
    %3679 = vdwg.mxu0
    %v3680 = vadd.f32 %v2369, %v3674
    %v3681 = vadd.f32 %v2370, %v3677
    %s3682 = scalar_lea.vmem %s8, 1
    %v3683 = vld [vmem:[%s3682] sm:$0x1]
    %s3684 = scalar_lea.vmem %s9, 1
    %v3685 = vld [vmem:[%s3684] sm:$0x1]
    %3686 = vadd.xlane.f32.xlu0 %v3680
    %v3687 = vpop.xlane.xlu0 %3686
    %3688 = vadd.xlane.f32.xlu0 %v3681
    %v3689 = vpop.xlane.xlu0 %3688
    %v3690 = vmul.f32 %v3687, %v185
    %v3691 = vmul.f32 %v3689, %v185
    %v3692 = vsub.f32 %v3680, %v3690
    %v3693 = vsub.f32 %v3681, %v3691
    %v3694 = vmul.f32 %v3692, %v3692
    %v3695 = vmul.f32 %v3693, %v3693
    %3696 = vadd.xlane.f32.xlu0 %v3694
    %v3697 = vpop.xlane.xlu0 %3696
    %3698 = vadd.xlane.f32.xlu0 %v3695
    %v3699 = vpop.xlane.xlu0 %3698
    %v3700 = vmul.f32 %v3697, %v185
    %v3701 = vmul.f32 %v3699, %v185
    %v3702 = vadd.f32 %v3700, 1e-12
    %v3703 = vadd.f32 %v3701, 1e-12
    %v3704 = vrsqrt.pop %v3702
    %v3705 = vrsqrt.pop %v3703
    %v3706 = vmul.f32 %v3692, %v3704
    %v3707 = vmul.f32 %v3693, %v3705
    %v3709 = vlaneseq
    %v3710 = vshrl.u32 %v3709, 7
    %v3711 = vsub.s32 0, %v3710
    %v3712 = vrot.slane %v3683, %v3711
    %v3714 = vmul.f32 %v3706, %v3712
    %v3715 = vmul.f32 %v3707, %v3712
    %v3717 = vlaneseq
    %v3718 = vshrl.u32 %v3717, 7
    %v3719 = vsub.s32 0, %v3718
    %v3720 = vrot.slane %v3685, %v3719
    %v3722 = vadd.f32 %v3714, %v3720
    %v3723 = vadd.f32 %v3715, %v3720
    %v3724 = vpack.c.bf16 %v3723, %v3722
    %s3725 = scalar_lea.vmem [#allocation14], 256
    %v3726 = vld [vmem:[%s3725] sm:$0xff]
    %v3727 = vld [vmem:[%s3725 + $0x8] sm:$0xff]
    %v3728 = vld [vmem:[%s3725 + $0x10] sm:$0xff]
    %v3729 = vld [vmem:[%s3725 + $0x18] sm:$0xff]
    %v3730 = vld [vmem:[%s3725 + $0x20] sm:$0xff]
    %v3731 = vld [vmem:[%s3725 + $0x28] sm:$0xff]
    %v3732 = vld [vmem:[%s3725 + $0x30] sm:$0xff]
    %v3733 = vld [vmem:[%s3725 + $0x38] sm:$0xff]
    %v3734 = vld [vmem:[%s3725 + $0x40] sm:$0xff]
    %v3735 = vld [vmem:[%s3725 + $0x48] sm:$0xff]
    %v3736 = vld [vmem:[%s3725 + $0x50] sm:$0xff]
    %v3737 = vld [vmem:[%s3725 + $0x58] sm:$0xff]
    %v3738 = vld [vmem:[%s3725 + $0x60] sm:$0xff]
    %v3739 = vld [vmem:[%s3725 + $0x68] sm:$0xff]
    %v3740 = vld [vmem:[%s3725 + $0x70] sm:$0xff]
    %v3741 = vld [vmem:[%s3725 + $0x78] sm:$0xff]
    %v3742 = vld [vmem:[%s3725 + $0x80] sm:$0xff]
    %v3743 = vld [vmem:[%s3725 + $0x88] sm:$0xff]
    %v3744 = vld [vmem:[%s3725 + $0x90] sm:$0xff]
    %v3745 = vld [vmem:[%s3725 + $0x98] sm:$0xff]
    %v3746 = vld [vmem:[%s3725 + $0xa0] sm:$0xff]
    %v3747 = vld [vmem:[%s3725 + $0xa8] sm:$0xff]
    %v3748 = vld [vmem:[%s3725 + $0xb0] sm:$0xff]
    %v3749 = vld [vmem:[%s3725 + $0xb8] sm:$0xff]
    %v3750 = vld [vmem:[%s3725 + $0xc0] sm:$0xff]
    %v3751 = vld [vmem:[%s3725 + $0xc8] sm:$0xff]
    %v3752 = vld [vmem:[%s3725 + $0xd0] sm:$0xff]
    %v3753 = vld [vmem:[%s3725 + $0xd8] sm:$0xff]
    %v3754 = vld [vmem:[%s3725 + $0xe0] sm:$0xff]
    %v3755 = vld [vmem:[%s3725 + $0xe8] sm:$0xff]
    %v3756 = vld [vmem:[%s3725 + $0xf0] sm:$0xff]
    %v3757 = vld [vmem:[%s3725 + $0xf8] sm:$0xff]
    %s3758 = scalar_lea.vmem %s11, 4
    %v3759 = vld [vmem:[%s3758] sm:$0xf]
    %v3761 = vlaneseq
    %v3762 = vshrl.u32 %v3761, 7
    %v3763 = vsub.s32 0, %v3762
    %v3764 = vrot.slane %v3759, %v3763
    %v3765 = vlaneseq
    %v3766 = vshrl.u32 %v3765, 7
    %v3767 = vsub.s32 1, %v3766
    %v3768 = vrot.slane %v3759, %v3767
    %v3769 = vlaneseq
    %v3770 = vshrl.u32 %v3769, 7
    %v3771 = vsub.s32 2, %v3770
    %v3772 = vrot.slane %v3759, %v3771
    %v3773 = vlaneseq
    %v3774 = vshrl.u32 %v3773, 7
    %v3775 = vsub.s32 3, %v3774
    %v3776 = vrot.slane %v3759, %v3775
    %v3813 = vunpack.c.l.b16 %v3726
    %v3814 = vunpack.c.h.b16 %v3726
    %v3815 = vunpack.c.l.b16 %v3727
    %v3816 = vunpack.c.h.b16 %v3727
    %v3817 = vunpack.c.l.b16 %v3728
    %v3818 = vunpack.c.h.b16 %v3728
    %v3819 = vunpack.c.l.b16 %v3729
    %v3820 = vunpack.c.h.b16 %v3729
    %v3821 = vunpack.c.l.b16 %v3730
    %v3822 = vunpack.c.h.b16 %v3730
    %v3823 = vunpack.c.l.b16 %v3731
    %v3824 = vunpack.c.h.b16 %v3731
    %v3825 = vunpack.c.l.b16 %v3732
    %v3826 = vunpack.c.h.b16 %v3732
    %v3827 = vunpack.c.l.b16 %v3733
    %v3828 = vunpack.c.h.b16 %v3733
    %v3829 = vunpack.c.l.b16 %v3734
    %v3830 = vunpack.c.h.b16 %v3734
    %v3831 = vunpack.c.l.b16 %v3735
    %v3832 = vunpack.c.h.b16 %v3735
    %v3833 = vunpack.c.l.b16 %v3736
    %v3834 = vunpack.c.h.b16 %v3736
    %v3835 = vunpack.c.l.b16 %v3737
    %v3836 = vunpack.c.h.b16 %v3737
    %v3837 = vunpack.c.l.b16 %v3738
    %v3838 = vunpack.c.h.b16 %v3738
    %v3839 = vunpack.c.l.b16 %v3739
    %v3840 = vunpack.c.h.b16 %v3739
    %v3841 = vunpack.c.l.b16 %v3740
    %v3842 = vunpack.c.h.b16 %v3740
    %v3843 = vunpack.c.l.b16 %v3741
    %v3844 = vunpack.c.h.b16 %v3741
    %v3845 = vunpack.c.l.b16 %v3742
    %v3846 = vunpack.c.h.b16 %v3742
    %v3847 = vunpack.c.l.b16 %v3743
    %v3848 = vunpack.c.h.b16 %v3743
    %v3849 = vunpack.c.l.b16 %v3744
    %v3850 = vunpack.c.h.b16 %v3744
    %v3851 = vunpack.c.l.b16 %v3745
    %v3852 = vunpack.c.h.b16 %v3745
    %v3853 = vunpack.c.l.b16 %v3746
    %v3854 = vunpack.c.h.b16 %v3746
    %v3855 = vunpack.c.l.b16 %v3747
    %v3856 = vunpack.c.h.b16 %v3747
    %v3857 = vunpack.c.l.b16 %v3748
    %v3858 = vunpack.c.h.b16 %v3748
    %v3859 = vunpack.c.l.b16 %v3749
    %v3860 = vunpack.c.h.b16 %v3749
    %v3861 = vunpack.c.l.b16 %v3750
    %v3862 = vunpack.c.h.b16 %v3750
    %v3863 = vunpack.c.l.b16 %v3751
    %v3864 = vunpack.c.h.b16 %v3751
    %v3865 = vunpack.c.l.b16 %v3752
    %v3866 = vunpack.c.h.b16 %v3752
    %v3867 = vunpack.c.l.b16 %v3753
    %v3868 = vunpack.c.h.b16 %v3753
    %v3869 = vunpack.c.l.b16 %v3754
    %v3870 = vunpack.c.h.b16 %v3754
    %v3871 = vunpack.c.l.b16 %v3755
    %v3872 = vunpack.c.h.b16 %v3755
    %v3873 = vunpack.c.l.b16 %v3756
    %v3874 = vunpack.c.h.b16 %v3756
    %v3875 = vunpack.c.l.b16 %v3757
    %v3876 = vunpack.c.h.b16 %v3757
    %v3877 = vpack.c.b16 %v3817, %v3813
    %v3878 = vpack.c.b16 %v3818, %v3814
    %v3879 = vpack.c.b16 %v3819, %v3815
    %v3880 = vpack.c.b16 %v3820, %v3816
    %v3881 = vpack.c.b16 %v3825, %v3821
    %v3882 = vpack.c.b16 %v3826, %v3822
    %v3883 = vpack.c.b16 %v3827, %v3823
    %v3884 = vpack.c.b16 %v3828, %v3824
    %v3885 = vpack.c.b16 %v3833, %v3829
    %v3886 = vpack.c.b16 %v3834, %v3830
    %v3887 = vpack.c.b16 %v3835, %v3831
    %v3888 = vpack.c.b16 %v3836, %v3832
    %v3889 = vpack.c.b16 %v3841, %v3837
    %v3890 = vpack.c.b16 %v3842, %v3838
    %v3891 = vpack.c.b16 %v3843, %v3839
    %v3892 = vpack.c.b16 %v3844, %v3840
    %v3893 = vpack.c.b16 %v3849, %v3845
    %v3894 = vpack.c.b16 %v3850, %v3846
    %v3895 = vpack.c.b16 %v3851, %v3847
    %v3896 = vpack.c.b16 %v3852, %v3848
    %v3897 = vpack.c.b16 %v3857, %v3853
    %v3898 = vpack.c.b16 %v3858, %v3854
    %v3899 = vpack.c.b16 %v3859, %v3855
    %v3900 = vpack.c.b16 %v3860, %v3856
    %v3901 = vpack.c.b16 %v3865, %v3861
    %v3902 = vpack.c.b16 %v3866, %v3862
    %v3903 = vpack.c.b16 %v3867, %v3863
    %v3904 = vpack.c.b16 %v3868, %v3864
    %v3905 = vpack.c.b16 %v3873, %v3869
    %v3906 = vpack.c.b16 %v3874, %v3870
    %v3907 = vpack.c.b16 %v3875, %v3871
    %v3908 = vpack.c.b16 %v3876, %v3872
    %3941 = vmatprep.subr.bf16.mxu0 %v3878
    %3942 = vmatpush1.bf16.msra.mxu0 %v3877
    %3943 = vmatprep.subr.bf16.mxu0 %v3882
    %3944 = vmatpush1.bf16.msra.mxu0 %v3881
    %3945 = vmatprep.subr.bf16.mxu0 %v3886
    %3946 = vmatpush1.bf16.msra.mxu0 %v3885
    %3947 = vmatprep.subr.bf16.mxu0 %v3890
    %3948 = vmatpush1.bf16.msra.mxu0 %v3889
    %3949 = vmatprep.subr.bf16.mxu0 %v3894
    %3950 = vmatpush1.bf16.msra.mxu0 %v3893
    %3951 = vmatprep.subr.bf16.mxu0 %v3898
    %3952 = vmatpush1.bf16.msra.mxu0 %v3897
    %3953 = vmatprep.subr.bf16.mxu0 %v3902
    %3954 = vmatpush1.bf16.msra.mxu0 %v3901
    %3955 = vmatprep.subr.bf16.mxu0 %v3906
    %3956 = vmatpush1.bf16.msra.mxu0 %v3905
    %3957 = vmatprep.subr.bf16.mxu0 0
    %3958 = vmatpush1.bf16.msra.mxu0 0
    %3959 = vmatprep.subr.bf16.mxu0 0
    %3960 = vmatpush1.bf16.msra.mxu0 0
    %3961 = vmatprep.subr.bf16.mxu0 0
    %3962 = vmatpush1.bf16.msra.mxu0 0
    %3963 = vmatprep.subr.bf16.mxu0 0
    %3964 = vmatpush1.bf16.msra.mxu0 0
    %3965 = vmatprep.subr.bf16.mxu0 0
    %3966 = vmatpush1.bf16.msra.mxu0 0
    %3967 = vmatprep.subr.bf16.mxu0 0
    %3968 = vmatpush1.bf16.msra.mxu0 0
    %3969 = vmatprep.subr.bf16.mxu0 0
    %3970 = vmatpush1.bf16.msra.mxu0 0
    %3971 = vmatprep.subr.bf16.mxu0 0
    %3972 = vmatpush1.bf16.msra.mxu0 0
    %3973 = vmatprep.mubr.bf16.mxu0 0
    %3974 = vmatmul.mubr.bf16.gmra.mrb[0].mxu0 %v3724
    %v3975 = vpop.f32.mrb[0].mxu0
    %v3976 = vadd.f32 %v3764, %v3975
    %v3977 = vpop.f32.mrb[0].mxu0
    %v3978 = vadd.f32 %v3768, %v3977
    %v3979 = vpop.f32.mrb[0].mxu0
    %v3980 = vadd.f32 %v3764, %v3979
    %v3981 = vpop.f32.mrb[0].mxu0
    %v3982 = vadd.f32 %v3768, %v3981
    %3983 = vdwg.mxu0
    %3984 = vmatprep.subr.bf16.mxu0 %v3880
    %3985 = vmatpush1.bf16.msra.mxu0 %v3879
    %3986 = vmatprep.subr.bf16.mxu0 %v3884
    %3987 = vmatpush1.bf16.msra.mxu0 %v3883
    %3988 = vmatprep.subr.bf16.mxu0 %v3888
    %3989 = vmatpush1.bf16.msra.mxu0 %v3887
    %3990 = vmatprep.subr.bf16.mxu0 %v3892
    %3991 = vmatpush1.bf16.msra.mxu0 %v3891
    %3992 = vmatprep.subr.bf16.mxu0 %v3896
    %3993 = vmatpush1.bf16.msra.mxu0 %v3895
    %3994 = vmatprep.subr.bf16.mxu0 %v3900
    %3995 = vmatpush1.bf16.msra.mxu0 %v3899
    %3996 = vmatprep.subr.bf16.mxu0 %v3904
    %3997 = vmatpush1.bf16.msra.mxu0 %v3903
    %3998 = vmatprep.subr.bf16.mxu0 %v3908
    %3999 = vmatpush1.bf16.msra.mxu0 %v3907
    %4000 = vmatprep.subr.bf16.mxu0 0
    %4001 = vmatpush1.bf16.msra.mxu0 0
    %4002 = vmatprep.subr.bf16.mxu0 0
    %4003 = vmatpush1.bf16.msra.mxu0 0
    %4004 = vmatprep.subr.bf16.mxu0 0
    %4005 = vmatpush1.bf16.msra.mxu0 0
    %4006 = vmatprep.subr.bf16.mxu0 0
    %4007 = vmatpush1.bf16.msra.mxu0 0
    %4008 = vmatprep.subr.bf16.mxu0 0
    %4009 = vmatpush1.bf16.msra.mxu0 0
    %4010 = vmatprep.subr.bf16.mxu0 0
    %4011 = vmatpush1.bf16.msra.mxu0 0
    %4012 = vmatprep.subr.bf16.mxu0 0
    %4013 = vmatpush1.bf16.msra.mxu0 0
    %4014 = vmatprep.subr.bf16.mxu0 0
    %4015 = vmatpush1.bf16.msra.mxu0 0
    %4016 = vmatprep.mubr.bf16.mxu0 0
    %4017 = vmatmul.mubr.bf16.gmra.mrb[0].mxu0 %v3724
    %v4018 = vpop.f32.mrb[0].mxu0
    %v4019 = vadd.f32 %v3772, %v4018
    %v4020 = vpop.f32.mrb[0].mxu0
    %v4021 = vadd.f32 %v3776, %v4020
    %v4022 = vpop.f32.mrb[0].mxu0
    %v4023 = vadd.f32 %v3772, %v4022
    %v4024 = vpop.f32.mrb[0].mxu0
    %v4025 = vadd.f32 %v3776, %v4024
    %4026 = vdwg.mxu0
    %v4027 = vmul.f32 %v3976, %v3976
    %v4028 = vmul.f32 %v3978, %v3978
    %v4029 = vmul.f32 %v4019, %v4019
    %v4030 = vmul.f32 %v4021, %v4021
    %v4031 = vmul.f32 %v3980, %v3980
    %v4032 = vmul.f32 %v3982, %v3982
    %v4033 = vmul.f32 %v4023, %v4023
    %v4034 = vmul.f32 %v4025, %v4025
    %v4035 = vmul.f32 %v3976, %v4027
    %v4036 = vmul.f32 %v3978, %v4028
    %v4037 = vmul.f32 %v4019, %v4029
    %v4038 = vmul.f32 %v4021, %v4030
    %v4039 = vmul.f32 %v3980, %v4031
    %v4040 = vmul.f32 %v3982, %v4032
    %v4041 = vmul.f32 %v4023, %v4033
    %v4042 = vmul.f32 %v4025, %v4034
    %v4043 = vmul.f32 %v4035, 0.044715
    %v4044 = vmul.f32 %v4036, 0.044715
    %v4045 = vmul.f32 %v4037, 0.044715
    %v4046 = vmul.f32 %v4038, 0.044715
    %v4047 = vmul.f32 %v4039, 0.044715
    %v4048 = vmul.f32 %v4040, 0.044715
    %v4049 = vmul.f32 %v4041, 0.044715
    %v4050 = vmul.f32 %v4042, 0.044715
    %v4051 = vadd.f32 %v3976, %v4043
    %v4052 = vadd.f32 %v3978, %v4044
    %v4053 = vadd.f32 %v4019, %v4045
    %v4054 = vadd.f32 %v4021, %v4046
    %v4055 = vadd.f32 %v3980, %v4047
    %v4056 = vadd.f32 %v3982, %v4048
    %v4057 = vadd.f32 %v4023, %v4049
    %v4058 = vadd.f32 %v4025, %v4050
    %v4059 = vmul.f32 %v4051, 0.7978846
    %v4060 = vmul.f32 %v4052, 0.7978846
    %v4061 = vmul.f32 %v4053, 0.7978846
    %v4062 = vmul.f32 %v4054, 0.7978846
    %v4063 = vmul.f32 %v4055, 0.7978846
    %v4064 = vmul.f32 %v4056, 0.7978846
    %v4065 = vmul.f32 %v4057, 0.7978846
    %v4066 = vmul.f32 %v4058, 0.7978846
    %v4067 = vtanh.pop %v4059
    %v4068 = vtanh.pop %v4060
    %v4069 = vtanh.pop %v4061
    %v4070 = vtanh.pop %v4062
    %v4071 = vtanh.pop %v4063
    %v4072 = vtanh.pop %v4064
    %v4073 = vtanh.pop %v4065
    %v4074 = vtanh.pop %v4066
    %v4075 = vadd.f32 %v4067, 1.0
    %v4076 = vadd.f32 %v4068, 1.0
    %v4077 = vadd.f32 %v4069, 1.0
    %v4078 = vadd.f32 %v4070, 1.0
    %v4079 = vadd.f32 %v4071, 1.0
    %v4080 = vadd.f32 %v4072, 1.0
    %v4081 = vadd.f32 %v4073, 1.0
    %v4082 = vadd.f32 %v4074, 1.0
    %v4083 = vmul.f32 %v4075, 0.5
    %v4084 = vmul.f32 %v4076, 0.5
    %v4085 = vmul.f32 %v4077, 0.5
    %v4086 = vmul.f32 %v4078, 0.5
    %v4087 = vmul.f32 %v4079, 0.5
    %v4088 = vmul.f32 %v4080, 0.5
    %v4089 = vmul.f32 %v4081, 0.5
    %v4090 = vmul.f32 %v4082, 0.5
    %v4091 = vmul.f32 %v3976, %v4083
    %v4092 = vmul.f32 %v3978, %v4084
    %v4093 = vmul.f32 %v4019, %v4085
    %v4094 = vmul.f32 %v4021, %v4086
    %v4095 = vmul.f32 %v3980, %v4087
    %v4096 = vmul.f32 %v3982, %v4088
    %v4097 = vmul.f32 %v4023, %v4089
    %v4098 = vmul.f32 %v4025, %v4090
    %v4099 = vpack.c.bf16 %v4095, %v4091
    %v4100 = vpack.c.bf16 %v4096, %v4092
    %v4101 = vpack.c.bf16 %v4097, %v4093
    %v4102 = vpack.c.bf16 %v4098, %v4094
    %s4103 = scalar_lea.vmem [#allocation15], 256
    %v4104 = vld [vmem:[%s4103] sm:$0xf]
    %v4105 = vld [vmem:[%s4103 + $0x4] sm:$0xf]
    %v4106 = vld [vmem:[%s4103 + $0x8] sm:$0xf]
    %v4107 = vld [vmem:[%s4103 + $0xc] sm:$0xf]
    %v4108 = vld [vmem:[%s4103 + $0x10] sm:$0xf]
    %v4109 = vld [vmem:[%s4103 + $0x14] sm:$0xf]
    %v4110 = vld [vmem:[%s4103 + $0x18] sm:$0xf]
    %v4111 = vld [vmem:[%s4103 + $0x1c] sm:$0xf]
    %v4112 = vld [vmem:[%s4103 + $0x20] sm:$0xf]
    %v4113 = vld [vmem:[%s4103 + $0x24] sm:$0xf]
    %v4114 = vld [vmem:[%s4103 + $0x28] sm:$0xf]
    %v4115 = vld [vmem:[%s4103 + $0x2c] sm:$0xf]
    %v4116 = vld [vmem:[%s4103 + $0x30] sm:$0xf]
    %v4117 = vld [vmem:[%s4103 + $0x34] sm:$0xf]
    %v4118 = vld [vmem:[%s4103 + $0x38] sm:$0xf]
    %v4119 = vld [vmem:[%s4103 + $0x3c] sm:$0xf]
    %v4120 = vld [vmem:[%s4103 + $0x40] sm:$0xf]
    %v4121 = vld [vmem:[%s4103 + $0x44] sm:$0xf]
    %v4122 = vld [vmem:[%s4103 + $0x48] sm:$0xf]
    %v4123 = vld [vmem:[%s4103 + $0x4c] sm:$0xf]
    %v4124 = vld [vmem:[%s4103 + $0x50] sm:$0xf]
    %v4125 = vld [vmem:[%s4103 + $0x54] sm:$0xf]
    %v4126 = vld [vmem:[%s4103 + $0x58] sm:$0xf]
    %v4127 = vld [vmem:[%s4103 + $0x5c] sm:$0xf]
    %v4128 = vld [vmem:[%s4103 + $0x60] sm:$0xf]
    %v4129 = vld [vmem:[%s4103 + $0x64] sm:$0xf]
    %v4130 = vld [vmem:[%s4103 + $0x68] sm:$0xf]
    %v4131 = vld [vmem:[%s4103 + $0x6c] sm:$0xf]
    %v4132 = vld [vmem:[%s4103 + $0x70] sm:$0xf]
    %v4133 = vld [vmem:[%s4103 + $0x74] sm:$0xf]
    %v4134 = vld [vmem:[%s4103 + $0x78] sm:$0xf]
    %v4135 = vld [vmem:[%s4103 + $0x7c] sm:$0xf]
    %v4136 = vld [vmem:[%s4103 + $0x80] sm:$0xf]
    %v4137 = vld [vmem:[%s4103 + $0x84] sm:$0xf]
    %v4138 = vld [vmem:[%s4103 + $0x88] sm:$0xf]
    %v4139 = vld [vmem:[%s4103 + $0x8c] sm:$0xf]
    %v4140 = vld [vmem:[%s4103 + $0x90] sm:$0xf]
    %v4141 = vld [vmem:[%s4103 + $0x94] sm:$0xf]
    %v4142 = vld [vmem:[%s4103 + $0x98] sm:$0xf]
    %v4143 = vld [vmem:[%s4103 + $0x9c] sm:$0xf]
    %v4144 = vld [vmem:[%s4103 + $0xa0] sm:$0xf]
    %v4145 = vld [vmem:[%s4103 + $0xa4] sm:$0xf]
    %v4146 = vld [vmem:[%s4103 + $0xa8] sm:$0xf]
    %v4147 = vld [vmem:[%s4103 + $0xac] sm:$0xf]
    %v4148 = vld [vmem:[%s4103 + $0xb0] sm:$0xf]
    %v4149 = vld [vmem:[%s4103 + $0xb4] sm:$0xf]
    %v4150 = vld [vmem:[%s4103 + $0xb8] sm:$0xf]
    %v4151 = vld [vmem:[%s4103 + $0xbc] sm:$0xf]
    %v4152 = vld [vmem:[%s4103 + $0xc0] sm:$0xf]
    %v4153 = vld [vmem:[%s4103 + $0xc4] sm:$0xf]
    %v4154 = vld [vmem:[%s4103 + $0xc8] sm:$0xf]
    %v4155 = vld [vmem:[%s4103 + $0xcc] sm:$0xf]
    %v4156 = vld [vmem:[%s4103 + $0xd0] sm:$0xf]
    %v4157 = vld [vmem:[%s4103 + $0xd4] sm:$0xf]
    %v4158 = vld [vmem:[%s4103 + $0xd8] sm:$0xf]
    %v4159 = vld [vmem:[%s4103 + $0xdc] sm:$0xf]
    %v4160 = vld [vmem:[%s4103 + $0xe0] sm:$0xf]
    %v4161 = vld [vmem:[%s4103 + $0xe4] sm:$0xf]
    %v4162 = vld [vmem:[%s4103 + $0xe8] sm:$0xf]
    %v4163 = vld [vmem:[%s4103 + $0xec] sm:$0xf]
    %v4164 = vld [vmem:[%s4103 + $0xf0] sm:$0xf]
    %v4165 = vld [vmem:[%s4103 + $0xf4] sm:$0xf]
    %v4166 = vld [vmem:[%s4103 + $0xf8] sm:$0xf]
    %v4167 = vld [vmem:[%s4103 + $0xfc] sm:$0xf]
    %s4168 = scalar_lea.vmem %s13, 1
    %v4169 = vld [vmem:[%s4168] sm:$0x1]
    %v4171 = vlaneseq
    %v4172 = vshrl.u32 %v4171, 7
    %v4173 = vsub.s32 0, %v4172
    %v4174 = vrot.slane %v4169, %v4173
    %v4240 = vunpack.c.l.b16 %v4104
    %v4241 = vunpack.c.l.b16 %v4105
    %v4242 = vunpack.c.l.b16 %v4106
    %v4243 = vunpack.c.l.b16 %v4107
    %v4244 = vunpack.c.l.b16 %v4108
    %v4245 = vunpack.c.l.b16 %v4109
    %v4246 = vunpack.c.l.b16 %v4110
    %v4247 = vunpack.c.l.b16 %v4111
    %v4248 = vunpack.c.l.b16 %v4112
    %v4249 = vunpack.c.l.b16 %v4113
    %v4250 = vunpack.c.l.b16 %v4114
    %v4251 = vunpack.c.l.b16 %v4115
    %v4252 = vunpack.c.l.b16 %v4116
    %v4253 = vunpack.c.l.b16 %v4117
    %v4254 = vunpack.c.l.b16 %v4118
    %v4255 = vunpack.c.l.b16 %v4119
    %v4256 = vunpack.c.l.b16 %v4120
    %v4257 = vunpack.c.l.b16 %v4121
    %v4258 = vunpack.c.l.b16 %v4122
    %v4259 = vunpack.c.l.b16 %v4123
    %v4260 = vunpack.c.l.b16 %v4124
    %v4261 = vunpack.c.l.b16 %v4125
    %v4262 = vunpack.c.l.b16 %v4126
    %v4263 = vunpack.c.l.b16 %v4127
    %v4264 = vunpack.c.l.b16 %v4128
    %v4265 = vunpack.c.l.b16 %v4129
    %v4266 = vunpack.c.l.b16 %v4130
    %v4267 = vunpack.c.l.b16 %v4131
    %v4268 = vunpack.c.l.b16 %v4132
    %v4269 = vunpack.c.l.b16 %v4133
    %v4270 = vunpack.c.l.b16 %v4134
    %v4271 = vunpack.c.l.b16 %v4135
    %v4272 = vunpack.c.l.b16 %v4136
    %v4273 = vunpack.c.l.b16 %v4137
    %v4274 = vunpack.c.l.b16 %v4138
    %v4275 = vunpack.c.l.b16 %v4139
    %v4276 = vunpack.c.l.b16 %v4140
    %v4277 = vunpack.c.l.b16 %v4141
    %v4278 = vunpack.c.l.b16 %v4142
    %v4279 = vunpack.c.l.b16 %v4143
    %v4280 = vunpack.c.l.b16 %v4144
    %v4281 = vunpack.c.l.b16 %v4145
    %v4282 = vunpack.c.l.b16 %v4146
    %v4283 = vunpack.c.l.b16 %v4147
    %v4284 = vunpack.c.l.b16 %v4148
    %v4285 = vunpack.c.l.b16 %v4149
    %v4286 = vunpack.c.l.b16 %v4150
    %v4287 = vunpack.c.l.b16 %v4151
    %v4288 = vunpack.c.l.b16 %v4152
    %v4289 = vunpack.c.l.b16 %v4153
    %v4290 = vunpack.c.l.b16 %v4154
    %v4291 = vunpack.c.l.b16 %v4155
    %v4292 = vunpack.c.l.b16 %v4156
    %v4293 = vunpack.c.l.b16 %v4157
    %v4294 = vunpack.c.l.b16 %v4158
    %v4295 = vunpack.c.l.b16 %v4159
    %v4296 = vunpack.c.l.b16 %v4160
    %v4297 = vunpack.c.l.b16 %v4161
    %v4298 = vunpack.c.l.b16 %v4162
    %v4299 = vunpack.c.l.b16 %v4163
    %v4300 = vunpack.c.l.b16 %v4164
    %v4301 = vunpack.c.l.b16 %v4165
    %v4302 = vunpack.c.l.b16 %v4166
    %v4303 = vunpack.c.l.b16 %v4167
    %v4304 = vpack.c.b16 %v4241, %v4240
    %v4305 = vpack.c.b16 %v4243, %v4242
    %v4306 = vpack.c.b16 %v4245, %v4244
    %v4307 = vpack.c.b16 %v4247, %v4246
    %v4308 = vpack.c.b16 %v4249, %v4248
    %v4309 = vpack.c.b16 %v4251, %v4250
    %v4310 = vpack.c.b16 %v4253, %v4252
    %v4311 = vpack.c.b16 %v4255, %v4254
    %v4312 = vpack.c.b16 %v4257, %v4256
    %v4313 = vpack.c.b16 %v4259, %v4258
    %v4314 = vpack.c.b16 %v4261, %v4260
    %v4315 = vpack.c.b16 %v4263, %v4262
    %v4316 = vpack.c.b16 %v4265, %v4264
    %v4317 = vpack.c.b16 %v4267, %v4266
    %v4318 = vpack.c.b16 %v4269, %v4268
    %v4319 = vpack.c.b16 %v4271, %v4270
    %v4320 = vpack.c.b16 %v4273, %v4272
    %v4321 = vpack.c.b16 %v4275, %v4274
    %v4322 = vpack.c.b16 %v4277, %v4276
    %v4323 = vpack.c.b16 %v4279, %v4278
    %v4324 = vpack.c.b16 %v4281, %v4280
    %v4325 = vpack.c.b16 %v4283, %v4282
    %v4326 = vpack.c.b16 %v4285, %v4284
    %v4327 = vpack.c.b16 %v4287, %v4286
    %v4328 = vpack.c.b16 %v4289, %v4288
    %v4329 = vpack.c.b16 %v4291, %v4290
    %v4330 = vpack.c.b16 %v4293, %v4292
    %v4331 = vpack.c.b16 %v4295, %v4294
    %v4332 = vpack.c.b16 %v4297, %v4296
    %v4333 = vpack.c.b16 %v4299, %v4298
    %v4334 = vpack.c.b16 %v4301, %v4300
    %v4335 = vpack.c.b16 %v4303, %v4302
    %4368 = vmatprep.subr.bf16.mxu0 0
    %4369 = vmatpush1.bf16.msra.mxu0 %v4304
    %4370 = vmatprep.subr.bf16.mxu0 0
    %4371 = vmatpush1.bf16.msra.mxu0 %v4305
    %4372 = vmatprep.subr.bf16.mxu0 0
    %4373 = vmatpush1.bf16.msra.mxu0 %v4306
    %4374 = vmatprep.subr.bf16.mxu0 0
    %4375 = vmatpush1.bf16.msra.mxu0 %v4307
    %4376 = vmatprep.subr.bf16.mxu0 0
    %4377 = vmatpush1.bf16.msra.mxu0 %v4308
    %4378 = vmatprep.subr.bf16.mxu0 0
    %4379 = vmatpush1.bf16.msra.mxu0 %v4309
    %4380 = vmatprep.subr.bf16.mxu0 0
    %4381 = vmatpush1.bf16.msra.mxu0 %v4310
    %4382 = vmatprep.subr.bf16.mxu0 0
    %4383 = vmatpush1.bf16.msra.mxu0 %v4311
    %4384 = vmatprep.subr.bf16.mxu0 0
    %4385 = vmatpush1.bf16.msra.mxu0 %v4312
    %4386 = vmatprep.subr.bf16.mxu0 0
    %4387 = vmatpush1.bf16.msra.mxu0 %v4313
    %4388 = vmatprep.subr.bf16.mxu0 0
    %4389 = vmatpush1.bf16.msra.mxu0 %v4314
    %4390 = vmatprep.subr.bf16.mxu0 0
    %4391 = vmatpush1.bf16.msra.mxu0 %v4315
    %4392 = vmatprep.subr.bf16.mxu0 0
    %4393 = vmatpush1.bf16.msra.mxu0 %v4316
    %4394 = vmatprep.subr.bf16.mxu0 0
    %4395 = vmatpush1.bf16.msra.mxu0 %v4317
    %4396 = vmatprep.subr.bf16.mxu0 0
    %4397 = vmatpush1.bf16.msra.mxu0 %v4318
    %4398 = vmatprep.subr.bf16.mxu0 0
    %4399 = vmatpush1.bf16.msra.mxu0 %v4319
    %4400 = vmatprep.mubr.bf16.mxu0 %v4100
    %4401 = vmatmul.mubr.bf16.gmra.mrb[0].mxu0 %v4099
    %v4402 = vpop.f32.mrb[0].mxu0
    %v4403 = vadd.f32 %v4174, %v4402
    %v4404 = vpop.f32.mrb[0].mxu0
    %v4405 = vpop.f32.mrb[0].mxu0
    %v4406 = vadd.f32 %v4174, %v4405
    %v4407 = vpop.f32.mrb[0].mxu0
    %4408 = vdwg.mxu0
    %4409 = vmatprep.subr.bf16.mxu0 0
    %4410 = vmatpush1.bf16.msra.mxu0 %v4320
    %4411 = vmatprep.subr.bf16.mxu0 0
    %4412 = vmatpush1.bf16.msra.mxu0 %v4321
    %4413 = vmatprep.subr.bf16.mxu0 0
    %4414 = vmatpush1.bf16.msra.mxu0 %v4322
    %4415 = vmatprep.subr.bf16.mxu0 0
    %4416 = vmatpush1.bf16.msra.mxu0 %v4323
    %4417 = vmatprep.subr.bf16.mxu0 0
    %4418 = vmatpush1.bf16.msra.mxu0 %v4324
    %4419 = vmatprep.subr.bf16.mxu0 0
    %4420 = vmatpush1.bf16.msra.mxu0 %v4325
    %4421 = vmatprep.subr.bf16.mxu0 0
    %4422 = vmatpush1.bf16.msra.mxu0 %v4326
    %4423 = vmatprep.subr.bf16.mxu0 0
    %4424 = vmatpush1.bf16.msra.mxu0 %v4327
    %4425 = vmatprep.subr.bf16.mxu0 0
    %4426 = vmatpush1.bf16.msra.mxu0 %v4328
    %4427 = vmatprep.subr.bf16.mxu0 0
    %4428 = vmatpush1.bf16.msra.mxu0 %v4329
    %4429 = vmatprep.subr.bf16.mxu0 0
    %4430 = vmatpush1.bf16.msra.mxu0 %v4330
    %4431 = vmatprep.subr.bf16.mxu0 0
    %4432 = vmatpush1.bf16.msra.mxu0 %v4331
    %4433 = vmatprep.subr.bf16.mxu0 0
    %4434 = vmatpush1.bf16.msra.mxu0 %v4332
    %4435 = vmatprep.subr.bf16.mxu0 0
    %4436 = vmatpush1.bf16.msra.mxu0 %v4333
    %4437 = vmatprep.subr.bf16.mxu0 0
    %4438 = vmatpush1.bf16.msra.mxu0 %v4334
    %4439 = vmatprep.subr.bf16.mxu0 0
    %4440 = vmatpush1.bf16.msra.mxu0 %v4335
    %4441 = vmatprep.mubr.bf16.mxu0 %v4102
    %4442 = vmatmul.mubr.bf16.gmra.mrb[0].mxu0 %v4101
    %v4443 = vpop.f32.mrb[0].mxu0
    %v4444 = vadd.f32 %v4403, %v4443
    %v4445 = vpop.f32.mrb[0].mxu0
    %v4446 = vpop.f32.mrb[0].mxu0
    %v4447 = vadd.f32 %v4406, %v4446
    %v4448 = vpop.f32.mrb[0].mxu0
    %4449 = vdwg.mxu0
    %v4450 = vadd.f32 %v3722, %v4444
    %v4451 = vadd.f32 %v3723, %v4447
    %s4452 = scalar_lea.vmem %s14, 1
    %v4453 = vld [vmem:[%s4452] sm:$0x1]
    %s4454 = scalar_lea.vmem %s15, 1
    %v4455 = vld [vmem:[%s4454] sm:$0x1]
    %4456 = vadd.xlane.f32.xlu0 %v4450
    %v4457 = vpop.xlane.xlu0 %4456
    %4458 = vadd.xlane.f32.xlu0 %v4451
    %v4459 = vpop.xlane.xlu0 %4458
    %v4460 = vmul.f32 %v4457, %v185
    %v4461 = vmul.f32 %v4459, %v185
    %v4462 = vsub.f32 %v4450, %v4460
    %v4463 = vsub.f32 %v4451, %v4461
    %v4464 = vmul.f32 %v4462, %v4462
    %v4465 = vmul.f32 %v4463, %v4463
    %4466 = vadd.xlane.f32.xlu0 %v4464
    %v4467 = vpop.xlane.xlu0 %4466
    %4468 = vadd.xlane.f32.xlu0 %v4465
    %v4469 = vpop.xlane.xlu0 %4468
    %v4470 = vmul.f32 %v4467, %v185
    %v4471 = vmul.f32 %v4469, %v185
    %v4472 = vadd.f32 %v4470, 1e-12
    %v4473 = vadd.f32 %v4471, 1e-12
    %v4474 = vrsqrt.pop %v4472
    %v4475 = vrsqrt.pop %v4473
    %v4476 = vmul.f32 %v4462, %v4474
    %v4477 = vmul.f32 %v4463, %v4475
    %v4479 = vlaneseq
    %v4480 = vshrl.u32 %v4479, 7
    %v4481 = vsub.s32 0, %v4480
    %v4482 = vrot.slane %v4453, %v4481
    %v4484 = vmul.f32 %v4476, %v4482
    %v4485 = vmul.f32 %v4477, %v4482
    %v4487 = vlaneseq
    %v4488 = vshrl.u32 %v4487, 7
    %v4489 = vsub.s32 0, %v4488
    %v4490 = vrot.slane %v4455, %v4489
    %v4492 = vadd.f32 %v4484, %v4490
    %v4493 = vadd.f32 %v4485, %v4490
    %v4494 = vpack.c.bf16 %v4492, %v4492
    %v4495 = vpack.c.bf16 %v4493, %v4493
    %v4496 = vld [vmem:[#allocation17] sm:$0xff]
    %v4497 = vld [vmem:[#allocation17 + $0x8] sm:$0xff]
    %v4498 = vld [vmem:[#allocation17 + $0x10] sm:$0xff]
    %v4499 = vld [vmem:[#allocation17 + $0x18] sm:$0xff]
    %v4500 = vld [vmem:[#allocation17 + $0x20] sm:$0xff]
    %v4501 = vld [vmem:[#allocation17 + $0x28] sm:$0xff]
    %v4502 = vld [vmem:[#allocation17 + $0x30] sm:$0xff]
    %v4503 = vld [vmem:[#allocation17 + $0x38] sm:$0xff]
    %v4504 = vld [vmem:[#allocation17 + $0x40] sm:$0xff]
    %v4505 = vld [vmem:[#allocation17 + $0x48] sm:$0xff]
    %v4506 = vld [vmem:[#allocation17 + $0x50] sm:$0xff]
    %v4507 = vld [vmem:[#allocation17 + $0x58] sm:$0xff]
    %v4508 = vld [vmem:[#allocation17 + $0x60] sm:$0xff]
    %v4509 = vld [vmem:[#allocation17 + $0x68] sm:$0xff]
    %v4510 = vld [vmem:[#allocation17 + $0x70] sm:$0xff]
    %v4511 = vld [vmem:[#allocation17 + $0x78] sm:$0xff]
    %v4512 = vld [vmem:[#allocation17 + $0x80] sm:$0xff]
    %v4513 = vld [vmem:[#allocation17 + $0x88] sm:$0xff]
    %v4514 = vld [vmem:[#allocation17 + $0x90] sm:$0xff]
    %v4515 = vld [vmem:[#allocation17 + $0x98] sm:$0xff]
    %v4516 = vld [vmem:[#allocation17 + $0xa0] sm:$0xff]
    %v4517 = vld [vmem:[#allocation17 + $0xa8] sm:$0xff]
    %v4518 = vld [vmem:[#allocation17 + $0xb0] sm:$0xff]
    %v4519 = vld [vmem:[#allocation17 + $0xb8] sm:$0xff]
    %v4520 = vld [vmem:[#allocation17 + $0xc0] sm:$0xff]
    %v4521 = vld [vmem:[#allocation17 + $0xc8] sm:$0xff]
    %v4522 = vld [vmem:[#allocation17 + $0xd0] sm:$0xff]
    %v4523 = vld [vmem:[#allocation17 + $0xd8] sm:$0xff]
    %v4524 = vld [vmem:[#allocation17 + $0xe0] sm:$0xff]
    %v4525 = vld [vmem:[#allocation17 + $0xe8] sm:$0xff]
    %v4526 = vld [vmem:[#allocation17 + $0xf0] sm:$0xff]
    %v4527 = vld [vmem:[#allocation17 + $0xf8] sm:$0xff]
    %v4528 = vld [vmem:[%s17] sm:$0xf]
    %v4530 = vlaneseq
    %v4531 = vshrl.u32 %v4530, 7
    %v4532 = vsub.s32 0, %v4531
    %v4533 = vrot.slane %v4528, %v4532
    %v4534 = vlaneseq
    %v4535 = vshrl.u32 %v4534, 7
    %v4536 = vsub.s32 1, %v4535
    %v4537 = vrot.slane %v4528, %v4536
    %v4538 = vlaneseq
    %v4539 = vshrl.u32 %v4538, 7
    %v4540 = vsub.s32 2, %v4539
    %v4541 = vrot.slane %v4528, %v4540
    %v4542 = vlaneseq
    %v4543 = vshrl.u32 %v4542, 7
    %v4544 = vsub.s32 3, %v4543
    %v4545 = vrot.slane %v4528, %v4544
    %v4552 = vunpack.c.l.b16 %v4494
    %v4553 = vunpack.c.l.b16 %v4495
    %v4554 = vrot.slane %v4553, 7
    %vm4555 = vcmask 1041409
    %v4556 = vsel %vm4555, %v4554, %v4552
    %v4557 = vpack.c.b16 %v4556, %v4556
    %v4591 = vunpack.c.l.b16 %v4496
    %v4592 = vunpack.c.h.b16 %v4496
    %v4593 = vunpack.c.l.b16 %v4497
    %v4594 = vunpack.c.h.b16 %v4497
    %v4595 = vunpack.c.l.b16 %v4498
    %v4596 = vunpack.c.h.b16 %v4498
    %v4597 = vunpack.c.l.b16 %v4499
    %v4598 = vunpack.c.h.b16 %v4499
    %v4599 = vunpack.c.l.b16 %v4500
    %v4600 = vunpack.c.h.b16 %v4500
    %v4601 = vunpack.c.l.b16 %v4501
    %v4602 = vunpack.c.h.b16 %v4501
    %v4603 = vunpack.c.l.b16 %v4502
    %v4604 = vunpack.c.h.b16 %v4502
    %v4605 = vunpack.c.l.b16 %v4503
    %v4606 = vunpack.c.h.b16 %v4503
    %v4607 = vunpack.c.l.b16 %v4504
    %v4608 = vunpack.c.h.b16 %v4504
    %v4609 = vunpack.c.l.b16 %v4505
    %v4610 = vunpack.c.h.b16 %v4505
    %v4611 = vunpack.c.l.b16 %v4506
    %v4612 = vunpack.c.h.b16 %v4506
    %v4613 = vunpack.c.l.b16 %v4507
    %v4614 = vunpack.c.h.b16 %v4507
    %v4615 = vunpack.c.l.b16 %v4508
    %v4616 = vunpack.c.h.b16 %v4508
    %v4617 = vunpack.c.l.b16 %v4509
    %v4618 = vunpack.c.h.b16 %v4509
    %v4619 = vunpack.c.l.b16 %v4510
    %v4620 = vunpack.c.h.b16 %v4510
    %v4621 = vunpack.c.l.b16 %v4511
    %v4622 = vunpack.c.h.b16 %v4511
    %v4623 = vunpack.c.l.b16 %v4512
    %v4624 = vunpack.c.h.b16 %v4512
    %v4625 = vunpack.c.l.b16 %v4513
    %v4626 = vunpack.c.h.b16 %v4513
    %v4627 = vunpack.c.l.b16 %v4514
    %v4628 = vunpack.c.h.b16 %v4514
    %v4629 = vunpack.c.l.b16 %v4515
    %v4630 = vunpack.c.h.b16 %v4515
    %v4631 = vunpack.c.l.b16 %v4516
    %v4632 = vunpack.c.h.b16 %v4516
    %v4633 = vunpack.c.l.b16 %v4517
    %v4634 = vunpack.c.h.b16 %v4517
    %v4635 = vunpack.c.l.b16 %v4518
    %v4636 = vunpack.c.h.b16 %v4518
    %v4637 = vunpack.c.l.b16 %v4519
    %v4638 = vunpack.c.h.b16 %v4519
    %v4639 = vunpack.c.l.b16 %v4520
    %v4640 = vunpack.c.h.b16 %v4520
    %v4641 = vunpack.c.l.b16 %v4521
    %v4642 = vunpack.c.h.b16 %v4521
    %v4643 = vunpack.c.l.b16 %v4522
    %v4644 = vunpack.c.h.b16 %v4522
    %v4645 = vunpack.c.l.b16 %v4523
    %v4646 = vunpack.c.h.b16 %v4523
    %v4647 = vunpack.c.l.b16 %v4524
    %v4648 = vunpack.c.h.b16 %v4524
    %v4649 = vunpack.c.l.b16 %v4525
    %v4650 = vunpack.c.h.b16 %v4525
    %v4651 = vunpack.c.l.b16 %v4526
    %v4652 = vunpack.c.h.b16 %v4526
    %v4653 = vunpack.c.l.b16 %v4527
    %v4654 = vunpack.c.h.b16 %v4527
    %v4655 = vpack.c.b16 %v4595, %v4591
    %v4656 = vpack.c.b16 %v4596, %v4592
    %v4657 = vpack.c.b16 %v4597, %v4593
    %v4658 = vpack.c.b16 %v4598, %v4594
    %v4659 = vpack.c.b16 %v4603, %v4599
    %v4660 = vpack.c.b16 %v4604, %v4600
    %v4661 = vpack.c.b16 %v4605, %v4601
    %v4662 = vpack.c.b16 %v4606, %v4602
    %v4663 = vpack.c.b16 %v4611, %v4607
    %v4664 = vpack.c.b16 %v4612, %v4608
    %v4665 = vpack.c.b16 %v4613, %v4609
    %v4666 = vpack.c.b16 %v4614, %v4610
    %v4667 = vpack.c.b16 %v4619, %v4615
    %v4668 = vpack.c.b16 %v4620, %v4616
    %v4669 = vpack.c.b16 %v4621, %v4617
    %v4670 = vpack.c.b16 %v4622, %v4618
    %v4671 = vpack.c.b16 %v4627, %v4623
    %v4672 = vpack.c.b16 %v4628, %v4624
    %v4673 = vpack.c.b16 %v4629, %v4625
    %v4674 = vpack.c.b16 %v4630, %v4626
    %v4675 = vpack.c.b16 %v4635, %v4631
    %v4676 = vpack.c.b16 %v4636, %v4632
    %v4677 = vpack.c.b16 %v4637, %v4633
    %v4678 = vpack.c.b16 %v4638, %v4634
    %v4679 = vpack.c.b16 %v4643, %v4639
    %v4680 = vpack.c.b16 %v4644, %v4640
    %v4681 = vpack.c.b16 %v4645, %v4641
    %v4682 = vpack.c.b16 %v4646, %v4642
    %v4683 = vpack.c.b16 %v4651, %v4647
    %v4684 = vpack.c.b16 %v4652, %v4648
    %v4685 = vpack.c.b16 %v4653, %v4649
    %v4686 = vpack.c.b16 %v4654, %v4650
    %4719 = vmatprep.subr.bf16.mxu0 %v4656
    %4720 = vmatpush1.bf16.msra.mxu0 %v4655
    %4721 = vmatprep.subr.bf16.mxu0 %v4660
    %4722 = vmatpush1.bf16.msra.mxu0 %v4659
    %4723 = vmatprep.subr.bf16.mxu0 %v4664
    %4724 = vmatpush1.bf16.msra.mxu0 %v4663
    %4725 = vmatprep.subr.bf16.mxu0 %v4668
    %4726 = vmatpush1.bf16.msra.mxu0 %v4667
    %4727 = vmatprep.subr.bf16.mxu0 %v4672
    %4728 = vmatpush1.bf16.msra.mxu0 %v4671
    %4729 = vmatprep.subr.bf16.mxu0 %v4676
    %4730 = vmatpush1.bf16.msra.mxu0 %v4675
    %4731 = vmatprep.subr.bf16.mxu0 %v4680
    %4732 = vmatpush1.bf16.msra.mxu0 %v4679
    %4733 = vmatprep.subr.bf16.mxu0 %v4684
    %4734 = vmatpush1.bf16.msra.mxu0 %v4683
    %4735 = vmatprep.subr.bf16.mxu0 0
    %4736 = vmatpush1.bf16.msra.mxu0 0
    %4737 = vmatprep.subr.bf16.mxu0 0
    %4738 = vmatpush1.bf16.msra.mxu0 0
    %4739 = vmatprep.subr.bf16.mxu0 0
    %4740 = vmatpush1.bf16.msra.mxu0 0
    %4741 = vmatprep.subr.bf16.mxu0 0
    %4742 = vmatpush1.bf16.msra.mxu0 0
    %4743 = vmatprep.subr.bf16.mxu0 0
    %4744 = vmatpush1.bf16.msra.mxu0 0
    %4745 = vmatprep.subr.bf16.mxu0 0
    %4746 = vmatpush1.bf16.msra.mxu0 0
    %4747 = vmatprep.subr.bf16.mxu0 0
    %4748 = vmatpush1.bf16.msra.mxu0 0
    %4749 = vmatprep.subr.bf16.mxu0 0
    %4750 = vmatpush1.bf16.msra.mxu0 0
    %4751 = vmatprep.mubr.bf16.mxu0 0
    %4752 = vmatmul.mubr.bf16.gmra.mrb[0].mxu0 %v4557
    %v4753 = vpop.f32.mrb[0].mxu0
    %v4754 = vadd.f32 %v4533, %v4753
    %v4755 = vpop.f32.mrb[0].mxu0
    %v4756 = vadd.f32 %v4537, %v4755
    %v4757 = vpop.f32.mrb[0].mxu0
    %v4758 = vpop.f32.mrb[0].mxu0
    %4759 = vdwg.mxu0
    %4760 = vmatprep.subr.bf16.mxu0 %v4658
    %4761 = vmatpush1.bf16.msra.mxu0 %v4657
    %4762 = vmatprep.subr.bf16.mxu0 %v4662
    %4763 = vmatpush1.bf16.msra.mxu0 %v4661
    %4764 = vmatprep.subr.bf16.mxu0 %v4666
    %4765 = vmatpush1.bf16.msra.mxu0 %v4665
    %4766 = vmatprep.subr.bf16.mxu0 %v4670
    %4767 = vmatpush1.bf16.msra.mxu0 %v4669
    %4768 = vmatprep.subr.bf16.mxu0 %v4674
    %4769 = vmatpush1.bf16.msra.mxu0 %v4673
    %4770 = vmatprep.subr.bf16.mxu0 %v4678
    %4771 = vmatpush1.bf16.msra.mxu0 %v4677
    %4772 = vmatprep.subr.bf16.mxu0 %v4682
    %4773 = vmatpush1.bf16.msra.mxu0 %v4681
    %4774 = vmatprep.subr.bf16.mxu0 %v4686
    %4775 = vmatpush1.bf16.msra.mxu0 %v4685
    %4776 = vmatprep.subr.bf16.mxu0 0
    %4777 = vmatpush1.bf16.msra.mxu0 0
    %4778 = vmatprep.subr.bf16.mxu0 0
    %4779 = vmatpush1.bf16.msra.mxu0 0
    %4780 = vmatprep.subr.bf16.mxu0 0
    %4781 = vmatpush1.bf16.msra.mxu0 0
    %4782 = vmatprep.subr.bf16.mxu0 0
    %4783 = vmatpush1.bf16.msra.mxu0 0
    %4784 = vmatprep.subr.bf16.mxu0 0
    %4785 = vmatpush1.bf16.msra.mxu0 0
    %4786 = vmatprep.subr.bf16.mxu0 0
    %4787 = vmatpush1.bf16.msra.mxu0 0
    %4788 = vmatprep.subr.bf16.mxu0 0
    %4789 = vmatpush1.bf16.msra.mxu0 0
    %4790 = vmatprep.subr.bf16.mxu0 0
    %4791 = vmatpush1.bf16.msra.mxu0 0
    %4792 = vmatprep.mubr.bf16.mxu0 0
    %4793 = vmatmul.mubr.bf16.gmra.mrb[0].mxu0 %v4557
    %v4794 = vpop.f32.mrb[0].mxu0
    %v4795 = vadd.f32 %v4541, %v4794
    %v4796 = vpop.f32.mrb[0].mxu0
    %v4797 = vadd.f32 %v4545, %v4796
    %v4798 = vpop.f32.mrb[0].mxu0
    %v4799 = vpop.f32.mrb[0].mxu0
    %4800 = vdwg.mxu0
    %v4805 = vcombine.low %v4754, %v4756
    %v4806 = vcombine.low %v4795, %v4797
    %v4808 = vunpack.c.l.s4 1983009808
    %v4809 = vunpack.c.0.s8 %v4808
    %v4810 = vlaneseq
    %v4811 = vshrl.u32 %v4810, 7
    %v4812 = vsub.s32 %v4809, %v4811
    %v4813 = vrot.slane %v4805, %v4812
    %v4815 = vunpack.c.l.s4 1983009808
    %v4816 = vunpack.c.0.s8 %v4815
    %v4817 = vlaneseq
    %v4818 = vshrl.u32 %v4817, 7
    %v4819 = vsub.s32 %v4816, %v4818
    %v4820 = vrot.slane %v4806, %v4819
    %v4821 = vcombine.low %v4813, %v4820
    %4823 = vst [vmem:[#allocation18] sm:$0xff] %v4821
    // Predicated region
    $region110: #{tpu_custom_call.1} parent=1 // pred_check
      _
    $region111: #{tpu_custom_call.1} parent=1 // pred_check_branch
      %4825 = sbr.rel (0) target = $region113
    $region112: #{tpu_custom_call.1} parent=1 // pred_region
      %s4827 = ssub.s32 128, 128
      %4828 = vsyncadd [#allocation5], %s4827
      %s4830 = sshll.u32 [#allocation18], 4
      %s4831 = int_to_ptr.vmem [resolvable:$true] %s4830
      %4833 = dma.vmem_to_hbm [thread:$0]  %s4831, 128, %s18, [#allocation5]
    $region113: #{tpu_custom_call.1} parent=1 // pred_fallthru
      _
    // Predicated region
    $region114: #{tpu_custom_call.1} parent=1 // pred_check
      _
    $region115: #{tpu_custom_call.1} parent=1 // pred_check_branch
      %4835 = sbr.rel (0) target = $region117
    $region116: #{tpu_custom_call.1} parent=1 // pred_region
      %4836 = dma.done [#allocation5], 128
    $region117: #{tpu_custom_call.1} parent=1 // pred_fallthru
      _
    %4837 = vsyncpa [#allocation4], 1
    %4838 = vsyncpa [#allocation7], 1
    %4839 = vsyncpa [#allocation10], 1
    %4840 = vsyncpa [#allocation13], 1
    %4841 = vsyncpa [#allocation16], 1
    %4842 = vsyncpa [#allocation5], 1

</llo_original>
